<compile_context>
chip_gen: v7x
topology: tpu7x:2x2x1
jax: 0.10.0
libtpu: 0.0.40
codegen_flags: <defaults>
</compile_context>

<pallas_src>
import jax
import jax.numpy as jnp
import numpy as np
from jax.experimental import pallas as pl
from jax.experimental.pallas import tpu as pltpu


def _make_kernel(num_layers: int, d: int, lp: int, lk: int, d_chunk: int, hist_dtype):
    """Fused kernel (transposed layout): pool/pack histograms chunked over classes and
    contracted directly into the first Linear layer, then the remaining Linear+ReLU
    layers, all as x.T = W.T @ h.T."""

    def kernel(*refs):
        pool_ref, pack_ref = refs[0], refs[1]                    # (Lp, TM), (Lk, TM) int32
        w0a_ref, w0b_ref, b0_ref = refs[2], refs[3], refs[4]     # (H0, D), (H0, D), (H0, 1)
        rest = refs[5:5 + 2 * (num_layers - 1)]                  # (W.T, b.T) for later layers
        out_ref = refs[5 + 2 * (num_layers - 1)]                 # (D, TM)

        tm = out_ref.shape[1]
        h0 = b0_ref.shape[0]

        # First-layer accumulator (f32, (H0, TM)); bias added once at the end.
        x = jnp.zeros((h0, tm), jnp.float32)

        for c0 in range(0, d, d_chunk):
            dc = min(d_chunk, d - c0)
            # Class ids c0+1 .. c0+dc down the sublane axis; hoisted once per chunk
            # (constant along lanes -> lane-replicated layout, cheap to materialize).
            classes = jax.lax.broadcasted_iota(jnp.int32, (dc, tm), 0) + (c0 + 1)

            # Pool histogram chunk: each slot row (1, TM) broadcasts along sublanes.
            hp = jnp.zeros((dc, tm), hist_dtype)
            for l in range(lp):                                  # small, static unroll
                hp = hp + (pool_ref[l:l + 1, :] == classes).astype(hist_dtype)
            x = x + jnp.dot(w0a_ref[:, c0:c0 + dc], hp.astype(jnp.bfloat16),
                            preferred_element_type=jnp.float32)

            # Pack histogram chunk (shares the hoisted class iota).
            hk = jnp.zeros((dc, tm), hist_dtype)
            for l in range(lk):
                hk = hk + (pack_ref[l:l + 1, :] == classes).astype(hist_dtype)
            x = x + jnp.dot(w0b_ref[:, c0:c0 + dc], hk.astype(jnp.bfloat16),
                            preferred_element_type=jnp.float32)

        x = x + b0_ref[...]                                      # (H0, 1) lane broadcast, once

        for i in range(num_layers - 1):
            x = jnp.maximum(x, 0.0)                              # ReLU; Dropout(0.0) = identity
            w = rest[2 * i][...]                                 # (H_out, H_in) bf16 (pre-transposed)
            b = rest[2 * i + 1][...]                             # (H_out, 1) f32
            x = jnp.dot(w, x.astype(jnp.bfloat16),
                        preferred_element_type=jnp.float32) + b

        out_ref[...] = x.astype(out_ref.dtype)

    return kernel


def mlp_pickpack_scorer_forward(pool_ids, pack_ids, params, *,
                                block_m=128, d_chunk=128,
                                hist_dtype=jnp.bfloat16,
                                out_dtype=jnp.float32):
    """pool_ids: (B, Lp) int; pack_ids: (B, Lk) int;
    params: list of (W(in, out), b(1, out)) float32, first W has in == 2 * input_size.
    On v5e pass hist_dtype=jnp.float32 (no bf16 VALU there)."""
    pool_ids = pool_ids.astype(jnp.int32)
    pack_ids = pack_ids.astype(jnp.int32)
    B, Lp = pool_ids.shape
    _, Lk = pack_ids.shape
    D = params[-1][0].shape[1]                    # output dim == input_size
    num_layers = len(params)
    assert params[0][0].shape[0] == 2 * D
    if hist_dtype == jnp.bfloat16:
        # Counts <= L must remain exact in bf16 (integers are exact up to 256).
        assert Lp <= 256 and Lk <= 256, "bf16 histogram accumulation needs slot counts <= 256"

    # Pad batch to a multiple of block_m with padding id 0 (contributes nothing).
    Bp = ((B + block_m - 1) // block_m) * block_m
    if Bp != B:
        pool_ids = jnp.pad(pool_ids, ((0, Bp - B), (0, 0)))
        pack_ids = jnp.pad(pack_ids, ((0, Bp - B), (0, 0)))

    # Transposed layout: ids (L, Bp) are lane-dense; the MLP runs as x.T = W.T @ h.T.
    pool_t = pool_ids.T
    pack_t = pack_ids.T

    # Pre-transposed bf16 weights (MXU) / f32 column biases.  First layer is split so
    # concat(h_pool, h_pack) @ W0 == W0[:D].T @ h_pool.T + W0[D:].T @ h_pack.T.
    w0, b0 = params[0]
    flat = [w0[:D].T.astype(jnp.bfloat16),        # (H0, D)
            w0[D:].T.astype(jnp.bfloat16),        # (H0, D)
            b0.T.astype(jnp.float32)]             # (H0, 1)
    for w, b in params[1:]:
        flat.extend([w.T.astype(jnp.bfloat16), b.T.astype(jnp.float32)])

    grid = (Bp // block_m,)
    const_map = lambda i: (0, 0)                  # weights stay VMEM-resident across the grid
    in_specs = [
        pl.BlockSpec((Lp, block_m), lambda i: (0, i)),
        pl.BlockSpec((Lk, block_m), lambda i: (0, i)),
    ]
    in_specs += [pl.BlockSpec(p.shape, const_map) for p in flat]

    dims = [2 * D] + [w.shape[1] for (w, _) in params]
    flops = 2 * Bp * sum(dims[i] * dims[i + 1] for i in range(num_layers))
    bytes_accessed = (int(pool_t.size) + int(pack_t.size)) * 4 \
        + sum(int(p.size) * p.dtype.itemsize for p in flat) \
        + Bp * D * np.dtype(out_dtype).itemsize

    # Rough VMEM footprint (double-buffered blocks, (8, 128) layout padding) -> limit.
    def _padded_bytes(shape, itemsize):
        r = shape[-2] if len(shape) >= 2 else 1
        c = shape[-1]
        return ((r + 7) // 8 * 8) * ((c + 127) // 128 * 128) * itemsize
    vmem = 2 * (_padded_bytes((Lp, block_m), 4) + _padded_bytes((Lk, block_m), 4)
                + _padded_bytes((D, block_m), np.dtype(out_dtype).itemsize)
                + sum(_padded_bytes(p.shape, p.dtype.itemsize) for p in flat))
    vmem_limit = int(min(100 * 2 ** 20, max(32 * 2 ** 20, 4 * vmem)))

    out_t = pl.pallas_call(
        _make_kernel(num_layers, D, Lp, Lk, d_chunk, hist_dtype),
        out_shape=jax.ShapeDtypeStruct((D, Bp), out_dtype),
        grid=grid,
        in_specs=in_specs,
        out_specs=pl.BlockSpec((D, block_m), lambda i: (0, i)),
        compiler_params=pltpu.CompilerParams(
            dimension_semantics=("parallel",),
            vmem_limit_bytes=vmem_limit),
        cost_estimate=pl.CostEstimate(
            flops=flops, transcendentals=0, bytes_accessed=int(bytes_accessed)),
    )(pool_t, pack_t, *flat)

    return out_t.T[:B]


def init_params(key, input_size, hidden_sizes):
    """Shapes mirror the module: MLP(2*input_size, hidden_sizes + [input_size])."""
    dims = [2 * input_size] + list(hidden_sizes) + [input_size]
    params = []
    for i in range(len(dims) - 1):
        fan_in, fan_out = dims[i], dims[i + 1]
        key, kw, kb = jax.random.split(key, 3)
        bound = 1.0 / np.sqrt(fan_in)
        w = jax.random.uniform(kw, (fan_in, fan_out), jnp.float32, -bound, bound)
        b = jax.random.uniform(kb, (1, fan_out), jnp.float32, -bound, bound)
        params.append((w, b))
    return params


def reference_forward(pool_ids, pack_ids, params, input_size):
    """Pure-JAX reference matching the PyTorch module (with the same bf16 operand rounding)."""
    def hist(ids):
        oh = jax.nn.one_hot(ids, input_size + 1, dtype=jnp.float32)
        return oh.sum(axis=1)[:, 1:]

    x = jnp.concatenate([hist(pool_ids), hist(pack_ids)], axis=1)
    for i, (w, b) in enumerate(params):
        wq = w.astype(jnp.bfloat16).astype(jnp.float32)
        xq = x.astype(jnp.bfloat16).astype(jnp.float32)
        x = jnp.dot(xq, wq, precision=jax.lax.Precision.HIGHEST) + b[0]
        if i < len(params) - 1:
            x = jnp.maximum(x, 0.0)
    return x


if __name__ == "__main__":
    INPUT_SIZE = 256        # number of distinct cards (output dim)
    HIDDEN_SIZES = [128]    # lane-dense hidden width (multiple of 128)
    B, LP, LK = 256, 16, 8  # two 128-lane batch tiles (>=2 grid steps for v7x); pool/pack slots

    key = jax.random.PRNGKey(0)
    key, k_pool, k_pack = jax.random.split(key, 3)
    # ids: card_id + 1, with 0 used as the padding sentinel (dropped by the encoder)
    pool_ids = jax.random.randint(k_pool, (B, LP), 0, INPUT_SIZE + 1, dtype=jnp.int32)
    pack_ids = jax.random.randint(k_pack, (B, LK), 0, INPUT_SIZE + 1, dtype=jnp.int32)

    params = init_params(key, INPUT_SIZE, HIDDEN_SIZES)

    out = mlp_pickpack_scorer_forward(pool_ids, pack_ids, params)
    out = jax.block_until_ready(out)

    ref = reference_forward(pool_ids, pack_ids, params, INPUT_SIZE)
    np.testing.assert_allclose(np.asarray(out), np.asarray(ref), atol=2e-3, rtol=2e-3)

    print("KERNEL_OK")
</pallas_src>

<mosaic_0001>
module attributes {stable_mosaic.version = 11 : i64} {
  func.func @kernel(%arg0: i32, %arg1: memref<16x128xi32, #tpu.memory_space<vmem>>, %arg2: memref<8x128xi32, #tpu.memory_space<vmem>>, %arg3: memref<128x256xbf16, #tpu.memory_space<vmem>>, %arg4: memref<128x256xbf16, #tpu.memory_space<vmem>>, %arg5: memref<128x1xf32, #tpu.memory_space<vmem>>, %arg6: memref<256x128xbf16, #tpu.memory_space<vmem>>, %arg7: memref<256x1xf32, #tpu.memory_space<vmem>>, %arg8: memref<256x128xf32, #tpu.memory_space<vmem>>) attributes {dimension_semantics = [#tpu.dimension_semantics<parallel>], iteration_bounds = array<i64: 2>, scalar_prefetch = 0 : i64, scratch_operands = 0 : i64, tpu.core_type = #tpu.core_type<tc>, window_params = [{transform_indices = @transform_0, window_bounds = array<i64: 16, 128>}, {transform_indices = @transform_1, window_bounds = array<i64: 8, 128>}, {pipeline_mode = #tpu.pipeline_mode<synchronous>, transform_indices = @transform_2, window_bounds = array<i64: 128, 256>}, {pipeline_mode = #tpu.pipeline_mode<synchronous>, transform_indices = @transform_3, window_bounds = array<i64: 128, 256>}, {pipeline_mode = #tpu.pipeline_mode<synchronous>, transform_indices = @transform_4, window_bounds = array<i64: 128, 1>}, {pipeline_mode = #tpu.pipeline_mode<synchronous>, transform_indices = @transform_5, window_bounds = array<i64: 256, 128>}, {pipeline_mode = #tpu.pipeline_mode<synchronous>, transform_indices = @transform_6, window_bounds = array<i64: 256, 1>}, {transform_indices = @transform_7, window_bounds = array<i64: 256, 128>}]} {
    %cst = arith.constant 0.000000e+00 : f32
    %0 = vector.broadcast %cst : f32 to vector<128x128xf32>
    %1 = tpu.iota {dimensions = array<i32: 0>} : vector<128x128xi32>
    %c1_i32 = arith.constant 1 : i32
    %2 = vector.broadcast %c1_i32 : i32 to vector<128x128xi32>
    %3 = arith.addi %1, %2 : vector<128x128xi32>
    %cst_0 = arith.constant 0.000000e+00 : bf16
    %4 = vector.broadcast %cst_0 : bf16 to vector<128x128xbf16>
    %c0 = arith.constant 0 : index
    %c0_1 = arith.constant 0 : index
    %5 = vector.load %arg1[%c0, %c0_1] : memref<16x128xi32, #tpu.memory_space<vmem>>, vector<1x128xi32>
    %6 = vector.broadcast %5 : vector<1x128xi32> to vector<128x128xi32>
    %7 = arith.cmpi eq, %6, %3 : vector<128x128xi32>
    %8 = arith.extui %7 : vector<128x128xi1> to vector<128x128xi32>
    %9 = arith.sitofp %8 : vector<128x128xi32> to vector<128x128xf32>
    %10 = arith.truncf %9 : vector<128x128xf32> to vector<128x128xbf16>
    %11 = arith.addf %4, %10 : vector<128x128xbf16>
    %c1 = arith.constant 1 : index
    %c0_2 = arith.constant 0 : index
    %12 = vector.load %arg1[%c1, %c0_2] : memref<16x128xi32, #tpu.memory_space<vmem>>, vector<1x128xi32>
    %13 = vector.broadcast %12 : vector<1x128xi32> to vector<128x128xi32>
    %14 = arith.cmpi eq, %13, %3 : vector<128x128xi32>
    %15 = arith.extui %14 : vector<128x128xi1> to vector<128x128xi32>
    %16 = arith.sitofp %15 : vector<128x128xi32> to vector<128x128xf32>
    %17 = arith.truncf %16 : vector<128x128xf32> to vector<128x128xbf16>
    %18 = arith.addf %11, %17 : vector<128x128xbf16>
    %c2 = arith.constant 2 : index
    %c0_3 = arith.constant 0 : index
    %19 = vector.load %arg1[%c2, %c0_3] : memref<16x128xi32, #tpu.memory_space<vmem>>, vector<1x128xi32>
    %20 = vector.broadcast %19 : vector<1x128xi32> to vector<128x128xi32>
    %21 = arith.cmpi eq, %20, %3 : vector<128x128xi32>
    %22 = arith.extui %21 : vector<128x128xi1> to vector<128x128xi32>
    %23 = arith.sitofp %22 : vector<128x128xi32> to vector<128x128xf32>
    %24 = arith.truncf %23 : vector<128x128xf32> to vector<128x128xbf16>
    %25 = arith.addf %18, %24 : vector<128x128xbf16>
    %c3 = arith.constant 3 : index
    %c0_4 = arith.constant 0 : index
    %26 = vector.load %arg1[%c3, %c0_4] : memref<16x128xi32, #tpu.memory_space<vmem>>, vector<1x128xi32>
    %27 = vector.broadcast %26 : vector<1x128xi32> to vector<128x128xi32>
    %28 = arith.cmpi eq, %27, %3 : vector<128x128xi32>
    %29 = arith.extui %28 : vector<128x128xi1> to vector<128x128xi32>
    %30 = arith.sitofp %29 : vector<128x128xi32> to vector<128x128xf32>
    %31 = arith.truncf %30 : vector<128x128xf32> to vector<128x128xbf16>
    %32 = arith.addf %25, %31 : vector<128x128xbf16>
    %c4 = arith.constant 4 : index
    %c0_5 = arith.constant 0 : index
    %33 = vector.load %arg1[%c4, %c0_5] : memref<16x128xi32, #tpu.memory_space<vmem>>, vector<1x128xi32>
    %34 = vector.broadcast %33 : vector<1x128xi32> to vector<128x128xi32>
    %35 = arith.cmpi eq, %34, %3 : vector<128x128xi32>
    %36 = arith.extui %35 : vector<128x128xi1> to vector<128x128xi32>
    %37 = arith.sitofp %36 : vector<128x128xi32> to vector<128x128xf32>
    %38 = arith.truncf %37 : vector<128x128xf32> to vector<128x128xbf16>
    %39 = arith.addf %32, %38 : vector<128x128xbf16>
    %c5 = arith.constant 5 : index
    %c0_6 = arith.constant 0 : index
    %40 = vector.load %arg1[%c5, %c0_6] : memref<16x128xi32, #tpu.memory_space<vmem>>, vector<1x128xi32>
    %41 = vector.broadcast %40 : vector<1x128xi32> to vector<128x128xi32>
    %42 = arith.cmpi eq, %41, %3 : vector<128x128xi32>
    %43 = arith.extui %42 : vector<128x128xi1> to vector<128x128xi32>
    %44 = arith.sitofp %43 : vector<128x128xi32> to vector<128x128xf32>
    %45 = arith.truncf %44 : vector<128x128xf32> to vector<128x128xbf16>
    %46 = arith.addf %39, %45 : vector<128x128xbf16>
    %c6 = arith.constant 6 : index
    %c0_7 = arith.constant 0 : index
    %47 = vector.load %arg1[%c6, %c0_7] : memref<16x128xi32, #tpu.memory_space<vmem>>, vector<1x128xi32>
    %48 = vector.broadcast %47 : vector<1x128xi32> to vector<128x128xi32>
    %49 = arith.cmpi eq, %48, %3 : vector<128x128xi32>
    %50 = arith.extui %49 : vector<128x128xi1> to vector<128x128xi32>
    %51 = arith.sitofp %50 : vector<128x128xi32> to vector<128x128xf32>
    %52 = arith.truncf %51 : vector<128x128xf32> to vector<128x128xbf16>
    %53 = arith.addf %46, %52 : vector<128x128xbf16>
    %c7 = arith.constant 7 : index
    %c0_8 = arith.constant 0 : index
    %54 = vector.load %arg1[%c7, %c0_8] : memref<16x128xi32, #tpu.memory_space<vmem>>, vector<1x128xi32>
    %55 = vector.broadcast %54 : vector<1x128xi32> to vector<128x128xi32>
    %56 = arith.cmpi eq, %55, %3 : vector<128x128xi32>
    %57 = arith.extui %56 : vector<128x128xi1> to vector<128x128xi32>
    %58 = arith.sitofp %57 : vector<128x128xi32> to vector<128x128xf32>
    %59 = arith.truncf %58 : vector<128x128xf32> to vector<128x128xbf16>
    %60 = arith.addf %53, %59 : vector<128x128xbf16>
    %c8 = arith.constant 8 : index
    %c0_9 = arith.constant 0 : index
    %61 = vector.load %arg1[%c8, %c0_9] : memref<16x128xi32, #tpu.memory_space<vmem>>, vector<1x128xi32>
    %62 = vector.broadcast %61 : vector<1x128xi32> to vector<128x128xi32>
    %63 = arith.cmpi eq, %62, %3 : vector<128x128xi32>
    %64 = arith.extui %63 : vector<128x128xi1> to vector<128x128xi32>
    %65 = arith.sitofp %64 : vector<128x128xi32> to vector<128x128xf32>
    %66 = arith.truncf %65 : vector<128x128xf32> to vector<128x128xbf16>
    %67 = arith.addf %60, %66 : vector<128x128xbf16>
    %c9 = arith.constant 9 : index
    %c0_10 = arith.constant 0 : index
    %68 = vector.load %arg1[%c9, %c0_10] : memref<16x128xi32, #tpu.memory_space<vmem>>, vector<1x128xi32>
    %69 = vector.broadcast %68 : vector<1x128xi32> to vector<128x128xi32>
    %70 = arith.cmpi eq, %69, %3 : vector<128x128xi32>
    %71 = arith.extui %70 : vector<128x128xi1> to vector<128x128xi32>
    %72 = arith.sitofp %71 : vector<128x128xi32> to vector<128x128xf32>
    %73 = arith.truncf %72 : vector<128x128xf32> to vector<128x128xbf16>
    %74 = arith.addf %67, %73 : vector<128x128xbf16>
    %c10 = arith.constant 10 : index
    %c0_11 = arith.constant 0 : index
    %75 = vector.load %arg1[%c10, %c0_11] : memref<16x128xi32, #tpu.memory_space<vmem>>, vector<1x128xi32>
    %76 = vector.broadcast %75 : vector<1x128xi32> to vector<128x128xi32>
    %77 = arith.cmpi eq, %76, %3 : vector<128x128xi32>
    %78 = arith.extui %77 : vector<128x128xi1> to vector<128x128xi32>
    %79 = arith.sitofp %78 : vector<128x128xi32> to vector<128x128xf32>
    %80 = arith.truncf %79 : vector<128x128xf32> to vector<128x128xbf16>
    %81 = arith.addf %74, %80 : vector<128x128xbf16>
    %c11 = arith.constant 11 : index
    %c0_12 = arith.constant 0 : index
    %82 = vector.load %arg1[%c11, %c0_12] : memref<16x128xi32, #tpu.memory_space<vmem>>, vector<1x128xi32>
    %83 = vector.broadcast %82 : vector<1x128xi32> to vector<128x128xi32>
    %84 = arith.cmpi eq, %83, %3 : vector<128x128xi32>
    %85 = arith.extui %84 : vector<128x128xi1> to vector<128x128xi32>
    %86 = arith.sitofp %85 : vector<128x128xi32> to vector<128x128xf32>
    %87 = arith.truncf %86 : vector<128x128xf32> to vector<128x128xbf16>
    %88 = arith.addf %81, %87 : vector<128x128xbf16>
    %c12 = arith.constant 12 : index
    %c0_13 = arith.constant 0 : index
    %89 = vector.load %arg1[%c12, %c0_13] : memref<16x128xi32, #tpu.memory_space<vmem>>, vector<1x128xi32>
    %90 = vector.broadcast %89 : vector<1x128xi32> to vector<128x128xi32>
    %91 = arith.cmpi eq, %90, %3 : vector<128x128xi32>
    %92 = arith.extui %91 : vector<128x128xi1> to vector<128x128xi32>
    %93 = arith.sitofp %92 : vector<128x128xi32> to vector<128x128xf32>
    %94 = arith.truncf %93 : vector<128x128xf32> to vector<128x128xbf16>
    %95 = arith.addf %88, %94 : vector<128x128xbf16>
    %c13 = arith.constant 13 : index
    %c0_14 = arith.constant 0 : index
    %96 = vector.load %arg1[%c13, %c0_14] : memref<16x128xi32, #tpu.memory_space<vmem>>, vector<1x128xi32>
    %97 = vector.broadcast %96 : vector<1x128xi32> to vector<128x128xi32>
    %98 = arith.cmpi eq, %97, %3 : vector<128x128xi32>
    %99 = arith.extui %98 : vector<128x128xi1> to vector<128x128xi32>
    %100 = arith.sitofp %99 : vector<128x128xi32> to vector<128x128xf32>
    %101 = arith.truncf %100 : vector<128x128xf32> to vector<128x128xbf16>
    %102 = arith.addf %95, %101 : vector<128x128xbf16>
    %c14 = arith.constant 14 : index
    %c0_15 = arith.constant 0 : index
    %103 = vector.load %arg1[%c14, %c0_15] : memref<16x128xi32, #tpu.memory_space<vmem>>, vector<1x128xi32>
    %104 = vector.broadcast %103 : vector<1x128xi32> to vector<128x128xi32>
    %105 = arith.cmpi eq, %104, %3 : vector<128x128xi32>
    %106 = arith.extui %105 : vector<128x128xi1> to vector<128x128xi32>
    %107 = arith.sitofp %106 : vector<128x128xi32> to vector<128x128xf32>
    %108 = arith.truncf %107 : vector<128x128xf32> to vector<128x128xbf16>
    %109 = arith.addf %102, %108 : vector<128x128xbf16>
    %c15 = arith.constant 15 : index
    %c0_16 = arith.constant 0 : index
    %110 = vector.load %arg1[%c15, %c0_16] : memref<16x128xi32, #tpu.memory_space<vmem>>, vector<1x128xi32>
    %111 = vector.broadcast %110 : vector<1x128xi32> to vector<128x128xi32>
    %112 = arith.cmpi eq, %111, %3 : vector<128x128xi32>
    %113 = arith.extui %112 : vector<128x128xi1> to vector<128x128xi32>
    %114 = arith.sitofp %113 : vector<128x128xi32> to vector<128x128xf32>
    %115 = arith.truncf %114 : vector<128x128xf32> to vector<128x128xbf16>
    %116 = arith.addf %109, %115 : vector<128x128xbf16>
    %c0_17 = arith.constant 0 : index
    %c0_18 = arith.constant 0 : index
    %117 = vector.load %arg3[%c0_17, %c0_18] : memref<128x256xbf16, #tpu.memory_space<vmem>>, vector<128x128xbf16>
    %cst_19 = arith.constant dense<0.000000e+00> : vector<128x128xf32>
    %118 = tpu.matmul %117, %116, %cst_19 {dimension_numbers = #tpu.dot_dimension_numbers<[1], [0], [0], [1], [0, 0, 1, 1], [], []>} : vector<128x128xbf16>, vector<128x128xbf16>, vector<128x128xf32> -> vector<128x128xf32>
    %119 = arith.addf %0, %118 : vector<128x128xf32>
    %cst_20 = arith.constant 0.000000e+00 : bf16
    %120 = vector.broadcast %cst_20 : bf16 to vector<128x128xbf16>
    %c0_21 = arith.constant 0 : index
    %c0_22 = arith.constant 0 : index
    %121 = vector.load %arg2[%c0_21, %c0_22] : memref<8x128xi32, #tpu.memory_space<vmem>>, vector<1x128xi32>
    %122 = vector.broadcast %121 : vector<1x128xi32> to vector<128x128xi32>
    %123 = arith.cmpi eq, %122, %3 : vector<128x128xi32>
    %124 = arith.extui %123 : vector<128x128xi1> to vector<128x128xi32>
    %125 = arith.sitofp %124 : vector<128x128xi32> to vector<128x128xf32>
    %126 = arith.truncf %125 : vector<128x128xf32> to vector<128x128xbf16>
    %127 = arith.addf %120, %126 : vector<128x128xbf16>
    %c1_23 = arith.constant 1 : index
    %c0_24 = arith.constant 0 : index
    %128 = vector.load %arg2[%c1_23, %c0_24] : memref<8x128xi32, #tpu.memory_space<vmem>>, vector<1x128xi32>
    %129 = vector.broadcast %128 : vector<1x128xi32> to vector<128x128xi32>
    %130 = arith.cmpi eq, %129, %3 : vector<128x128xi32>
    %131 = arith.extui %130 : vector<128x128xi1> to vector<128x128xi32>
    %132 = arith.sitofp %131 : vector<128x128xi32> to vector<128x128xf32>
    %133 = arith.truncf %132 : vector<128x128xf32> to vector<128x128xbf16>
    %134 = arith.addf %127, %133 : vector<128x128xbf16>
    %c2_25 = arith.constant 2 : index
    %c0_26 = arith.constant 0 : index
    %135 = vector.load %arg2[%c2_25, %c0_26] : memref<8x128xi32, #tpu.memory_space<vmem>>, vector<1x128xi32>
    %136 = vector.broadcast %135 : vector<1x128xi32> to vector<128x128xi32>
    %137 = arith.cmpi eq, %136, %3 : vector<128x128xi32>
    %138 = arith.extui %137 : vector<128x128xi1> to vector<128x128xi32>
    %139 = arith.sitofp %138 : vector<128x128xi32> to vector<128x128xf32>
    %140 = arith.truncf %139 : vector<128x128xf32> to vector<128x128xbf16>
    %141 = arith.addf %134, %140 : vector<128x128xbf16>
    %c3_27 = arith.constant 3 : index
    %c0_28 = arith.constant 0 : index
    %142 = vector.load %arg2[%c3_27, %c0_28] : memref<8x128xi32, #tpu.memory_space<vmem>>, vector<1x128xi32>
    %143 = vector.broadcast %142 : vector<1x128xi32> to vector<128x128xi32>
    %144 = arith.cmpi eq, %143, %3 : vector<128x128xi32>
    %145 = arith.extui %144 : vector<128x128xi1> to vector<128x128xi32>
    %146 = arith.sitofp %145 : vector<128x128xi32> to vector<128x128xf32>
    %147 = arith.truncf %146 : vector<128x128xf32> to vector<128x128xbf16>
    %148 = arith.addf %141, %147 : vector<128x128xbf16>
    %c4_29 = arith.constant 4 : index
    %c0_30 = arith.constant 0 : index
    %149 = vector.load %arg2[%c4_29, %c0_30] : memref<8x128xi32, #tpu.memory_space<vmem>>, vector<1x128xi32>
    %150 = vector.broadcast %149 : vector<1x128xi32> to vector<128x128xi32>
    %151 = arith.cmpi eq, %150, %3 : vector<128x128xi32>
    %152 = arith.extui %151 : vector<128x128xi1> to vector<128x128xi32>
    %153 = arith.sitofp %152 : vector<128x128xi32> to vector<128x128xf32>
    %154 = arith.truncf %153 : vector<128x128xf32> to vector<128x128xbf16>
    %155 = arith.addf %148, %154 : vector<128x128xbf16>
    %c5_31 = arith.constant 5 : index
    %c0_32 = arith.constant 0 : index
    %156 = vector.load %arg2[%c5_31, %c0_32] : memref<8x128xi32, #tpu.memory_space<vmem>>, vector<1x128xi32>
    %157 = vector.broadcast %156 : vector<1x128xi32> to vector<128x128xi32>
    %158 = arith.cmpi eq, %157, %3 : vector<128x128xi32>
    %159 = arith.extui %158 : vector<128x128xi1> to vector<128x128xi32>
    %160 = arith.sitofp %159 : vector<128x128xi32> to vector<128x128xf32>
    %161 = arith.truncf %160 : vector<128x128xf32> to vector<128x128xbf16>
    %162 = arith.addf %155, %161 : vector<128x128xbf16>
    %c6_33 = arith.constant 6 : index
    %c0_34 = arith.constant 0 : index
    %163 = vector.load %arg2[%c6_33, %c0_34] : memref<8x128xi32, #tpu.memory_space<vmem>>, vector<1x128xi32>
    %164 = vector.broadcast %163 : vector<1x128xi32> to vector<128x128xi32>
    %165 = arith.cmpi eq, %164, %3 : vector<128x128xi32>
    %166 = arith.extui %165 : vector<128x128xi1> to vector<128x128xi32>
    %167 = arith.sitofp %166 : vector<128x128xi32> to vector<128x128xf32>
    %168 = arith.truncf %167 : vector<128x128xf32> to vector<128x128xbf16>
    %169 = arith.addf %162, %168 : vector<128x128xbf16>
    %c7_35 = arith.constant 7 : index
    %c0_36 = arith.constant 0 : index
    %170 = vector.load %arg2[%c7_35, %c0_36] : memref<8x128xi32, #tpu.memory_space<vmem>>, vector<1x128xi32>
    %171 = vector.broadcast %170 : vector<1x128xi32> to vector<128x128xi32>
    %172 = arith.cmpi eq, %171, %3 : vector<128x128xi32>
    %173 = arith.extui %172 : vector<128x128xi1> to vector<128x128xi32>
    %174 = arith.sitofp %173 : vector<128x128xi32> to vector<128x128xf32>
    %175 = arith.truncf %174 : vector<128x128xf32> to vector<128x128xbf16>
    %176 = arith.addf %169, %175 : vector<128x128xbf16>
    %c0_37 = arith.constant 0 : index
    %c0_38 = arith.constant 0 : index
    %177 = vector.load %arg4[%c0_37, %c0_38] : memref<128x256xbf16, #tpu.memory_space<vmem>>, vector<128x128xbf16>
    %cst_39 = arith.constant dense<0.000000e+00> : vector<128x128xf32>
    %178 = tpu.matmul %177, %176, %cst_39 {dimension_numbers = #tpu.dot_dimension_numbers<[1], [0], [0], [1], [0, 0, 1, 1], [], []>} : vector<128x128xbf16>, vector<128x128xbf16>, vector<128x128xf32> -> vector<128x128xf32>
    %179 = arith.addf %119, %178 : vector<128x128xf32>
    %180 = tpu.iota {dimensions = array<i32: 0>} : vector<128x128xi32>
    %c129_i32 = arith.constant 129 : i32
    %181 = vector.broadcast %c129_i32 : i32 to vector<128x128xi32>
    %182 = arith.addi %180, %181 : vector<128x128xi32>
    %cst_40 = arith.constant 0.000000e+00 : bf16
    %183 = vector.broadcast %cst_40 : bf16 to vector<128x128xbf16>
    %c0_41 = arith.constant 0 : index
    %c0_42 = arith.constant 0 : index
    %184 = vector.load %arg1[%c0_41, %c0_42] : memref<16x128xi32, #tpu.memory_space<vmem>>, vector<1x128xi32>
    %185 = vector.broadcast %184 : vector<1x128xi32> to vector<128x128xi32>
    %186 = arith.cmpi eq, %185, %182 : vector<128x128xi32>
    %187 = arith.extui %186 : vector<128x128xi1> to vector<128x128xi32>
    %188 = arith.sitofp %187 : vector<128x128xi32> to vector<128x128xf32>
    %189 = arith.truncf %188 : vector<128x128xf32> to vector<128x128xbf16>
    %190 = arith.addf %183, %189 : vector<128x128xbf16>
    %c1_43 = arith.constant 1 : index
    %c0_44 = arith.constant 0 : index
    %191 = vector.load %arg1[%c1_43, %c0_44] : memref<16x128xi32, #tpu.memory_space<vmem>>, vector<1x128xi32>
    %192 = vector.broadcast %191 : vector<1x128xi32> to vector<128x128xi32>
    %193 = arith.cmpi eq, %192, %182 : vector<128x128xi32>
    %194 = arith.extui %193 : vector<128x128xi1> to vector<128x128xi32>
    %195 = arith.sitofp %194 : vector<128x128xi32> to vector<128x128xf32>
    %196 = arith.truncf %195 : vector<128x128xf32> to vector<128x128xbf16>
    %197 = arith.addf %190, %196 : vector<128x128xbf16>
    %c2_45 = arith.constant 2 : index
    %c0_46 = arith.constant 0 : index
    %198 = vector.load %arg1[%c2_45, %c0_46] : memref<16x128xi32, #tpu.memory_space<vmem>>, vector<1x128xi32>
    %199 = vector.broadcast %198 : vector<1x128xi32> to vector<128x128xi32>
    %200 = arith.cmpi eq, %199, %182 : vector<128x128xi32>
    %201 = arith.extui %200 : vector<128x128xi1> to vector<128x128xi32>
    %202 = arith.sitofp %201 : vector<128x128xi32> to vector<128x128xf32>
    %203 = arith.truncf %202 : vector<128x128xf32> to vector<128x128xbf16>
    %204 = arith.addf %197, %203 : vector<128x128xbf16>
    %c3_47 = arith.constant 3 : index
    %c0_48 = arith.constant 0 : index
    %205 = vector.load %arg1[%c3_47, %c0_48] : memref<16x128xi32, #tpu.memory_space<vmem>>, vector<1x128xi32>
    %206 = vector.broadcast %205 : vector<1x128xi32> to vector<128x128xi32>
    %207 = arith.cmpi eq, %206, %182 : vector<128x128xi32>
    %208 = arith.extui %207 : vector<128x128xi1> to vector<128x128xi32>
    %209 = arith.sitofp %208 : vector<128x128xi32> to vector<128x128xf32>
    %210 = arith.truncf %209 : vector<128x128xf32> to vector<128x128xbf16>
    %211 = arith.addf %204, %210 : vector<128x128xbf16>
    %c4_49 = arith.constant 4 : index
    %c0_50 = arith.constant 0 : index
    %212 = vector.load %arg1[%c4_49, %c0_50] : memref<16x128xi32, #tpu.memory_space<vmem>>, vector<1x128xi32>
    %213 = vector.broadcast %212 : vector<1x128xi32> to vector<128x128xi32>
    %214 = arith.cmpi eq, %213, %182 : vector<128x128xi32>
    %215 = arith.extui %214 : vector<128x128xi1> to vector<128x128xi32>
    %216 = arith.sitofp %215 : vector<128x128xi32> to vector<128x128xf32>
    %217 = arith.truncf %216 : vector<128x128xf32> to vector<128x128xbf16>
    %218 = arith.addf %211, %217 : vector<128x128xbf16>
    %c5_51 = arith.constant 5 : index
    %c0_52 = arith.constant 0 : index
    %219 = vector.load %arg1[%c5_51, %c0_52] : memref<16x128xi32, #tpu.memory_space<vmem>>, vector<1x128xi32>
    %220 = vector.broadcast %219 : vector<1x128xi32> to vector<128x128xi32>
    %221 = arith.cmpi eq, %220, %182 : vector<128x128xi32>
    %222 = arith.extui %221 : vector<128x128xi1> to vector<128x128xi32>
    %223 = arith.sitofp %222 : vector<128x128xi32> to vector<128x128xf32>
    %224 = arith.truncf %223 : vector<128x128xf32> to vector<128x128xbf16>
    %225 = arith.addf %218, %224 : vector<128x128xbf16>
    %c6_53 = arith.constant 6 : index
    %c0_54 = arith.constant 0 : index
    %226 = vector.load %arg1[%c6_53, %c0_54] : memref<16x128xi32, #tpu.memory_space<vmem>>, vector<1x128xi32>
    %227 = vector.broadcast %226 : vector<1x128xi32> to vector<128x128xi32>
    %228 = arith.cmpi eq, %227, %182 : vector<128x128xi32>
    %229 = arith.extui %228 : vector<128x128xi1> to vector<128x128xi32>
    %230 = arith.sitofp %229 : vector<128x128xi32> to vector<128x128xf32>
    %231 = arith.truncf %230 : vector<128x128xf32> to vector<128x128xbf16>
    %232 = arith.addf %225, %231 : vector<128x128xbf16>
    %c7_55 = arith.constant 7 : index
    %c0_56 = arith.constant 0 : index
    %233 = vector.load %arg1[%c7_55, %c0_56] : memref<16x128xi32, #tpu.memory_space<vmem>>, vector<1x128xi32>
    %234 = vector.broadcast %233 : vector<1x128xi32> to vector<128x128xi32>
    %235 = arith.cmpi eq, %234, %182 : vector<128x128xi32>
    %236 = arith.extui %235 : vector<128x128xi1> to vector<128x128xi32>
    %237 = arith.sitofp %236 : vector<128x128xi32> to vector<128x128xf32>
    %238 = arith.truncf %237 : vector<128x128xf32> to vector<128x128xbf16>
    %239 = arith.addf %232, %238 : vector<128x128xbf16>
    %c8_57 = arith.constant 8 : index
    %c0_58 = arith.constant 0 : index
    %240 = vector.load %arg1[%c8_57, %c0_58] : memref<16x128xi32, #tpu.memory_space<vmem>>, vector<1x128xi32>
    %241 = vector.broadcast %240 : vector<1x128xi32> to vector<128x128xi32>
    %242 = arith.cmpi eq, %241, %182 : vector<128x128xi32>
    %243 = arith.extui %242 : vector<128x128xi1> to vector<128x128xi32>
    %244 = arith.sitofp %243 : vector<128x128xi32> to vector<128x128xf32>
    %245 = arith.truncf %244 : vector<128x128xf32> to vector<128x128xbf16>
    %246 = arith.addf %239, %245 : vector<128x128xbf16>
    %c9_59 = arith.constant 9 : index
    %c0_60 = arith.constant 0 : index
    %247 = vector.load %arg1[%c9_59, %c0_60] : memref<16x128xi32, #tpu.memory_space<vmem>>, vector<1x128xi32>
    %248 = vector.broadcast %247 : vector<1x128xi32> to vector<128x128xi32>
    %249 = arith.cmpi eq, %248, %182 : vector<128x128xi32>
    %250 = arith.extui %249 : vector<128x128xi1> to vector<128x128xi32>
    %251 = arith.sitofp %250 : vector<128x128xi32> to vector<128x128xf32>
    %252 = arith.truncf %251 : vector<128x128xf32> to vector<128x128xbf16>
    %253 = arith.addf %246, %252 : vector<128x128xbf16>
    %c10_61 = arith.constant 10 : index
    %c0_62 = arith.constant 0 : index
    %254 = vector.load %arg1[%c10_61, %c0_62] : memref<16x128xi32, #tpu.memory_space<vmem>>, vector<1x128xi32>
    %255 = vector.broadcast %254 : vector<1x128xi32> to vector<128x128xi32>
    %256 = arith.cmpi eq, %255, %182 : vector<128x128xi32>
    %257 = arith.extui %256 : vector<128x128xi1> to vector<128x128xi32>
    %258 = arith.sitofp %257 : vector<128x128xi32> to vector<128x128xf32>
    %259 = arith.truncf %258 : vector<128x128xf32> to vector<128x128xbf16>
    %260 = arith.addf %253, %259 : vector<128x128xbf16>
    %c11_63 = arith.constant 11 : index
    %c0_64 = arith.constant 0 : index
    %261 = vector.load %arg1[%c11_63, %c0_64] : memref<16x128xi32, #tpu.memory_space<vmem>>, vector<1x128xi32>
    %262 = vector.broadcast %261 : vector<1x128xi32> to vector<128x128xi32>
    %263 = arith.cmpi eq, %262, %182 : vector<128x128xi32>
    %264 = arith.extui %263 : vector<128x128xi1> to vector<128x128xi32>
    %265 = arith.sitofp %264 : vector<128x128xi32> to vector<128x128xf32>
    %266 = arith.truncf %265 : vector<128x128xf32> to vector<128x128xbf16>
    %267 = arith.addf %260, %266 : vector<128x128xbf16>
    %c12_65 = arith.constant 12 : index
    %c0_66 = arith.constant 0 : index
    %268 = vector.load %arg1[%c12_65, %c0_66] : memref<16x128xi32, #tpu.memory_space<vmem>>, vector<1x128xi32>
    %269 = vector.broadcast %268 : vector<1x128xi32> to vector<128x128xi32>
    %270 = arith.cmpi eq, %269, %182 : vector<128x128xi32>
    %271 = arith.extui %270 : vector<128x128xi1> to vector<128x128xi32>
    %272 = arith.sitofp %271 : vector<128x128xi32> to vector<128x128xf32>
    %273 = arith.truncf %272 : vector<128x128xf32> to vector<128x128xbf16>
    %274 = arith.addf %267, %273 : vector<128x128xbf16>
    %c13_67 = arith.constant 13 : index
    %c0_68 = arith.constant 0 : index
    %275 = vector.load %arg1[%c13_67, %c0_68] : memref<16x128xi32, #tpu.memory_space<vmem>>, vector<1x128xi32>
    %276 = vector.broadcast %275 : vector<1x128xi32> to vector<128x128xi32>
    %277 = arith.cmpi eq, %276, %182 : vector<128x128xi32>
    %278 = arith.extui %277 : vector<128x128xi1> to vector<128x128xi32>
    %279 = arith.sitofp %278 : vector<128x128xi32> to vector<128x128xf32>
    %280 = arith.truncf %279 : vector<128x128xf32> to vector<128x128xbf16>
    %281 = arith.addf %274, %280 : vector<128x128xbf16>
    %c14_69 = arith.constant 14 : index
    %c0_70 = arith.constant 0 : index
    %282 = vector.load %arg1[%c14_69, %c0_70] : memref<16x128xi32, #tpu.memory_space<vmem>>, vector<1x128xi32>
    %283 = vector.broadcast %282 : vector<1x128xi32> to vector<128x128xi32>
    %284 = arith.cmpi eq, %283, %182 : vector<128x128xi32>
    %285 = arith.extui %284 : vector<128x128xi1> to vector<128x128xi32>
    %286 = arith.sitofp %285 : vector<128x128xi32> to vector<128x128xf32>
    %287 = arith.truncf %286 : vector<128x128xf32> to vector<128x128xbf16>
    %288 = arith.addf %281, %287 : vector<128x128xbf16>
    %c15_71 = arith.constant 15 : index
    %c0_72 = arith.constant 0 : index
    %289 = vector.load %arg1[%c15_71, %c0_72] : memref<16x128xi32, #tpu.memory_space<vmem>>, vector<1x128xi32>
    %290 = vector.broadcast %289 : vector<1x128xi32> to vector<128x128xi32>
    %291 = arith.cmpi eq, %290, %182 : vector<128x128xi32>
    %292 = arith.extui %291 : vector<128x128xi1> to vector<128x128xi32>
    %293 = arith.sitofp %292 : vector<128x128xi32> to vector<128x128xf32>
    %294 = arith.truncf %293 : vector<128x128xf32> to vector<128x128xbf16>
    %295 = arith.addf %288, %294 : vector<128x128xbf16>
    %c0_73 = arith.constant 0 : index
    %c128 = arith.constant 128 : index
    %296 = vector.load %arg3[%c0_73, %c128] : memref<128x256xbf16, #tpu.memory_space<vmem>>, vector<128x128xbf16>
    %cst_74 = arith.constant dense<0.000000e+00> : vector<128x128xf32>
    %297 = tpu.matmul %296, %295, %cst_74 {dimension_numbers = #tpu.dot_dimension_numbers<[1], [0], [0], [1], [0, 0, 1, 1], [], []>} : vector<128x128xbf16>, vector<128x128xbf16>, vector<128x128xf32> -> vector<128x128xf32>
    %298 = arith.addf %179, %297 : vector<128x128xf32>
    %cst_75 = arith.constant 0.000000e+00 : bf16
    %299 = vector.broadcast %cst_75 : bf16 to vector<128x128xbf16>
    %c0_76 = arith.constant 0 : index
    %c0_77 = arith.constant 0 : index
    %300 = vector.load %arg2[%c0_76, %c0_77] : memref<8x128xi32, #tpu.memory_space<vmem>>, vector<1x128xi32>
    %301 = vector.broadcast %300 : vector<1x128xi32> to vector<128x128xi32>
    %302 = arith.cmpi eq, %301, %182 : vector<128x128xi32>
    %303 = arith.extui %302 : vector<128x128xi1> to vector<128x128xi32>
    %304 = arith.sitofp %303 : vector<128x128xi32> to vector<128x128xf32>
    %305 = arith.truncf %304 : vector<128x128xf32> to vector<128x128xbf16>
    %306 = arith.addf %299, %305 : vector<128x128xbf16>
    %c1_78 = arith.constant 1 : index
    %c0_79 = arith.constant 0 : index
    %307 = vector.load %arg2[%c1_78, %c0_79] : memref<8x128xi32, #tpu.memory_space<vmem>>, vector<1x128xi32>
    %308 = vector.broadcast %307 : vector<1x128xi32> to vector<128x128xi32>
    %309 = arith.cmpi eq, %308, %182 : vector<128x128xi32>
    %310 = arith.extui %309 : vector<128x128xi1> to vector<128x128xi32>
    %311 = arith.sitofp %310 : vector<128x128xi32> to vector<128x128xf32>
    %312 = arith.truncf %311 : vector<128x128xf32> to vector<128x128xbf16>
    %313 = arith.addf %306, %312 : vector<128x128xbf16>
    %c2_80 = arith.constant 2 : index
    %c0_81 = arith.constant 0 : index
    %314 = vector.load %arg2[%c2_80, %c0_81] : memref<8x128xi32, #tpu.memory_space<vmem>>, vector<1x128xi32>
    %315 = vector.broadcast %314 : vector<1x128xi32> to vector<128x128xi32>
    %316 = arith.cmpi eq, %315, %182 : vector<128x128xi32>
    %317 = arith.extui %316 : vector<128x128xi1> to vector<128x128xi32>
    %318 = arith.sitofp %317 : vector<128x128xi32> to vector<128x128xf32>
    %319 = arith.truncf %318 : vector<128x128xf32> to vector<128x128xbf16>
    %320 = arith.addf %313, %319 : vector<128x128xbf16>
    %c3_82 = arith.constant 3 : index
    %c0_83 = arith.constant 0 : index
    %321 = vector.load %arg2[%c3_82, %c0_83] : memref<8x128xi32, #tpu.memory_space<vmem>>, vector<1x128xi32>
    %322 = vector.broadcast %321 : vector<1x128xi32> to vector<128x128xi32>
    %323 = arith.cmpi eq, %322, %182 : vector<128x128xi32>
    %324 = arith.extui %323 : vector<128x128xi1> to vector<128x128xi32>
    %325 = arith.sitofp %324 : vector<128x128xi32> to vector<128x128xf32>
    %326 = arith.truncf %325 : vector<128x128xf32> to vector<128x128xbf16>
    %327 = arith.addf %320, %326 : vector<128x128xbf16>
    %c4_84 = arith.constant 4 : index
    %c0_85 = arith.constant 0 : index
    %328 = vector.load %arg2[%c4_84, %c0_85] : memref<8x128xi32, #tpu.memory_space<vmem>>, vector<1x128xi32>
    %329 = vector.broadcast %328 : vector<1x128xi32> to vector<128x128xi32>
    %330 = arith.cmpi eq, %329, %182 : vector<128x128xi32>
    %331 = arith.extui %330 : vector<128x128xi1> to vector<128x128xi32>
    %332 = arith.sitofp %331 : vector<128x128xi32> to vector<128x128xf32>
    %333 = arith.truncf %332 : vector<128x128xf32> to vector<128x128xbf16>
    %334 = arith.addf %327, %333 : vector<128x128xbf16>
    %c5_86 = arith.constant 5 : index
    %c0_87 = arith.constant 0 : index
    %335 = vector.load %arg2[%c5_86, %c0_87] : memref<8x128xi32, #tpu.memory_space<vmem>>, vector<1x128xi32>
    %336 = vector.broadcast %335 : vector<1x128xi32> to vector<128x128xi32>
    %337 = arith.cmpi eq, %336, %182 : vector<128x128xi32>
    %338 = arith.extui %337 : vector<128x128xi1> to vector<128x128xi32>
    %339 = arith.sitofp %338 : vector<128x128xi32> to vector<128x128xf32>
    %340 = arith.truncf %339 : vector<128x128xf32> to vector<128x128xbf16>
    %341 = arith.addf %334, %340 : vector<128x128xbf16>
    %c6_88 = arith.constant 6 : index
    %c0_89 = arith.constant 0 : index
    %342 = vector.load %arg2[%c6_88, %c0_89] : memref<8x128xi32, #tpu.memory_space<vmem>>, vector<1x128xi32>
    %343 = vector.broadcast %342 : vector<1x128xi32> to vector<128x128xi32>
    %344 = arith.cmpi eq, %343, %182 : vector<128x128xi32>
    %345 = arith.extui %344 : vector<128x128xi1> to vector<128x128xi32>
    %346 = arith.sitofp %345 : vector<128x128xi32> to vector<128x128xf32>
    %347 = arith.truncf %346 : vector<128x128xf32> to vector<128x128xbf16>
    %348 = arith.addf %341, %347 : vector<128x128xbf16>
    %c7_90 = arith.constant 7 : index
    %c0_91 = arith.constant 0 : index
    %349 = vector.load %arg2[%c7_90, %c0_91] : memref<8x128xi32, #tpu.memory_space<vmem>>, vector<1x128xi32>
    %350 = vector.broadcast %349 : vector<1x128xi32> to vector<128x128xi32>
    %351 = arith.cmpi eq, %350, %182 : vector<128x128xi32>
    %352 = arith.extui %351 : vector<128x128xi1> to vector<128x128xi32>
    %353 = arith.sitofp %352 : vector<128x128xi32> to vector<128x128xf32>
    %354 = arith.truncf %353 : vector<128x128xf32> to vector<128x128xbf16>
    %355 = arith.addf %348, %354 : vector<128x128xbf16>
    %c0_92 = arith.constant 0 : index
    %c128_93 = arith.constant 128 : index
    %356 = vector.load %arg4[%c0_92, %c128_93] : memref<128x256xbf16, #tpu.memory_space<vmem>>, vector<128x128xbf16>
    %cst_94 = arith.constant dense<0.000000e+00> : vector<128x128xf32>
    %357 = tpu.matmul %356, %355, %cst_94 {dimension_numbers = #tpu.dot_dimension_numbers<[1], [0], [0], [1], [0, 0, 1, 1], [], []>} : vector<128x128xbf16>, vector<128x128xbf16>, vector<128x128xf32> -> vector<128x128xf32>
    %358 = arith.addf %298, %357 : vector<128x128xf32>
    %c0_95 = arith.constant 0 : index
    %c0_96 = arith.constant 0 : index
    %359 = vector.load %arg5[%c0_95, %c0_96] : memref<128x1xf32, #tpu.memory_space<vmem>>, vector<128x1xf32>
    %360 = vector.broadcast %359 : vector<128x1xf32> to vector<128x128xf32>
    %361 = arith.addf %358, %360 : vector<128x128xf32>
    %cst_97 = arith.constant 0.000000e+00 : f32
    %362 = vector.broadcast %cst_97 : f32 to vector<128x128xf32>
    %363 = arith.maximumf %361, %362 : vector<128x128xf32>
    %c0_98 = arith.constant 0 : index
    %c0_99 = arith.constant 0 : index
    %364 = vector.load %arg6[%c0_98, %c0_99] : memref<256x128xbf16, #tpu.memory_space<vmem>>, vector<256x128xbf16>
    %c0_100 = arith.constant 0 : index
    %c0_101 = arith.constant 0 : index
    %365 = vector.load %arg7[%c0_100, %c0_101] : memref<256x1xf32, #tpu.memory_space<vmem>>, vector<256x1xf32>
    %366 = arith.truncf %363 : vector<128x128xf32> to vector<128x128xbf16>
    %cst_102 = arith.constant dense<0.000000e+00> : vector<256x128xf32>
    %367 = tpu.matmul %364, %366, %cst_102 {dimension_numbers = #tpu.dot_dimension_numbers<[1], [0], [0], [1], [0, 0, 1, 1], [], []>} : vector<256x128xbf16>, vector<128x128xbf16>, vector<256x128xf32> -> vector<256x128xf32>
    %368 = vector.broadcast %365 : vector<256x1xf32> to vector<256x128xf32>
    %369 = arith.addf %367, %368 : vector<256x128xf32>
    %c0_103 = arith.constant 0 : index
    %c0_104 = arith.constant 0 : index
    %370 = vector.load %arg8[%c0_103, %c0_104] : memref<256x128xf32, #tpu.memory_space<vmem>>, vector<256x128xf32>
    tpu.vector_store %arg8[%c0_103, %c0_104], %369 {strides = array<i32>} : memref<256x128xf32, #tpu.memory_space<vmem>>, vector<256x128xf32>,
    return
  }
  func.func @transform_0(%arg0: i32) -> (i32, i32) {
    %c0_i32 = arith.constant 0 : i32
    %c0_i32_0 = arith.constant 0 : i32
    return %c0_i32, %arg0 : i32, i32
  }
  func.func @transform_1(%arg0: i32) -> (i32, i32) {
    %c0_i32 = arith.constant 0 : i32
    %c0_i32_0 = arith.constant 0 : i32
    return %c0_i32, %arg0 : i32, i32
  }
  func.func @transform_2(%arg0: i32) -> (i32, i32) {
    %c0_i32 = arith.constant 0 : i32
    %c0_i32_0 = arith.constant 0 : i32
    %c0_i32_1 = arith.constant 0 : i32
    return %c0_i32, %c0_i32_0 : i32, i32
  }
  func.func @transform_3(%arg0: i32) -> (i32, i32) {
    %c0_i32 = arith.constant 0 : i32
    %c0_i32_0 = arith.constant 0 : i32
    %c0_i32_1 = arith.constant 0 : i32
    return %c0_i32, %c0_i32_0 : i32, i32
  }
  func.func @transform_4(%arg0: i32) -> (i32, i32) {
    %c0_i32 = arith.constant 0 : i32
    %c0_i32_0 = arith.constant 0 : i32
    %c0_i32_1 = arith.constant 0 : i32
    return %c0_i32, %c0_i32_0 : i32, i32
  }
  func.func @transform_5(%arg0: i32) -> (i32, i32) {
    %c0_i32 = arith.constant 0 : i32
    %c0_i32_0 = arith.constant 0 : i32
    %c0_i32_1 = arith.constant 0 : i32
    return %c0_i32, %c0_i32_0 : i32, i32
  }
  func.func @transform_6(%arg0: i32) -> (i32, i32) {
    %c0_i32 = arith.constant 0 : i32
    %c0_i32_0 = arith.constant 0 : i32
    %c0_i32_1 = arith.constant 0 : i32
    return %c0_i32, %c0_i32_0 : i32, i32
  }
  func.func @transform_7(%arg0: i32) -> (i32, i32) {
    %c0_i32 = arith.constant 0 : i32
    %c0_i32_0 = arith.constant 0 : i32
    return %c0_i32, %arg0 : i32, i32
  }
}

</mosaic_0001>

<llo_original>
// kernel: tpu_custom_call.1
$region0: #{tpu_custom_call.1}
  #allocation0 [shape = 'u32[]', space=smem, size = 0x4, offset = 0x4, fixed_abs, tag = 'smem constant byte address 0x4 - core index']
  #allocation1 [shape = 'u32[144,128]{1,0:T(1,128)}', space=vmem, size = 0x12000, scoped, tag = 'internal scratch']
  %s0 = inlined_call_operand.hbm [shape: s32[16,256], index: 0, kind: input, shape index: {}]
  %s1 = inlined_call_operand.hbm [shape: s32[8,256], index: 1, kind: input, shape index: {}]
  %s2 = inlined_call_operand.vmem [shape: bf16[128,256], index: 2, kind: input, shape index: {}]
  %s3 = inlined_call_operand.vmem [shape: bf16[128,256], index: 3, kind: input, shape index: {}]
  %s4 = inlined_call_operand.vmem [shape: f32[128,1], index: 4, kind: input, shape index: {}]
  %s5 = inlined_call_operand.vmem [shape: bf16[256,128], index: 5, kind: input, shape index: {}]
  %s6 = inlined_call_operand.vmem [shape: f32[256,1], index: 6, kind: input, shape index: {}]
  %s7 = inlined_call_operand.hbm [shape: f32[256,256], index: 7, kind: output, shape index: {}]
  %s8 = sld [smem:[#allocation0]]
  $region69: #{tpu_custom_call.1} parent=0
    _
  %s10 = ssub.s32 1, %s8
  %s11 = scalar_select 0, %s10, %s8
  $region1: #{tpu_custom_call.1} parent=0
    #allocation2 [shape = 'u8[16384]{0}', space=vmem, size = 0x4000, scoped, tag = 'input window, operand 0']
    #allocation3 [shape = 's32[2]{0}', space=sflag, size = 0x8, scoped, tag = 'scoped memory for tpu_custom_call.1']
    #allocation4 [shape = 's32[2]{0}', space=sflag, size = 0x8, scoped, tag = 'scoped memory for tpu_custom_call.1']
    #allocation5 [shape = 'u8[8192]{0}', space=vmem, size = 0x2000, scoped, tag = 'input window, operand 1']
    #allocation6 [shape = 's32[2]{0}', space=sflag, size = 0x8, scoped, tag = 'scoped memory for tpu_custom_call.1']
    #allocation7 [shape = 'u8[262144]{0}', space=vmem, size = 0x40000, scoped, tag = 'output window, operand 0']
    %12 = vsyncpa [#allocation3], 0
    %s13 = scalar_lea.sflag [#allocation3], 1
    %14 = vsyncpa %s13, 0
    %15 = vsyncpa [#allocation6], 0
    %s16 = scalar_lea.sflag [#allocation6], 1
    %17 = vsyncpa %s16, 0
    %18 = vsyncpa [#allocation4], 0
    %s19 = scalar_lea.sflag [#allocation4], 1
    %20 = vsyncpa %s19, 0
    loop: start=0, step=1, limit=4
    $region2: #{tpu_custom_call.1} parent=1 // loop_pre_header
      _
    $region3: #{tpu_custom_call.1} parent=1 // loop_header
      %s22 = sphi 0, %s26
      %p23 = scmp.ge.s32.totalorder %s22, 4
      %s32 = sphi 0, %s34
      %s35 = sphi 0, %s32
      %s36 = sphi 0, %s35
      %s52 = sphi 0, %s36
      %s58 = sphi 0, %s60
      %s61 = sphi 0, %s58
      %s62 = sphi 0, %s61
      %s78 = sphi 0, %s62
      %s82 = sphi 0, %s82
      %s84 = sphi 0, %s82
      %s85 = sphi 0, %s84
      %s99 = sphi 0, %s85
      %s103 = sphi 0, %s103
      %s105 = sphi 0, %s103
      %s106 = sphi 0, %s105
      %s120 = sphi 0, %s106
      %s124 = sphi 0, %s124
      %s126 = sphi 0, %s124
      %s127 = sphi 0, %s126
      %s141 = sphi 0, %s127
      %s145 = sphi 0, %s145
      %s147 = sphi 0, %s145
      %s148 = sphi 0, %s147
      %s162 = sphi 0, %s148
      %s166 = sphi 0, %s166
      %s168 = sphi 0, %s166
      %s169 = sphi 0, %s168
      %s183 = sphi 0, %s169
      %s189 = sphi 0, %s191
      %s192 = sphi 0, %s189
      %s193 = sphi 0, %s192
      %s209 = sphi 0, %s193
    $region4: #{tpu_custom_call.1} parent=1 // loop_header_branch
      %25 = sbr.rel (%p23) target = $region8
    $region5: #{tpu_custom_call.1} parent=1 // loop_body
      %s27 = ssub.s32 %s22, 1
      %s28 = ssub.s32 %s22, 2
      %s29 = sadd.s32 %s22, 1
      %s30 = ssub.s32 %s22, %s29
      %p31 = scmp.eq.s32.totalorder %s30, 0
      %s33 = sadd.s32 %s32, 1
      %s34 = scalar_select %p31, %s32, %s33
      %p37 = pneg %p31
      %p38 = scmp.eq.s32.totalorder %s22, 1
      %p39 = por %p37, %p38
      %p40 = scmp.ne.s32.totalorder %s32, %s35
      %p41 = scmp.eq.s32.totalorder %s22, 0
      %p42 = por %p40, %p41
      %p43 = scmp.ne.s32.totalorder %s32, %s35
      %p44 = scmp.eq.s32.totalorder %s27, 1
      %p45 = por %p43, %p44
      %p46 = scmp.ne.s32.totalorder %s35, %s36
      %p47 = scmp.eq.s32.totalorder %s27, 0
      %p48 = por %p46, %p47
      %p49 = scmp.ne.s32.totalorder %s35, %s36
      %p50 = scmp.eq.s32.totalorder %s28, 1
      %p51 = por %p49, %p50
      %p53 = scmp.ne.s32.totalorder %s36, %s52
      %p54 = scmp.eq.s32.totalorder %s28, 0
      %p55 = por %p53, %p54
      %s56 = ssub.s32 %s22, %s29
      %p57 = scmp.eq.s32.totalorder %s56, 0
      %s59 = sadd.s32 %s58, 1
      %s60 = scalar_select %p57, %s58, %s59
      %p63 = pneg %p57
      %p64 = scmp.eq.s32.totalorder %s22, 1
      %p65 = por %p63, %p64
      %p66 = scmp.ne.s32.totalorder %s58, %s61
      %p67 = scmp.eq.s32.totalorder %s22, 0
      %p68 = por %p66, %p67
      %p69 = scmp.ne.s32.totalorder %s58, %s61
      %p70 = scmp.eq.s32.totalorder %s27, 1
      %p71 = por %p69, %p70
      %p72 = scmp.ne.s32.totalorder %s61, %s62
      %p73 = scmp.eq.s32.totalorder %s27, 0
      %p74 = por %p72, %p73
      %p75 = scmp.ne.s32.totalorder %s61, %s62
      %p76 = scmp.eq.s32.totalorder %s28, 1
      %p77 = por %p75, %p76
      %p79 = scmp.ne.s32.totalorder %s62, %s78
      %p80 = scmp.eq.s32.totalorder %s28, 0
      %p81 = por %p79, %p80
      %s83 = sadd.s32 %s82, 1
      %p86 = scmp.eq.s32.totalorder %s22, 1
      %p87 = scmp.ne.s32.totalorder %s82, %s84
      %p88 = scmp.eq.s32.totalorder %s22, 0
      %p89 = por %p87, %p88
      %p90 = scmp.ne.s32.totalorder %s82, %s84
      %p91 = scmp.eq.s32.totalorder %s27, 1
      %p92 = por %p90, %p91
      %p93 = scmp.ne.s32.totalorder %s84, %s85
      %p94 = scmp.eq.s32.totalorder %s27, 0
      %p95 = por %p93, %p94
      %p96 = scmp.ne.s32.totalorder %s84, %s85
      %p97 = scmp.eq.s32.totalorder %s28, 1
      %p98 = por %p96, %p97
      %p100 = scmp.ne.s32.totalorder %s85, %s99
      %p101 = scmp.eq.s32.totalorder %s28, 0
      %p102 = por %p100, %p101
      %s104 = sadd.s32 %s103, 1
      %p107 = scmp.eq.s32.totalorder %s22, 1
      %p108 = scmp.ne.s32.totalorder %s103, %s105
      %p109 = scmp.eq.s32.totalorder %s22, 0
      %p110 = por %p108, %p109
      %p111 = scmp.ne.s32.totalorder %s103, %s105
      %p112 = scmp.eq.s32.totalorder %s27, 1
      %p113 = por %p111, %p112
      %p114 = scmp.ne.s32.totalorder %s105, %s106
      %p115 = scmp.eq.s32.totalorder %s27, 0
      %p116 = por %p114, %p115
      %p117 = scmp.ne.s32.totalorder %s105, %s106
      %p118 = scmp.eq.s32.totalorder %s28, 1
      %p119 = por %p117, %p118
      %p121 = scmp.ne.s32.totalorder %s106, %s120
      %p122 = scmp.eq.s32.totalorder %s28, 0
      %p123 = por %p121, %p122
      %s125 = sadd.s32 %s124, 1
      %p128 = scmp.eq.s32.totalorder %s22, 1
      %p129 = scmp.ne.s32.totalorder %s124, %s126
      %p130 = scmp.eq.s32.totalorder %s22, 0
      %p131 = por %p129, %p130
      %p132 = scmp.ne.s32.totalorder %s124, %s126
      %p133 = scmp.eq.s32.totalorder %s27, 1
      %p134 = por %p132, %p133
      %p135 = scmp.ne.s32.totalorder %s126, %s127
      %p136 = scmp.eq.s32.totalorder %s27, 0
      %p137 = por %p135, %p136
      %p138 = scmp.ne.s32.totalorder %s126, %s127
      %p139 = scmp.eq.s32.totalorder %s28, 1
      %p140 = por %p138, %p139
      %p142 = scmp.ne.s32.totalorder %s127, %s141
      %p143 = scmp.eq.s32.totalorder %s28, 0
      %p144 = por %p142, %p143
      %s146 = sadd.s32 %s145, 1
      %p149 = scmp.eq.s32.totalorder %s22, 1
      %p150 = scmp.ne.s32.totalorder %s145, %s147
      %p151 = scmp.eq.s32.totalorder %s22, 0
      %p152 = por %p150, %p151
      %p153 = scmp.ne.s32.totalorder %s145, %s147
      %p154 = scmp.eq.s32.totalorder %s27, 1
      %p155 = por %p153, %p154
      %p156 = scmp.ne.s32.totalorder %s147, %s148
      %p157 = scmp.eq.s32.totalorder %s27, 0
      %p158 = por %p156, %p157
      %p159 = scmp.ne.s32.totalorder %s147, %s148
      %p160 = scmp.eq.s32.totalorder %s28, 1
      %p161 = por %p159, %p160
      %p163 = scmp.ne.s32.totalorder %s148, %s162
      %p164 = scmp.eq.s32.totalorder %s28, 0
      %p165 = por %p163, %p164
      %s167 = sadd.s32 %s166, 1
      %p170 = scmp.eq.s32.totalorder %s22, 1
      %p171 = scmp.ne.s32.totalorder %s166, %s168
      %p172 = scmp.eq.s32.totalorder %s22, 0
      %p173 = por %p171, %p172
      %p174 = scmp.ne.s32.totalorder %s166, %s168
      %p175 = scmp.eq.s32.totalorder %s27, 1
      %p176 = por %p174, %p175
      %p177 = scmp.ne.s32.totalorder %s168, %s169
      %p178 = scmp.eq.s32.totalorder %s27, 0
      %p179 = por %p177, %p178
      %p180 = scmp.ne.s32.totalorder %s168, %s169
      %p181 = scmp.eq.s32.totalorder %s28, 1
      %p182 = por %p180, %p181
      %p184 = scmp.ne.s32.totalorder %s169, %s183
      %p185 = scmp.eq.s32.totalorder %s28, 0
      %p186 = por %p184, %p185
      %s187 = ssub.s32 %s22, %s29
      %p188 = scmp.eq.s32.totalorder %s187, 0
      %s190 = sadd.s32 %s189, 1
      %s191 = scalar_select %p188, %s189, %s190
      %p194 = pneg %p188
      %p195 = scmp.eq.s32.totalorder %s22, 1
      %p196 = por %p194, %p195
      %p197 = scmp.ne.s32.totalorder %s189, %s192
      %p198 = scmp.eq.s32.totalorder %s22, 0
      %p199 = por %p197, %p198
      %p200 = scmp.ne.s32.totalorder %s189, %s192
      %p201 = scmp.eq.s32.totalorder %s27, 1
      %p202 = por %p200, %p201
      %p203 = scmp.ne.s32.totalorder %s192, %s193
      %p204 = scmp.eq.s32.totalorder %s27, 0
      %p205 = por %p203, %p204
      %p206 = scmp.ne.s32.totalorder %s192, %s193
      %p207 = scmp.eq.s32.totalorder %s28, 1
      %p208 = por %p206, %p207
      %p210 = scmp.ne.s32.totalorder %s193, %s209
      %p211 = scmp.eq.s32.totalorder %s28, 0
      %p212 = por %p210, %p211
      %p213 = scmp.le.s32.totalorder 1, %s22
      %p214 = scmp.lt.s32.totalorder %s22, 3
      %p215 = pnand %p213, %p214
      %p216 = pneg %p215
      // Predicated region
      $region9: #{tpu_custom_call.1} parent=5 // pred_check
        _
      $region10: #{tpu_custom_call.1} parent=5 // pred_check_branch
        %218 = sbr.rel (%p215) target = $region12
      $region11: #{tpu_custom_call.1} parent=5 // pred_region
        %s219 = ssub.s32 %s22, 1
        // Predicated region
        $region13: #{tpu_custom_call.1} parent=11 // pred_check
          %p220 = pneg %p95
        $region14: #{tpu_custom_call.1} parent=11 // pred_check_branch
          %222 = sbr.rel (%p220) target = $region16
        $region15: #{tpu_custom_call.1} parent=11 // pred_region
          _
        $region16: #{tpu_custom_call.1} parent=11 // pred_fallthru
          _
        // Predicated region
        $region17: #{tpu_custom_call.1} parent=11 // pred_check
          %p223 = pneg %p116
        $region18: #{tpu_custom_call.1} parent=11 // pred_check_branch
          %225 = sbr.rel (%p223) target = $region20
        $region19: #{tpu_custom_call.1} parent=11 // pred_region
          _
        $region20: #{tpu_custom_call.1} parent=11 // pred_fallthru
          _
        // Predicated region
        $region21: #{tpu_custom_call.1} parent=11 // pred_check
          %p226 = pneg %p137
        $region22: #{tpu_custom_call.1} parent=11 // pred_check_branch
          %228 = sbr.rel (%p226) target = $region24
        $region23: #{tpu_custom_call.1} parent=11 // pred_region
          _
        $region24: #{tpu_custom_call.1} parent=11 // pred_fallthru
          _
        // Predicated region
        $region25: #{tpu_custom_call.1} parent=11 // pred_check
          %p229 = pneg %p158
        $region26: #{tpu_custom_call.1} parent=11 // pred_check_branch
          %231 = sbr.rel (%p229) target = $region28
        $region27: #{tpu_custom_call.1} parent=11 // pred_region
          _
        $region28: #{tpu_custom_call.1} parent=11 // pred_fallthru
          _
        // Predicated region
        $region29: #{tpu_custom_call.1} parent=11 // pred_check
          %p232 = pneg %p179
        $region30: #{tpu_custom_call.1} parent=11 // pred_check_branch
          %234 = sbr.rel (%p232) target = $region32
        $region31: #{tpu_custom_call.1} parent=11 // pred_region
          _
        $region32: #{tpu_custom_call.1} parent=11 // pred_fallthru
          _
      $region12: #{tpu_custom_call.1} parent=5 // pred_fallthru
        _
      %p235 = scmp.lt.s32.totalorder %s22, 2
      // Predicated region
      $region33: #{tpu_custom_call.1} parent=5 // pred_check
        %p236 = pneg %p235
      $region34: #{tpu_custom_call.1} parent=5 // pred_check_branch
        %238 = sbr.rel (%p236) target = $region36
      $region35: #{tpu_custom_call.1} parent=5 // pred_region
        // Predicated region
        $region37: #{tpu_custom_call.1} parent=35 // pred_check
          %p239 = pneg %p42
        $region38: #{tpu_custom_call.1} parent=35 // pred_check_branch
          %241 = sbr.rel (%p239) target = $region40
        $region39: #{tpu_custom_call.1} parent=35 // pred_region
          %s242 = sand.u32 %s32, 1
          %s243 = scalar_lea.sflag [#allocation3], %s242
          %s244 = sand.u32 %s32, 1
          %s245 = smul.addr %s244, 16
          %s246 = scalar_lea.vmem [#allocation2], %s245
          %s248 = ssub.s32 256, 256
          %249 = vsyncadd %s243, %s248
          %s250 = smul.addr %s22, 128
          %s251 = scalar_lea.hbm %s0, %s250
          %s252 = sshll.u32 %s246, 4
          %s253 = int_to_ptr.vmem [resolvable:$true] %s252
          %258 = dma.hbm_to_vmem [thread:$0]  %s251, 256, %s253, %s243, 256, 128, 8
        $region40: #{tpu_custom_call.1} parent=35 // pred_fallthru
          _
        // Predicated region
        $region41: #{tpu_custom_call.1} parent=35 // pred_check
          %p259 = pneg %p68
        $region42: #{tpu_custom_call.1} parent=35 // pred_check_branch
          %261 = sbr.rel (%p259) target = $region44
        $region43: #{tpu_custom_call.1} parent=35 // pred_region
          %s262 = sand.u32 %s58, 1
          %s263 = scalar_lea.sflag [#allocation6], %s262
          %s264 = sand.u32 %s58, 1
          %s265 = smul.addr %s264, 8
          %s266 = scalar_lea.vmem [#allocation5], %s265
          %s268 = ssub.s32 128, 128
          %269 = vsyncadd %s263, %s268
          %s270 = smul.addr %s22, 128
          %s271 = scalar_lea.hbm %s1, %s270
          %s273 = sshll.u32 %s266, 4
          %s274 = int_to_ptr.vmem [resolvable:$true] %s273
          %276 = dma.hbm_to_vmem [thread:$0]  %s271, 128, %s274, %s263
        $region44: #{tpu_custom_call.1} parent=35 // pred_fallthru
          _
      $region36: #{tpu_custom_call.1} parent=5 // pred_fallthru
        _
      %p277 = scmp.le.s32.totalorder 1, %s22
      %p278 = scmp.lt.s32.totalorder %s22, 3
      %p279 = pnand %p277, %p278
      %p280 = pneg %p279
      // Predicated region
      $region45: #{tpu_custom_call.1} parent=5 // pred_check
        _
      $region46: #{tpu_custom_call.1} parent=5 // pred_check_branch
        %282 = sbr.rel (%p279) target = $region48
      $region47: #{tpu_custom_call.1} parent=5 // pred_region
        %s283 = ssub.s32 %s22, 1
        %s284 = sand.u32 %s35, 1
        %s285 = scalar_lea.sflag [#allocation3], %s284
        %s286 = sand.u32 %s35, 1
        %s287 = smul.addr %s286, 16
        %s288 = scalar_lea.vmem [#allocation2], %s287
        // Predicated region
        $region49: #{tpu_custom_call.1} parent=47 // pred_check
          %p289 = pneg %p48
        $region50: #{tpu_custom_call.1} parent=47 // pred_check_branch
          %291 = sbr.rel (%p289) target = $region52
        $region51: #{tpu_custom_call.1} parent=47 // pred_region
          %292 = dma.done %s285, 256
        $region52: #{tpu_custom_call.1} parent=47 // pred_fallthru
          _
        %s293 = sand.u32 %s61, 1
        %s294 = scalar_lea.sflag [#allocation6], %s293
        %s295 = sand.u32 %s61, 1
        %s296 = smul.addr %s295, 8
        %s297 = scalar_lea.vmem [#allocation5], %s296
        // Predicated region
        $region53: #{tpu_custom_call.1} parent=47 // pred_check
          %p298 = pneg %p74
        $region54: #{tpu_custom_call.1} parent=47 // pred_check_branch
          %300 = sbr.rel (%p298) target = $region56
        $region55: #{tpu_custom_call.1} parent=47 // pred_region
          %301 = dma.done %s294, 128
        $region56: #{tpu_custom_call.1} parent=47 // pred_fallthru
          _
        %s302 = sand.u32 %s35, 1
        %s303 = scalar_lea.sflag [#allocation3], %s302
        %s304 = sand.u32 %s35, 1
        %s305 = smul.addr %s304, 16
        %s306 = scalar_lea.vmem [#allocation2], %s305
        %p307 = pneg %p48
        %p308 = pneg %p45
        %s309 = sand.u32 %s61, 1
        %s310 = scalar_lea.sflag [#allocation6], %s309
        %s311 = sand.u32 %s61, 1
        %s312 = smul.addr %s311, 8
        %s313 = scalar_lea.vmem [#allocation5], %s312
        %p314 = pneg %p74
        %p315 = pneg %p71
        %p316 = pneg %p95
        %p317 = pneg %p92
        %p318 = pneg %p116
        %p319 = pneg %p113
        %p320 = pneg %p137
        %p321 = pneg %p134
        %p322 = pneg %p158
        %p323 = pneg %p155
        %p324 = pneg %p179
        %p325 = pneg %p176
        %p326 = pneg %p205
        %p327 = pneg %p202
        %s328 = sand.u32 %s192, 1
        %s329 = scalar_lea.sflag [#allocation4], %s328
        %s330 = sand.u32 %s192, 1
        %s331 = smul.addr %s330, 256
        %s332 = scalar_lea.vmem [#allocation7], %s331
        %v334 = vlaneseq
        %v335 = vshrl.u32 %v334, 7
        %v336 = vadd.s32 %v335, 8
        %v337 = vadd.s32 %v335, 16
        %v338 = vadd.s32 %v335, 24
        %v339 = vadd.s32 %v335, 32
        %v340 = vadd.s32 %v335, 40
        %v341 = vadd.s32 %v335, 48
        %v342 = vadd.s32 %v335, 56
        %v343 = vadd.s32 %v335, 64
        %v344 = vadd.s32 %v335, 72
        %v345 = vadd.s32 %v335, 80
        %v346 = vadd.s32 %v335, 88
        %v347 = vadd.s32 %v335, 96
        %v348 = vadd.s32 %v335, 104
        %v349 = vadd.s32 %v335, 112
        %v350 = vadd.s32 %v335, 120
        %v351 = vadd.s32 %v335, 1
        %v352 = vadd.s32 %v336, 1
        %v353 = vadd.s32 %v337, 1
        %v354 = vadd.s32 %v338, 1
        %v355 = vadd.s32 %v339, 1
        %v356 = vadd.s32 %v340, 1
        %v357 = vadd.s32 %v341, 1
        %v358 = vadd.s32 %v342, 1
        %v359 = vadd.s32 %v343, 1
        %v360 = vadd.s32 %v344, 1
        %v361 = vadd.s32 %v345, 1
        %v362 = vadd.s32 %v346, 1
        %v363 = vadd.s32 %v347, 1
        %v364 = vadd.s32 %v348, 1
        %v365 = vadd.s32 %v349, 1
        %v366 = vadd.s32 %v350, 1
        %v367 = vld [vmem:[%s288] sm:$0x1]
        %v368 = vlaneseq
        %v369 = vshrl.u32 %v368, 7
        %v370 = vsub.s32 0, %v369
        %v371 = vrot.slane %v367, %v370
        %vm372 = vcmp.eq.s32.totalorder %v371, %v351
        %vm373 = vcmp.eq.s32.totalorder %v371, %v352
        %vm374 = vcmp.eq.s32.totalorder %v371, %v353
        %vm375 = vcmp.eq.s32.totalorder %v371, %v354
        %vm376 = vcmp.eq.s32.totalorder %v371, %v355
        %vm377 = vcmp.eq.s32.totalorder %v371, %v356
        %vm378 = vcmp.eq.s32.totalorder %v371, %v357
        %vm379 = vcmp.eq.s32.totalorder %v371, %v358
        %vm380 = vcmp.eq.s32.totalorder %v371, %v359
        %vm381 = vcmp.eq.s32.totalorder %v371, %v360
        %vm382 = vcmp.eq.s32.totalorder %v371, %v361
        %vm383 = vcmp.eq.s32.totalorder %v371, %v362
        %vm384 = vcmp.eq.s32.totalorder %v371, %v363
        %vm385 = vcmp.eq.s32.totalorder %v371, %v364
        %vm386 = vcmp.eq.s32.totalorder %v371, %v365
        %vm387 = vcmp.eq.s32.totalorder %v371, %v366
        %v388 = vsel %vm372, 1, 0
        %v389 = vsel %vm373, 1, 0
        %v390 = vsel %vm374, 1, 0
        %v391 = vsel %vm375, 1, 0
        %v392 = vsel %vm376, 1, 0
        %v393 = vsel %vm377, 1, 0
        %v394 = vsel %vm378, 1, 0
        %v395 = vsel %vm379, 1, 0
        %v396 = vsel %vm380, 1, 0
        %v397 = vsel %vm381, 1, 0
        %v398 = vsel %vm382, 1, 0
        %v399 = vsel %vm383, 1, 0
        %v400 = vsel %vm384, 1, 0
        %v401 = vsel %vm385, 1, 0
        %v402 = vsel %vm386, 1, 0
        %v403 = vsel %vm387, 1, 0
        %v404 = vcvt.s32.f32 %v388
        %v405 = vcvt.s32.f32 %v389
        %v406 = vcvt.s32.f32 %v390
        %v407 = vcvt.s32.f32 %v391
        %v408 = vcvt.s32.f32 %v392
        %v409 = vcvt.s32.f32 %v393
        %v410 = vcvt.s32.f32 %v394
        %v411 = vcvt.s32.f32 %v395
        %v412 = vcvt.s32.f32 %v396
        %v413 = vcvt.s32.f32 %v397
        %v414 = vcvt.s32.f32 %v398
        %v415 = vcvt.s32.f32 %v399
        %v416 = vcvt.s32.f32 %v400
        %v417 = vcvt.s32.f32 %v401
        %v418 = vcvt.s32.f32 %v402
        %v419 = vcvt.s32.f32 %v403
        %v420 = vpack.c.bf16 %v405, %v404
        %v421 = vpack.c.bf16 %v407, %v406
        %v422 = vpack.c.bf16 %v409, %v408
        %v423 = vpack.c.bf16 %v411, %v410
        %v424 = vpack.c.bf16 %v413, %v412
        %v425 = vpack.c.bf16 %v415, %v414
        %v426 = vpack.c.bf16 %v417, %v416
        %v427 = vpack.c.bf16 %v419, %v418
        %v428 = vadd.bf16 %v420, 0
        %v429 = vadd.bf16 %v421, 0
        %v430 = vadd.bf16 %v422, 0
        %v431 = vadd.bf16 %v423, 0
        %v432 = vadd.bf16 %v424, 0
        %v433 = vadd.bf16 %v425, 0
        %v434 = vadd.bf16 %v426, 0
        %v435 = vadd.bf16 %v427, 0
        %v436 = vld [vmem:[%s288 + $0x1] sm:$0x1]
        %v437 = vlaneseq
        %v438 = vshrl.u32 %v437, 7
        %v439 = vsub.s32 0, %v438
        %v440 = vrot.slane %v436, %v439
        %vm441 = vcmp.eq.s32.totalorder %v440, %v351
        %vm442 = vcmp.eq.s32.totalorder %v440, %v352
        %vm443 = vcmp.eq.s32.totalorder %v440, %v353
        %vm444 = vcmp.eq.s32.totalorder %v440, %v354
        %vm445 = vcmp.eq.s32.totalorder %v440, %v355
        %vm446 = vcmp.eq.s32.totalorder %v440, %v356
        %vm447 = vcmp.eq.s32.totalorder %v440, %v357
        %vm448 = vcmp.eq.s32.totalorder %v440, %v358
        %vm449 = vcmp.eq.s32.totalorder %v440, %v359
        %vm450 = vcmp.eq.s32.totalorder %v440, %v360
        %vm451 = vcmp.eq.s32.totalorder %v440, %v361
        %vm452 = vcmp.eq.s32.totalorder %v440, %v362
        %vm453 = vcmp.eq.s32.totalorder %v440, %v363
        %vm454 = vcmp.eq.s32.totalorder %v440, %v364
        %vm455 = vcmp.eq.s32.totalorder %v440, %v365
        %vm456 = vcmp.eq.s32.totalorder %v440, %v366
        %v457 = vsel %vm441, 1, 0
        %v458 = vsel %vm442, 1, 0
        %v459 = vsel %vm443, 1, 0
        %v460 = vsel %vm444, 1, 0
        %v461 = vsel %vm445, 1, 0
        %v462 = vsel %vm446, 1, 0
        %v463 = vsel %vm447, 1, 0
        %v464 = vsel %vm448, 1, 0
        %v465 = vsel %vm449, 1, 0
        %v466 = vsel %vm450, 1, 0
        %v467 = vsel %vm451, 1, 0
        %v468 = vsel %vm452, 1, 0
        %v469 = vsel %vm453, 1, 0
        %v470 = vsel %vm454, 1, 0
        %v471 = vsel %vm455, 1, 0
        %v472 = vsel %vm456, 1, 0
        %v473 = vcvt.s32.f32 %v457
        %v474 = vcvt.s32.f32 %v458
        %v475 = vcvt.s32.f32 %v459
        %v476 = vcvt.s32.f32 %v460
        %v477 = vcvt.s32.f32 %v461
        %v478 = vcvt.s32.f32 %v462
        %v479 = vcvt.s32.f32 %v463
        %v480 = vcvt.s32.f32 %v464
        %v481 = vcvt.s32.f32 %v465
        %v482 = vcvt.s32.f32 %v466
        %v483 = vcvt.s32.f32 %v467
        %v484 = vcvt.s32.f32 %v468
        %v485 = vcvt.s32.f32 %v469
        %v486 = vcvt.s32.f32 %v470
        %v487 = vcvt.s32.f32 %v471
        %v488 = vcvt.s32.f32 %v472
        %v489 = vpack.c.bf16 %v474, %v473
        %v490 = vpack.c.bf16 %v476, %v475
        %v491 = vpack.c.bf16 %v478, %v477
        %v492 = vpack.c.bf16 %v480, %v479
        %v493 = vpack.c.bf16 %v482, %v481
        %v494 = vpack.c.bf16 %v484, %v483
        %v495 = vpack.c.bf16 %v486, %v485
        %v496 = vpack.c.bf16 %v488, %v487
        %v497 = vadd.bf16 %v428, %v489
        %v498 = vadd.bf16 %v429, %v490
        %v499 = vadd.bf16 %v430, %v491
        %v500 = vadd.bf16 %v431, %v492
        %v501 = vadd.bf16 %v432, %v493
        %v502 = vadd.bf16 %v433, %v494
        %v503 = vadd.bf16 %v434, %v495
        %v504 = vadd.bf16 %v435, %v496
        %v505 = vld [vmem:[%s288 + $0x2] sm:$0x1]
        %v506 = vlaneseq
        %v507 = vshrl.u32 %v506, 7
        %v508 = vsub.s32 0, %v507
        %v509 = vrot.slane %v505, %v508
        %vm510 = vcmp.eq.s32.totalorder %v509, %v351
        %vm511 = vcmp.eq.s32.totalorder %v509, %v352
        %vm512 = vcmp.eq.s32.totalorder %v509, %v353
        %vm513 = vcmp.eq.s32.totalorder %v509, %v354
        %vm514 = vcmp.eq.s32.totalorder %v509, %v355
        %vm515 = vcmp.eq.s32.totalorder %v509, %v356
        %vm516 = vcmp.eq.s32.totalorder %v509, %v357
        %vm517 = vcmp.eq.s32.totalorder %v509, %v358
        %vm518 = vcmp.eq.s32.totalorder %v509, %v359
        %vm519 = vcmp.eq.s32.totalorder %v509, %v360
        %vm520 = vcmp.eq.s32.totalorder %v509, %v361
        %vm521 = vcmp.eq.s32.totalorder %v509, %v362
        %vm522 = vcmp.eq.s32.totalorder %v509, %v363
        %vm523 = vcmp.eq.s32.totalorder %v509, %v364
        %vm524 = vcmp.eq.s32.totalorder %v509, %v365
        %vm525 = vcmp.eq.s32.totalorder %v509, %v366
        %v526 = vsel %vm510, 1, 0
        %v527 = vsel %vm511, 1, 0
        %v528 = vsel %vm512, 1, 0
        %v529 = vsel %vm513, 1, 0
        %v530 = vsel %vm514, 1, 0
        %v531 = vsel %vm515, 1, 0
        %v532 = vsel %vm516, 1, 0
        %v533 = vsel %vm517, 1, 0
        %v534 = vsel %vm518, 1, 0
        %v535 = vsel %vm519, 1, 0
        %v536 = vsel %vm520, 1, 0
        %v537 = vsel %vm521, 1, 0
        %v538 = vsel %vm522, 1, 0
        %v539 = vsel %vm523, 1, 0
        %v540 = vsel %vm524, 1, 0
        %v541 = vsel %vm525, 1, 0
        %v542 = vcvt.s32.f32 %v526
        %v543 = vcvt.s32.f32 %v527
        %v544 = vcvt.s32.f32 %v528
        %v545 = vcvt.s32.f32 %v529
        %v546 = vcvt.s32.f32 %v530
        %v547 = vcvt.s32.f32 %v531
        %v548 = vcvt.s32.f32 %v532
        %v549 = vcvt.s32.f32 %v533
        %v550 = vcvt.s32.f32 %v534
        %v551 = vcvt.s32.f32 %v535
        %v552 = vcvt.s32.f32 %v536
        %v553 = vcvt.s32.f32 %v537
        %v554 = vcvt.s32.f32 %v538
        %v555 = vcvt.s32.f32 %v539
        %v556 = vcvt.s32.f32 %v540
        %v557 = vcvt.s32.f32 %v541
        %v558 = vpack.c.bf16 %v543, %v542
        %v559 = vpack.c.bf16 %v545, %v544
        %v560 = vpack.c.bf16 %v547, %v546
        %v561 = vpack.c.bf16 %v549, %v548
        %v562 = vpack.c.bf16 %v551, %v550
        %v563 = vpack.c.bf16 %v553, %v552
        %v564 = vpack.c.bf16 %v555, %v554
        %v565 = vpack.c.bf16 %v557, %v556
        %v566 = vadd.bf16 %v497, %v558
        %v567 = vadd.bf16 %v498, %v559
        %v568 = vadd.bf16 %v499, %v560
        %v569 = vadd.bf16 %v500, %v561
        %v570 = vadd.bf16 %v501, %v562
        %v571 = vadd.bf16 %v502, %v563
        %v572 = vadd.bf16 %v503, %v564
        %v573 = vadd.bf16 %v504, %v565
        %v574 = vld [vmem:[%s288 + $0x3] sm:$0x1]
        %v575 = vlaneseq
        %v576 = vshrl.u32 %v575, 7
        %v577 = vsub.s32 0, %v576
        %v578 = vrot.slane %v574, %v577
        %vm579 = vcmp.eq.s32.totalorder %v578, %v351
        %vm580 = vcmp.eq.s32.totalorder %v578, %v352
        %vm581 = vcmp.eq.s32.totalorder %v578, %v353
        %vm582 = vcmp.eq.s32.totalorder %v578, %v354
        %vm583 = vcmp.eq.s32.totalorder %v578, %v355
        %vm584 = vcmp.eq.s32.totalorder %v578, %v356
        %vm585 = vcmp.eq.s32.totalorder %v578, %v357
        %vm586 = vcmp.eq.s32.totalorder %v578, %v358
        %vm587 = vcmp.eq.s32.totalorder %v578, %v359
        %vm588 = vcmp.eq.s32.totalorder %v578, %v360
        %vm589 = vcmp.eq.s32.totalorder %v578, %v361
        %vm590 = vcmp.eq.s32.totalorder %v578, %v362
        %vm591 = vcmp.eq.s32.totalorder %v578, %v363
        %vm592 = vcmp.eq.s32.totalorder %v578, %v364
        %vm593 = vcmp.eq.s32.totalorder %v578, %v365
        %vm594 = vcmp.eq.s32.totalorder %v578, %v366
        %v595 = vsel %vm579, 1, 0
        %v596 = vsel %vm580, 1, 0
        %v597 = vsel %vm581, 1, 0
        %v598 = vsel %vm582, 1, 0
        %v599 = vsel %vm583, 1, 0
        %v600 = vsel %vm584, 1, 0
        %v601 = vsel %vm585, 1, 0
        %v602 = vsel %vm586, 1, 0
        %v603 = vsel %vm587, 1, 0
        %v604 = vsel %vm588, 1, 0
        %v605 = vsel %vm589, 1, 0
        %v606 = vsel %vm590, 1, 0
        %v607 = vsel %vm591, 1, 0
        %v608 = vsel %vm592, 1, 0
        %v609 = vsel %vm593, 1, 0
        %v610 = vsel %vm594, 1, 0
        %v611 = vcvt.s32.f32 %v595
        %v612 = vcvt.s32.f32 %v596
        %v613 = vcvt.s32.f32 %v597
        %v614 = vcvt.s32.f32 %v598
        %v615 = vcvt.s32.f32 %v599
        %v616 = vcvt.s32.f32 %v600
        %v617 = vcvt.s32.f32 %v601
        %v618 = vcvt.s32.f32 %v602
        %v619 = vcvt.s32.f32 %v603
        %v620 = vcvt.s32.f32 %v604
        %v621 = vcvt.s32.f32 %v605
        %v622 = vcvt.s32.f32 %v606
        %v623 = vcvt.s32.f32 %v607
        %v624 = vcvt.s32.f32 %v608
        %v625 = vcvt.s32.f32 %v609
        %v626 = vcvt.s32.f32 %v610
        %v627 = vpack.c.bf16 %v612, %v611
        %v628 = vpack.c.bf16 %v614, %v613
        %v629 = vpack.c.bf16 %v616, %v615
        %v630 = vpack.c.bf16 %v618, %v617
        %v631 = vpack.c.bf16 %v620, %v619
        %v632 = vpack.c.bf16 %v622, %v621
        %v633 = vpack.c.bf16 %v624, %v623
        %v634 = vpack.c.bf16 %v626, %v625
        %v635 = vadd.bf16 %v566, %v627
        %v636 = vadd.bf16 %v567, %v628
        %v637 = vadd.bf16 %v568, %v629
        %v638 = vadd.bf16 %v569, %v630
        %v639 = vadd.bf16 %v570, %v631
        %v640 = vadd.bf16 %v571, %v632
        %v641 = vadd.bf16 %v572, %v633
        %v642 = vadd.bf16 %v573, %v634
        %v643 = vld [vmem:[%s288 + $0x4] sm:$0x1]
        %v644 = vlaneseq
        %v645 = vshrl.u32 %v644, 7
        %v646 = vsub.s32 0, %v645
        %v647 = vrot.slane %v643, %v646
        %vm648 = vcmp.eq.s32.totalorder %v647, %v351
        %vm649 = vcmp.eq.s32.totalorder %v647, %v352
        %vm650 = vcmp.eq.s32.totalorder %v647, %v353
        %vm651 = vcmp.eq.s32.totalorder %v647, %v354
        %vm652 = vcmp.eq.s32.totalorder %v647, %v355
        %vm653 = vcmp.eq.s32.totalorder %v647, %v356
        %vm654 = vcmp.eq.s32.totalorder %v647, %v357
        %vm655 = vcmp.eq.s32.totalorder %v647, %v358
        %vm656 = vcmp.eq.s32.totalorder %v647, %v359
        %vm657 = vcmp.eq.s32.totalorder %v647, %v360
        %vm658 = vcmp.eq.s32.totalorder %v647, %v361
        %vm659 = vcmp.eq.s32.totalorder %v647, %v362
        %vm660 = vcmp.eq.s32.totalorder %v647, %v363
        %vm661 = vcmp.eq.s32.totalorder %v647, %v364
        %vm662 = vcmp.eq.s32.totalorder %v647, %v365
        %vm663 = vcmp.eq.s32.totalorder %v647, %v366
        %v664 = vsel %vm648, 1, 0
        %v665 = vsel %vm649, 1, 0
        %v666 = vsel %vm650, 1, 0
        %v667 = vsel %vm651, 1, 0
        %v668 = vsel %vm652, 1, 0
        %v669 = vsel %vm653, 1, 0
        %v670 = vsel %vm654, 1, 0
        %v671 = vsel %vm655, 1, 0
        %v672 = vsel %vm656, 1, 0
        %v673 = vsel %vm657, 1, 0
        %v674 = vsel %vm658, 1, 0
        %v675 = vsel %vm659, 1, 0
        %v676 = vsel %vm660, 1, 0
        %v677 = vsel %vm661, 1, 0
        %v678 = vsel %vm662, 1, 0
        %v679 = vsel %vm663, 1, 0
        %v680 = vcvt.s32.f32 %v664
        %v681 = vcvt.s32.f32 %v665
        %v682 = vcvt.s32.f32 %v666
        %v683 = vcvt.s32.f32 %v667
        %v684 = vcvt.s32.f32 %v668
        %v685 = vcvt.s32.f32 %v669
        %v686 = vcvt.s32.f32 %v670
        %v687 = vcvt.s32.f32 %v671
        %v688 = vcvt.s32.f32 %v672
        %v689 = vcvt.s32.f32 %v673
        %v690 = vcvt.s32.f32 %v674
        %v691 = vcvt.s32.f32 %v675
        %v692 = vcvt.s32.f32 %v676
        %v693 = vcvt.s32.f32 %v677
        %v694 = vcvt.s32.f32 %v678
        %v695 = vcvt.s32.f32 %v679
        %v696 = vpack.c.bf16 %v681, %v680
        %v697 = vpack.c.bf16 %v683, %v682
        %v698 = vpack.c.bf16 %v685, %v684
        %v699 = vpack.c.bf16 %v687, %v686
        %v700 = vpack.c.bf16 %v689, %v688
        %v701 = vpack.c.bf16 %v691, %v690
        %v702 = vpack.c.bf16 %v693, %v692
        %v703 = vpack.c.bf16 %v695, %v694
        %v704 = vadd.bf16 %v635, %v696
        %v705 = vadd.bf16 %v636, %v697
        %v706 = vadd.bf16 %v637, %v698
        %v707 = vadd.bf16 %v638, %v699
        %v708 = vadd.bf16 %v639, %v700
        %v709 = vadd.bf16 %v640, %v701
        %v710 = vadd.bf16 %v641, %v702
        %v711 = vadd.bf16 %v642, %v703
        %v712 = vld [vmem:[%s288 + $0x5] sm:$0x1]
        %v713 = vlaneseq
        %v714 = vshrl.u32 %v713, 7
        %v715 = vsub.s32 0, %v714
        %v716 = vrot.slane %v712, %v715
        %vm717 = vcmp.eq.s32.totalorder %v716, %v351
        %vm718 = vcmp.eq.s32.totalorder %v716, %v352
        %vm719 = vcmp.eq.s32.totalorder %v716, %v353
        %vm720 = vcmp.eq.s32.totalorder %v716, %v354
        %vm721 = vcmp.eq.s32.totalorder %v716, %v355
        %vm722 = vcmp.eq.s32.totalorder %v716, %v356
        %vm723 = vcmp.eq.s32.totalorder %v716, %v357
        %vm724 = vcmp.eq.s32.totalorder %v716, %v358
        %vm725 = vcmp.eq.s32.totalorder %v716, %v359
        %vm726 = vcmp.eq.s32.totalorder %v716, %v360
        %vm727 = vcmp.eq.s32.totalorder %v716, %v361
        %vm728 = vcmp.eq.s32.totalorder %v716, %v362
        %vm729 = vcmp.eq.s32.totalorder %v716, %v363
        %vm730 = vcmp.eq.s32.totalorder %v716, %v364
        %vm731 = vcmp.eq.s32.totalorder %v716, %v365
        %vm732 = vcmp.eq.s32.totalorder %v716, %v366
        %v733 = vsel %vm717, 1, 0
        %v734 = vsel %vm718, 1, 0
        %v735 = vsel %vm719, 1, 0
        %v736 = vsel %vm720, 1, 0
        %v737 = vsel %vm721, 1, 0
        %v738 = vsel %vm722, 1, 0
        %v739 = vsel %vm723, 1, 0
        %v740 = vsel %vm724, 1, 0
        %v741 = vsel %vm725, 1, 0
        %v742 = vsel %vm726, 1, 0
        %v743 = vsel %vm727, 1, 0
        %v744 = vsel %vm728, 1, 0
        %v745 = vsel %vm729, 1, 0
        %v746 = vsel %vm730, 1, 0
        %v747 = vsel %vm731, 1, 0
        %v748 = vsel %vm732, 1, 0
        %v749 = vcvt.s32.f32 %v733
        %v750 = vcvt.s32.f32 %v734
        %v751 = vcvt.s32.f32 %v735
        %v752 = vcvt.s32.f32 %v736
        %v753 = vcvt.s32.f32 %v737
        %v754 = vcvt.s32.f32 %v738
        %v755 = vcvt.s32.f32 %v739
        %v756 = vcvt.s32.f32 %v740
        %v757 = vcvt.s32.f32 %v741
        %v758 = vcvt.s32.f32 %v742
        %v759 = vcvt.s32.f32 %v743
        %v760 = vcvt.s32.f32 %v744
        %v761 = vcvt.s32.f32 %v745
        %v762 = vcvt.s32.f32 %v746
        %v763 = vcvt.s32.f32 %v747
        %v764 = vcvt.s32.f32 %v748
        %v765 = vpack.c.bf16 %v750, %v749
        %v766 = vpack.c.bf16 %v752, %v751
        %v767 = vpack.c.bf16 %v754, %v753
        %v768 = vpack.c.bf16 %v756, %v755
        %v769 = vpack.c.bf16 %v758, %v757
        %v770 = vpack.c.bf16 %v760, %v759
        %v771 = vpack.c.bf16 %v762, %v761
        %v772 = vpack.c.bf16 %v764, %v763
        %v773 = vadd.bf16 %v704, %v765
        %v774 = vadd.bf16 %v705, %v766
        %v775 = vadd.bf16 %v706, %v767
        %v776 = vadd.bf16 %v707, %v768
        %v777 = vadd.bf16 %v708, %v769
        %v778 = vadd.bf16 %v709, %v770
        %v779 = vadd.bf16 %v710, %v771
        %v780 = vadd.bf16 %v711, %v772
        %v781 = vld [vmem:[%s288 + $0x6] sm:$0x1]
        %v782 = vlaneseq
        %v783 = vshrl.u32 %v782, 7
        %v784 = vsub.s32 0, %v783
        %v785 = vrot.slane %v781, %v784
        %vm786 = vcmp.eq.s32.totalorder %v785, %v351
        %vm787 = vcmp.eq.s32.totalorder %v785, %v352
        %vm788 = vcmp.eq.s32.totalorder %v785, %v353
        %vm789 = vcmp.eq.s32.totalorder %v785, %v354
        %vm790 = vcmp.eq.s32.totalorder %v785, %v355
        %vm791 = vcmp.eq.s32.totalorder %v785, %v356
        %vm792 = vcmp.eq.s32.totalorder %v785, %v357
        %vm793 = vcmp.eq.s32.totalorder %v785, %v358
        %vm794 = vcmp.eq.s32.totalorder %v785, %v359
        %vm795 = vcmp.eq.s32.totalorder %v785, %v360
        %vm796 = vcmp.eq.s32.totalorder %v785, %v361
        %vm797 = vcmp.eq.s32.totalorder %v785, %v362
        %vm798 = vcmp.eq.s32.totalorder %v785, %v363
        %vm799 = vcmp.eq.s32.totalorder %v785, %v364
        %vm800 = vcmp.eq.s32.totalorder %v785, %v365
        %vm801 = vcmp.eq.s32.totalorder %v785, %v366
        %v802 = vsel %vm786, 1, 0
        %v803 = vsel %vm787, 1, 0
        %v804 = vsel %vm788, 1, 0
        %v805 = vsel %vm789, 1, 0
        %v806 = vsel %vm790, 1, 0
        %v807 = vsel %vm791, 1, 0
        %v808 = vsel %vm792, 1, 0
        %v809 = vsel %vm793, 1, 0
        %v810 = vsel %vm794, 1, 0
        %v811 = vsel %vm795, 1, 0
        %v812 = vsel %vm796, 1, 0
        %v813 = vsel %vm797, 1, 0
        %v814 = vsel %vm798, 1, 0
        %v815 = vsel %vm799, 1, 0
        %v816 = vsel %vm800, 1, 0
        %v817 = vsel %vm801, 1, 0
        %v818 = vcvt.s32.f32 %v802
        %v819 = vcvt.s32.f32 %v803
        %v820 = vcvt.s32.f32 %v804
        %v821 = vcvt.s32.f32 %v805
        %v822 = vcvt.s32.f32 %v806
        %v823 = vcvt.s32.f32 %v807
        %v824 = vcvt.s32.f32 %v808
        %v825 = vcvt.s32.f32 %v809
        %v826 = vcvt.s32.f32 %v810
        %v827 = vcvt.s32.f32 %v811
        %v828 = vcvt.s32.f32 %v812
        %v829 = vcvt.s32.f32 %v813
        %v830 = vcvt.s32.f32 %v814
        %v831 = vcvt.s32.f32 %v815
        %v832 = vcvt.s32.f32 %v816
        %v833 = vcvt.s32.f32 %v817
        %v834 = vpack.c.bf16 %v819, %v818
        %v835 = vpack.c.bf16 %v821, %v820
        %v836 = vpack.c.bf16 %v823, %v822
        %v837 = vpack.c.bf16 %v825, %v824
        %v838 = vpack.c.bf16 %v827, %v826
        %v839 = vpack.c.bf16 %v829, %v828
        %v840 = vpack.c.bf16 %v831, %v830
        %v841 = vpack.c.bf16 %v833, %v832
        %v842 = vadd.bf16 %v773, %v834
        %v843 = vadd.bf16 %v774, %v835
        %v844 = vadd.bf16 %v775, %v836
        %v845 = vadd.bf16 %v776, %v837
        %v846 = vadd.bf16 %v777, %v838
        %v847 = vadd.bf16 %v778, %v839
        %v848 = vadd.bf16 %v779, %v840
        %v849 = vadd.bf16 %v780, %v841
        %v850 = vld [vmem:[%s288 + $0x7] sm:$0x1]
        %v851 = vlaneseq
        %v852 = vshrl.u32 %v851, 7
        %v853 = vsub.s32 0, %v852
        %v854 = vrot.slane %v850, %v853
        %vm855 = vcmp.eq.s32.totalorder %v854, %v351
        %vm856 = vcmp.eq.s32.totalorder %v854, %v352
        %vm857 = vcmp.eq.s32.totalorder %v854, %v353
        %vm858 = vcmp.eq.s32.totalorder %v854, %v354
        %vm859 = vcmp.eq.s32.totalorder %v854, %v355
        %vm860 = vcmp.eq.s32.totalorder %v854, %v356
        %vm861 = vcmp.eq.s32.totalorder %v854, %v357
        %vm862 = vcmp.eq.s32.totalorder %v854, %v358
        %vm863 = vcmp.eq.s32.totalorder %v854, %v359
        %vm864 = vcmp.eq.s32.totalorder %v854, %v360
        %vm865 = vcmp.eq.s32.totalorder %v854, %v361
        %vm866 = vcmp.eq.s32.totalorder %v854, %v362
        %vm867 = vcmp.eq.s32.totalorder %v854, %v363
        %vm868 = vcmp.eq.s32.totalorder %v854, %v364
        %vm869 = vcmp.eq.s32.totalorder %v854, %v365
        %vm870 = vcmp.eq.s32.totalorder %v854, %v366
        %v871 = vsel %vm855, 1, 0
        %v872 = vsel %vm856, 1, 0
        %v873 = vsel %vm857, 1, 0
        %v874 = vsel %vm858, 1, 0
        %v875 = vsel %vm859, 1, 0
        %v876 = vsel %vm860, 1, 0
        %v877 = vsel %vm861, 1, 0
        %v878 = vsel %vm862, 1, 0
        %v879 = vsel %vm863, 1, 0
        %v880 = vsel %vm864, 1, 0
        %v881 = vsel %vm865, 1, 0
        %v882 = vsel %vm866, 1, 0
        %v883 = vsel %vm867, 1, 0
        %v884 = vsel %vm868, 1, 0
        %v885 = vsel %vm869, 1, 0
        %v886 = vsel %vm870, 1, 0
        %v887 = vcvt.s32.f32 %v871
        %v888 = vcvt.s32.f32 %v872
        %v889 = vcvt.s32.f32 %v873
        %v890 = vcvt.s32.f32 %v874
        %v891 = vcvt.s32.f32 %v875
        %v892 = vcvt.s32.f32 %v876
        %v893 = vcvt.s32.f32 %v877
        %v894 = vcvt.s32.f32 %v878
        %v895 = vcvt.s32.f32 %v879
        %v896 = vcvt.s32.f32 %v880
        %v897 = vcvt.s32.f32 %v881
        %v898 = vcvt.s32.f32 %v882
        %v899 = vcvt.s32.f32 %v883
        %v900 = vcvt.s32.f32 %v884
        %v901 = vcvt.s32.f32 %v885
        %v902 = vcvt.s32.f32 %v886
        %v903 = vpack.c.bf16 %v888, %v887
        %v904 = vpack.c.bf16 %v890, %v889
        %v905 = vpack.c.bf16 %v892, %v891
        %v906 = vpack.c.bf16 %v894, %v893
        %v907 = vpack.c.bf16 %v896, %v895
        %v908 = vpack.c.bf16 %v898, %v897
        %v909 = vpack.c.bf16 %v900, %v899
        %v910 = vpack.c.bf16 %v902, %v901
        %v911 = vadd.bf16 %v842, %v903
        %v912 = vadd.bf16 %v843, %v904
        %v913 = vadd.bf16 %v844, %v905
        %v914 = vadd.bf16 %v845, %v906
        %v915 = vadd.bf16 %v846, %v907
        %v916 = vadd.bf16 %v847, %v908
        %v917 = vadd.bf16 %v848, %v909
        %v918 = vadd.bf16 %v849, %v910
        %v919 = vld [vmem:[%s288 + $0x8] sm:$0x1]
        %v920 = vlaneseq
        %v921 = vshrl.u32 %v920, 7
        %v922 = vsub.s32 0, %v921
        %v923 = vrot.slane %v919, %v922
        %vm924 = vcmp.eq.s32.totalorder %v923, %v351
        %vm925 = vcmp.eq.s32.totalorder %v923, %v352
        %vm926 = vcmp.eq.s32.totalorder %v923, %v353
        %vm927 = vcmp.eq.s32.totalorder %v923, %v354
        %vm928 = vcmp.eq.s32.totalorder %v923, %v355
        %vm929 = vcmp.eq.s32.totalorder %v923, %v356
        %vm930 = vcmp.eq.s32.totalorder %v923, %v357
        %vm931 = vcmp.eq.s32.totalorder %v923, %v358
        %vm932 = vcmp.eq.s32.totalorder %v923, %v359
        %vm933 = vcmp.eq.s32.totalorder %v923, %v360
        %vm934 = vcmp.eq.s32.totalorder %v923, %v361
        %vm935 = vcmp.eq.s32.totalorder %v923, %v362
        %vm936 = vcmp.eq.s32.totalorder %v923, %v363
        %vm937 = vcmp.eq.s32.totalorder %v923, %v364
        %vm938 = vcmp.eq.s32.totalorder %v923, %v365
        %vm939 = vcmp.eq.s32.totalorder %v923, %v366
        %v940 = vsel %vm924, 1, 0
        %v941 = vsel %vm925, 1, 0
        %v942 = vsel %vm926, 1, 0
        %v943 = vsel %vm927, 1, 0
        %v944 = vsel %vm928, 1, 0
        %v945 = vsel %vm929, 1, 0
        %v946 = vsel %vm930, 1, 0
        %v947 = vsel %vm931, 1, 0
        %v948 = vsel %vm932, 1, 0
        %v949 = vsel %vm933, 1, 0
        %v950 = vsel %vm934, 1, 0
        %v951 = vsel %vm935, 1, 0
        %v952 = vsel %vm936, 1, 0
        %v953 = vsel %vm937, 1, 0
        %v954 = vsel %vm938, 1, 0
        %v955 = vsel %vm939, 1, 0
        %v956 = vcvt.s32.f32 %v940
        %v957 = vcvt.s32.f32 %v941
        %v958 = vcvt.s32.f32 %v942
        %v959 = vcvt.s32.f32 %v943
        %v960 = vcvt.s32.f32 %v944
        %v961 = vcvt.s32.f32 %v945
        %v962 = vcvt.s32.f32 %v946
        %v963 = vcvt.s32.f32 %v947
        %v964 = vcvt.s32.f32 %v948
        %v965 = vcvt.s32.f32 %v949
        %v966 = vcvt.s32.f32 %v950
        %v967 = vcvt.s32.f32 %v951
        %v968 = vcvt.s32.f32 %v952
        %v969 = vcvt.s32.f32 %v953
        %v970 = vcvt.s32.f32 %v954
        %v971 = vcvt.s32.f32 %v955
        %v972 = vpack.c.bf16 %v957, %v956
        %v973 = vpack.c.bf16 %v959, %v958
        %v974 = vpack.c.bf16 %v961, %v960
        %v975 = vpack.c.bf16 %v963, %v962
        %v976 = vpack.c.bf16 %v965, %v964
        %v977 = vpack.c.bf16 %v967, %v966
        %v978 = vpack.c.bf16 %v969, %v968
        %v979 = vpack.c.bf16 %v971, %v970
        %v980 = vadd.bf16 %v911, %v972
        %v981 = vadd.bf16 %v912, %v973
        %v982 = vadd.bf16 %v913, %v974
        %v983 = vadd.bf16 %v914, %v975
        %v984 = vadd.bf16 %v915, %v976
        %v985 = vadd.bf16 %v916, %v977
        %v986 = vadd.bf16 %v917, %v978
        %v987 = vadd.bf16 %v918, %v979
        %v988 = vld [vmem:[%s288 + $0x9] sm:$0x1]
        %v989 = vlaneseq
        %v990 = vshrl.u32 %v989, 7
        %v991 = vsub.s32 0, %v990
        %v992 = vrot.slane %v988, %v991
        %vm993 = vcmp.eq.s32.totalorder %v992, %v351
        %vm994 = vcmp.eq.s32.totalorder %v992, %v352
        %vm995 = vcmp.eq.s32.totalorder %v992, %v353
        %vm996 = vcmp.eq.s32.totalorder %v992, %v354
        %vm997 = vcmp.eq.s32.totalorder %v992, %v355
        %vm998 = vcmp.eq.s32.totalorder %v992, %v356
        %vm999 = vcmp.eq.s32.totalorder %v992, %v357
        %vm1000 = vcmp.eq.s32.totalorder %v992, %v358
        %vm1001 = vcmp.eq.s32.totalorder %v992, %v359
        %vm1002 = vcmp.eq.s32.totalorder %v992, %v360
        %vm1003 = vcmp.eq.s32.totalorder %v992, %v361
        %vm1004 = vcmp.eq.s32.totalorder %v992, %v362
        %vm1005 = vcmp.eq.s32.totalorder %v992, %v363
        %vm1006 = vcmp.eq.s32.totalorder %v992, %v364
        %vm1007 = vcmp.eq.s32.totalorder %v992, %v365
        %vm1008 = vcmp.eq.s32.totalorder %v992, %v366
        %v1009 = vsel %vm993, 1, 0
        %v1010 = vsel %vm994, 1, 0
        %v1011 = vsel %vm995, 1, 0
        %v1012 = vsel %vm996, 1, 0
        %v1013 = vsel %vm997, 1, 0
        %v1014 = vsel %vm998, 1, 0
        %v1015 = vsel %vm999, 1, 0
        %v1016 = vsel %vm1000, 1, 0
        %v1017 = vsel %vm1001, 1, 0
        %v1018 = vsel %vm1002, 1, 0
        %v1019 = vsel %vm1003, 1, 0
        %v1020 = vsel %vm1004, 1, 0
        %v1021 = vsel %vm1005, 1, 0
        %v1022 = vsel %vm1006, 1, 0
        %v1023 = vsel %vm1007, 1, 0
        %v1024 = vsel %vm1008, 1, 0
        %v1025 = vcvt.s32.f32 %v1009
        %v1026 = vcvt.s32.f32 %v1010
        %v1027 = vcvt.s32.f32 %v1011
        %v1028 = vcvt.s32.f32 %v1012
        %v1029 = vcvt.s32.f32 %v1013
        %v1030 = vcvt.s32.f32 %v1014
        %v1031 = vcvt.s32.f32 %v1015
        %v1032 = vcvt.s32.f32 %v1016
        %v1033 = vcvt.s32.f32 %v1017
        %v1034 = vcvt.s32.f32 %v1018
        %v1035 = vcvt.s32.f32 %v1019
        %v1036 = vcvt.s32.f32 %v1020
        %v1037 = vcvt.s32.f32 %v1021
        %v1038 = vcvt.s32.f32 %v1022
        %v1039 = vcvt.s32.f32 %v1023
        %v1040 = vcvt.s32.f32 %v1024
        %v1041 = vpack.c.bf16 %v1026, %v1025
        %v1042 = vpack.c.bf16 %v1028, %v1027
        %v1043 = vpack.c.bf16 %v1030, %v1029
        %v1044 = vpack.c.bf16 %v1032, %v1031
        %v1045 = vpack.c.bf16 %v1034, %v1033
        %v1046 = vpack.c.bf16 %v1036, %v1035
        %v1047 = vpack.c.bf16 %v1038, %v1037
        %v1048 = vpack.c.bf16 %v1040, %v1039
        %v1049 = vadd.bf16 %v980, %v1041
        %v1050 = vadd.bf16 %v981, %v1042
        %v1051 = vadd.bf16 %v982, %v1043
        %v1052 = vadd.bf16 %v983, %v1044
        %v1053 = vadd.bf16 %v984, %v1045
        %v1054 = vadd.bf16 %v985, %v1046
        %v1055 = vadd.bf16 %v986, %v1047
        %v1056 = vadd.bf16 %v987, %v1048
        %v1057 = vld [vmem:[%s288 + $0xa] sm:$0x1]
        %v1058 = vlaneseq
        %v1059 = vshrl.u32 %v1058, 7
        %v1060 = vsub.s32 0, %v1059
        %v1061 = vrot.slane %v1057, %v1060
        %vm1062 = vcmp.eq.s32.totalorder %v1061, %v351
        %vm1063 = vcmp.eq.s32.totalorder %v1061, %v352
        %vm1064 = vcmp.eq.s32.totalorder %v1061, %v353
        %vm1065 = vcmp.eq.s32.totalorder %v1061, %v354
        %vm1066 = vcmp.eq.s32.totalorder %v1061, %v355
        %vm1067 = vcmp.eq.s32.totalorder %v1061, %v356
        %vm1068 = vcmp.eq.s32.totalorder %v1061, %v357
        %vm1069 = vcmp.eq.s32.totalorder %v1061, %v358
        %vm1070 = vcmp.eq.s32.totalorder %v1061, %v359
        %vm1071 = vcmp.eq.s32.totalorder %v1061, %v360
        %vm1072 = vcmp.eq.s32.totalorder %v1061, %v361
        %vm1073 = vcmp.eq.s32.totalorder %v1061, %v362
        %vm1074 = vcmp.eq.s32.totalorder %v1061, %v363
        %vm1075 = vcmp.eq.s32.totalorder %v1061, %v364
        %vm1076 = vcmp.eq.s32.totalorder %v1061, %v365
        %vm1077 = vcmp.eq.s32.totalorder %v1061, %v366
        %v1078 = vsel %vm1062, 1, 0
        %v1079 = vsel %vm1063, 1, 0
        %v1080 = vsel %vm1064, 1, 0
        %v1081 = vsel %vm1065, 1, 0
        %v1082 = vsel %vm1066, 1, 0
        %v1083 = vsel %vm1067, 1, 0
        %v1084 = vsel %vm1068, 1, 0
        %v1085 = vsel %vm1069, 1, 0
        %v1086 = vsel %vm1070, 1, 0
        %v1087 = vsel %vm1071, 1, 0
        %v1088 = vsel %vm1072, 1, 0
        %v1089 = vsel %vm1073, 1, 0
        %v1090 = vsel %vm1074, 1, 0
        %v1091 = vsel %vm1075, 1, 0
        %v1092 = vsel %vm1076, 1, 0
        %v1093 = vsel %vm1077, 1, 0
        %v1094 = vcvt.s32.f32 %v1078
        %v1095 = vcvt.s32.f32 %v1079
        %v1096 = vcvt.s32.f32 %v1080
        %v1097 = vcvt.s32.f32 %v1081
        %v1098 = vcvt.s32.f32 %v1082
        %v1099 = vcvt.s32.f32 %v1083
        %v1100 = vcvt.s32.f32 %v1084
        %v1101 = vcvt.s32.f32 %v1085
        %v1102 = vcvt.s32.f32 %v1086
        %v1103 = vcvt.s32.f32 %v1087
        %v1104 = vcvt.s32.f32 %v1088
        %v1105 = vcvt.s32.f32 %v1089
        %v1106 = vcvt.s32.f32 %v1090
        %v1107 = vcvt.s32.f32 %v1091
        %v1108 = vcvt.s32.f32 %v1092
        %v1109 = vcvt.s32.f32 %v1093
        %v1110 = vpack.c.bf16 %v1095, %v1094
        %v1111 = vpack.c.bf16 %v1097, %v1096
        %v1112 = vpack.c.bf16 %v1099, %v1098
        %v1113 = vpack.c.bf16 %v1101, %v1100
        %v1114 = vpack.c.bf16 %v1103, %v1102
        %v1115 = vpack.c.bf16 %v1105, %v1104
        %v1116 = vpack.c.bf16 %v1107, %v1106
        %v1117 = vpack.c.bf16 %v1109, %v1108
        %v1118 = vadd.bf16 %v1049, %v1110
        %v1119 = vadd.bf16 %v1050, %v1111
        %v1120 = vadd.bf16 %v1051, %v1112
        %v1121 = vadd.bf16 %v1052, %v1113
        %v1122 = vadd.bf16 %v1053, %v1114
        %v1123 = vadd.bf16 %v1054, %v1115
        %v1124 = vadd.bf16 %v1055, %v1116
        %v1125 = vadd.bf16 %v1056, %v1117
        %v1126 = vld [vmem:[%s288 + $0xb] sm:$0x1]
        %v1127 = vlaneseq
        %v1128 = vshrl.u32 %v1127, 7
        %v1129 = vsub.s32 0, %v1128
        %v1130 = vrot.slane %v1126, %v1129
        %vm1131 = vcmp.eq.s32.totalorder %v1130, %v351
        %vm1132 = vcmp.eq.s32.totalorder %v1130, %v352
        %vm1133 = vcmp.eq.s32.totalorder %v1130, %v353
        %vm1134 = vcmp.eq.s32.totalorder %v1130, %v354
        %vm1135 = vcmp.eq.s32.totalorder %v1130, %v355
        %vm1136 = vcmp.eq.s32.totalorder %v1130, %v356
        %vm1137 = vcmp.eq.s32.totalorder %v1130, %v357
        %vm1138 = vcmp.eq.s32.totalorder %v1130, %v358
        %vm1139 = vcmp.eq.s32.totalorder %v1130, %v359
        %vm1140 = vcmp.eq.s32.totalorder %v1130, %v360
        %vm1141 = vcmp.eq.s32.totalorder %v1130, %v361
        %vm1142 = vcmp.eq.s32.totalorder %v1130, %v362
        %vm1143 = vcmp.eq.s32.totalorder %v1130, %v363
        %vm1144 = vcmp.eq.s32.totalorder %v1130, %v364
        %vm1145 = vcmp.eq.s32.totalorder %v1130, %v365
        %vm1146 = vcmp.eq.s32.totalorder %v1130, %v366
        %v1147 = vsel %vm1131, 1, 0
        %v1148 = vsel %vm1132, 1, 0
        %v1149 = vsel %vm1133, 1, 0
        %v1150 = vsel %vm1134, 1, 0
        %v1151 = vsel %vm1135, 1, 0
        %v1152 = vsel %vm1136, 1, 0
        %v1153 = vsel %vm1137, 1, 0
        %v1154 = vsel %vm1138, 1, 0
        %v1155 = vsel %vm1139, 1, 0
        %v1156 = vsel %vm1140, 1, 0
        %v1157 = vsel %vm1141, 1, 0
        %v1158 = vsel %vm1142, 1, 0
        %v1159 = vsel %vm1143, 1, 0
        %v1160 = vsel %vm1144, 1, 0
        %v1161 = vsel %vm1145, 1, 0
        %v1162 = vsel %vm1146, 1, 0
        %v1163 = vcvt.s32.f32 %v1147
        %v1164 = vcvt.s32.f32 %v1148
        %v1165 = vcvt.s32.f32 %v1149
        %v1166 = vcvt.s32.f32 %v1150
        %v1167 = vcvt.s32.f32 %v1151
        %v1168 = vcvt.s32.f32 %v1152
        %v1169 = vcvt.s32.f32 %v1153
        %v1170 = vcvt.s32.f32 %v1154
        %v1171 = vcvt.s32.f32 %v1155
        %v1172 = vcvt.s32.f32 %v1156
        %v1173 = vcvt.s32.f32 %v1157
        %v1174 = vcvt.s32.f32 %v1158
        %v1175 = vcvt.s32.f32 %v1159
        %v1176 = vcvt.s32.f32 %v1160
        %v1177 = vcvt.s32.f32 %v1161
        %v1178 = vcvt.s32.f32 %v1162
        %v1179 = vpack.c.bf16 %v1164, %v1163
        %v1180 = vpack.c.bf16 %v1166, %v1165
        %v1181 = vpack.c.bf16 %v1168, %v1167
        %v1182 = vpack.c.bf16 %v1170, %v1169
        %v1183 = vpack.c.bf16 %v1172, %v1171
        %v1184 = vpack.c.bf16 %v1174, %v1173
        %v1185 = vpack.c.bf16 %v1176, %v1175
        %v1186 = vpack.c.bf16 %v1178, %v1177
        %v1187 = vadd.bf16 %v1118, %v1179
        %v1188 = vadd.bf16 %v1119, %v1180
        %v1189 = vadd.bf16 %v1120, %v1181
        %v1190 = vadd.bf16 %v1121, %v1182
        %v1191 = vadd.bf16 %v1122, %v1183
        %v1192 = vadd.bf16 %v1123, %v1184
        %v1193 = vadd.bf16 %v1124, %v1185
        %v1194 = vadd.bf16 %v1125, %v1186
        %v1195 = vld [vmem:[%s288 + $0xc] sm:$0x1]
        %v1196 = vlaneseq
        %v1197 = vshrl.u32 %v1196, 7
        %v1198 = vsub.s32 0, %v1197
        %v1199 = vrot.slane %v1195, %v1198
        %vm1200 = vcmp.eq.s32.totalorder %v1199, %v351
        %vm1201 = vcmp.eq.s32.totalorder %v1199, %v352
        %vm1202 = vcmp.eq.s32.totalorder %v1199, %v353
        %vm1203 = vcmp.eq.s32.totalorder %v1199, %v354
        %vm1204 = vcmp.eq.s32.totalorder %v1199, %v355
        %vm1205 = vcmp.eq.s32.totalorder %v1199, %v356
        %vm1206 = vcmp.eq.s32.totalorder %v1199, %v357
        %vm1207 = vcmp.eq.s32.totalorder %v1199, %v358
        %vm1208 = vcmp.eq.s32.totalorder %v1199, %v359
        %vm1209 = vcmp.eq.s32.totalorder %v1199, %v360
        %vm1210 = vcmp.eq.s32.totalorder %v1199, %v361
        %vm1211 = vcmp.eq.s32.totalorder %v1199, %v362
        %vm1212 = vcmp.eq.s32.totalorder %v1199, %v363
        %vm1213 = vcmp.eq.s32.totalorder %v1199, %v364
        %vm1214 = vcmp.eq.s32.totalorder %v1199, %v365
        %vm1215 = vcmp.eq.s32.totalorder %v1199, %v366
        %v1216 = vsel %vm1200, 1, 0
        %v1217 = vsel %vm1201, 1, 0
        %v1218 = vsel %vm1202, 1, 0
        %v1219 = vsel %vm1203, 1, 0
        %v1220 = vsel %vm1204, 1, 0
        %v1221 = vsel %vm1205, 1, 0
        %v1222 = vsel %vm1206, 1, 0
        %v1223 = vsel %vm1207, 1, 0
        %v1224 = vsel %vm1208, 1, 0
        %v1225 = vsel %vm1209, 1, 0
        %v1226 = vsel %vm1210, 1, 0
        %v1227 = vsel %vm1211, 1, 0
        %v1228 = vsel %vm1212, 1, 0
        %v1229 = vsel %vm1213, 1, 0
        %v1230 = vsel %vm1214, 1, 0
        %v1231 = vsel %vm1215, 1, 0
        %v1232 = vcvt.s32.f32 %v1216
        %v1233 = vcvt.s32.f32 %v1217
        %v1234 = vcvt.s32.f32 %v1218
        %v1235 = vcvt.s32.f32 %v1219
        %v1236 = vcvt.s32.f32 %v1220
        %v1237 = vcvt.s32.f32 %v1221
        %v1238 = vcvt.s32.f32 %v1222
        %v1239 = vcvt.s32.f32 %v1223
        %v1240 = vcvt.s32.f32 %v1224
        %v1241 = vcvt.s32.f32 %v1225
        %v1242 = vcvt.s32.f32 %v1226
        %v1243 = vcvt.s32.f32 %v1227
        %v1244 = vcvt.s32.f32 %v1228
        %v1245 = vcvt.s32.f32 %v1229
        %v1246 = vcvt.s32.f32 %v1230
        %v1247 = vcvt.s32.f32 %v1231
        %v1248 = vpack.c.bf16 %v1233, %v1232
        %v1249 = vpack.c.bf16 %v1235, %v1234
        %v1250 = vpack.c.bf16 %v1237, %v1236
        %v1251 = vpack.c.bf16 %v1239, %v1238
        %v1252 = vpack.c.bf16 %v1241, %v1240
        %v1253 = vpack.c.bf16 %v1243, %v1242
        %v1254 = vpack.c.bf16 %v1245, %v1244
        %v1255 = vpack.c.bf16 %v1247, %v1246
        %v1256 = vadd.bf16 %v1187, %v1248
        %v1257 = vadd.bf16 %v1188, %v1249
        %v1258 = vadd.bf16 %v1189, %v1250
        %v1259 = vadd.bf16 %v1190, %v1251
        %v1260 = vadd.bf16 %v1191, %v1252
        %v1261 = vadd.bf16 %v1192, %v1253
        %v1262 = vadd.bf16 %v1193, %v1254
        %v1263 = vadd.bf16 %v1194, %v1255
        %v1264 = vld [vmem:[%s288 + $0xd] sm:$0x1]
        %v1265 = vlaneseq
        %v1266 = vshrl.u32 %v1265, 7
        %v1267 = vsub.s32 0, %v1266
        %v1268 = vrot.slane %v1264, %v1267
        %vm1269 = vcmp.eq.s32.totalorder %v1268, %v351
        %vm1270 = vcmp.eq.s32.totalorder %v1268, %v352
        %vm1271 = vcmp.eq.s32.totalorder %v1268, %v353
        %vm1272 = vcmp.eq.s32.totalorder %v1268, %v354
        %vm1273 = vcmp.eq.s32.totalorder %v1268, %v355
        %vm1274 = vcmp.eq.s32.totalorder %v1268, %v356
        %vm1275 = vcmp.eq.s32.totalorder %v1268, %v357
        %vm1276 = vcmp.eq.s32.totalorder %v1268, %v358
        %vm1277 = vcmp.eq.s32.totalorder %v1268, %v359
        %vm1278 = vcmp.eq.s32.totalorder %v1268, %v360
        %vm1279 = vcmp.eq.s32.totalorder %v1268, %v361
        %vm1280 = vcmp.eq.s32.totalorder %v1268, %v362
        %vm1281 = vcmp.eq.s32.totalorder %v1268, %v363
        %vm1282 = vcmp.eq.s32.totalorder %v1268, %v364
        %vm1283 = vcmp.eq.s32.totalorder %v1268, %v365
        %vm1284 = vcmp.eq.s32.totalorder %v1268, %v366
        %v1285 = vsel %vm1269, 1, 0
        %v1286 = vsel %vm1270, 1, 0
        %v1287 = vsel %vm1271, 1, 0
        %v1288 = vsel %vm1272, 1, 0
        %v1289 = vsel %vm1273, 1, 0
        %v1290 = vsel %vm1274, 1, 0
        %v1291 = vsel %vm1275, 1, 0
        %v1292 = vsel %vm1276, 1, 0
        %v1293 = vsel %vm1277, 1, 0
        %v1294 = vsel %vm1278, 1, 0
        %v1295 = vsel %vm1279, 1, 0
        %v1296 = vsel %vm1280, 1, 0
        %v1297 = vsel %vm1281, 1, 0
        %v1298 = vsel %vm1282, 1, 0
        %v1299 = vsel %vm1283, 1, 0
        %v1300 = vsel %vm1284, 1, 0
        %v1301 = vcvt.s32.f32 %v1285
        %v1302 = vcvt.s32.f32 %v1286
        %v1303 = vcvt.s32.f32 %v1287
        %v1304 = vcvt.s32.f32 %v1288
        %v1305 = vcvt.s32.f32 %v1289
        %v1306 = vcvt.s32.f32 %v1290
        %v1307 = vcvt.s32.f32 %v1291
        %v1308 = vcvt.s32.f32 %v1292
        %v1309 = vcvt.s32.f32 %v1293
        %v1310 = vcvt.s32.f32 %v1294
        %v1311 = vcvt.s32.f32 %v1295
        %v1312 = vcvt.s32.f32 %v1296
        %v1313 = vcvt.s32.f32 %v1297
        %v1314 = vcvt.s32.f32 %v1298
        %v1315 = vcvt.s32.f32 %v1299
        %v1316 = vcvt.s32.f32 %v1300
        %v1317 = vpack.c.bf16 %v1302, %v1301
        %v1318 = vpack.c.bf16 %v1304, %v1303
        %v1319 = vpack.c.bf16 %v1306, %v1305
        %v1320 = vpack.c.bf16 %v1308, %v1307
        %v1321 = vpack.c.bf16 %v1310, %v1309
        %v1322 = vpack.c.bf16 %v1312, %v1311
        %v1323 = vpack.c.bf16 %v1314, %v1313
        %v1324 = vpack.c.bf16 %v1316, %v1315
        %v1325 = vadd.bf16 %v1256, %v1317
        %v1326 = vadd.bf16 %v1257, %v1318
        %v1327 = vadd.bf16 %v1258, %v1319
        %v1328 = vadd.bf16 %v1259, %v1320
        %v1329 = vadd.bf16 %v1260, %v1321
        %v1330 = vadd.bf16 %v1261, %v1322
        %v1331 = vadd.bf16 %v1262, %v1323
        %v1332 = vadd.bf16 %v1263, %v1324
        %v1333 = vld [vmem:[%s288 + $0xe] sm:$0x1]
        %v1334 = vlaneseq
        %v1335 = vshrl.u32 %v1334, 7
        %v1336 = vsub.s32 0, %v1335
        %v1337 = vrot.slane %v1333, %v1336
        %vm1338 = vcmp.eq.s32.totalorder %v1337, %v351
        %vm1339 = vcmp.eq.s32.totalorder %v1337, %v352
        %vm1340 = vcmp.eq.s32.totalorder %v1337, %v353
        %vm1341 = vcmp.eq.s32.totalorder %v1337, %v354
        %vm1342 = vcmp.eq.s32.totalorder %v1337, %v355
        %vm1343 = vcmp.eq.s32.totalorder %v1337, %v356
        %vm1344 = vcmp.eq.s32.totalorder %v1337, %v357
        %vm1345 = vcmp.eq.s32.totalorder %v1337, %v358
        %vm1346 = vcmp.eq.s32.totalorder %v1337, %v359
        %vm1347 = vcmp.eq.s32.totalorder %v1337, %v360
        %vm1348 = vcmp.eq.s32.totalorder %v1337, %v361
        %vm1349 = vcmp.eq.s32.totalorder %v1337, %v362
        %vm1350 = vcmp.eq.s32.totalorder %v1337, %v363
        %vm1351 = vcmp.eq.s32.totalorder %v1337, %v364
        %vm1352 = vcmp.eq.s32.totalorder %v1337, %v365
        %vm1353 = vcmp.eq.s32.totalorder %v1337, %v366
        %v1354 = vsel %vm1338, 1, 0
        %v1355 = vsel %vm1339, 1, 0
        %v1356 = vsel %vm1340, 1, 0
        %v1357 = vsel %vm1341, 1, 0
        %v1358 = vsel %vm1342, 1, 0
        %v1359 = vsel %vm1343, 1, 0
        %v1360 = vsel %vm1344, 1, 0
        %v1361 = vsel %vm1345, 1, 0
        %v1362 = vsel %vm1346, 1, 0
        %v1363 = vsel %vm1347, 1, 0
        %v1364 = vsel %vm1348, 1, 0
        %v1365 = vsel %vm1349, 1, 0
        %v1366 = vsel %vm1350, 1, 0
        %v1367 = vsel %vm1351, 1, 0
        %v1368 = vsel %vm1352, 1, 0
        %v1369 = vsel %vm1353, 1, 0
        %v1370 = vcvt.s32.f32 %v1354
        %v1371 = vcvt.s32.f32 %v1355
        %v1372 = vcvt.s32.f32 %v1356
        %v1373 = vcvt.s32.f32 %v1357
        %v1374 = vcvt.s32.f32 %v1358
        %v1375 = vcvt.s32.f32 %v1359
        %v1376 = vcvt.s32.f32 %v1360
        %v1377 = vcvt.s32.f32 %v1361
        %v1378 = vcvt.s32.f32 %v1362
        %v1379 = vcvt.s32.f32 %v1363
        %v1380 = vcvt.s32.f32 %v1364
        %v1381 = vcvt.s32.f32 %v1365
        %v1382 = vcvt.s32.f32 %v1366
        %v1383 = vcvt.s32.f32 %v1367
        %v1384 = vcvt.s32.f32 %v1368
        %v1385 = vcvt.s32.f32 %v1369
        %v1386 = vpack.c.bf16 %v1371, %v1370
        %v1387 = vpack.c.bf16 %v1373, %v1372
        %v1388 = vpack.c.bf16 %v1375, %v1374
        %v1389 = vpack.c.bf16 %v1377, %v1376
        %v1390 = vpack.c.bf16 %v1379, %v1378
        %v1391 = vpack.c.bf16 %v1381, %v1380
        %v1392 = vpack.c.bf16 %v1383, %v1382
        %v1393 = vpack.c.bf16 %v1385, %v1384
        %v1394 = vadd.bf16 %v1325, %v1386
        %v1395 = vadd.bf16 %v1326, %v1387
        %v1396 = vadd.bf16 %v1327, %v1388
        %v1397 = vadd.bf16 %v1328, %v1389
        %v1398 = vadd.bf16 %v1329, %v1390
        %v1399 = vadd.bf16 %v1330, %v1391
        %v1400 = vadd.bf16 %v1331, %v1392
        %v1401 = vadd.bf16 %v1332, %v1393
        %v1402 = vld [vmem:[%s288 + $0xf] sm:$0x1]
        %v1403 = vlaneseq
        %v1404 = vshrl.u32 %v1403, 7
        %v1405 = vsub.s32 0, %v1404
        %v1406 = vrot.slane %v1402, %v1405
        %vm1407 = vcmp.eq.s32.totalorder %v1406, %v351
        %vm1408 = vcmp.eq.s32.totalorder %v1406, %v352
        %vm1409 = vcmp.eq.s32.totalorder %v1406, %v353
        %vm1410 = vcmp.eq.s32.totalorder %v1406, %v354
        %vm1411 = vcmp.eq.s32.totalorder %v1406, %v355
        %vm1412 = vcmp.eq.s32.totalorder %v1406, %v356
        %vm1413 = vcmp.eq.s32.totalorder %v1406, %v357
        %vm1414 = vcmp.eq.s32.totalorder %v1406, %v358
        %vm1415 = vcmp.eq.s32.totalorder %v1406, %v359
        %vm1416 = vcmp.eq.s32.totalorder %v1406, %v360
        %vm1417 = vcmp.eq.s32.totalorder %v1406, %v361
        %vm1418 = vcmp.eq.s32.totalorder %v1406, %v362
        %vm1419 = vcmp.eq.s32.totalorder %v1406, %v363
        %vm1420 = vcmp.eq.s32.totalorder %v1406, %v364
        %vm1421 = vcmp.eq.s32.totalorder %v1406, %v365
        %vm1422 = vcmp.eq.s32.totalorder %v1406, %v366
        %v1423 = vsel %vm1407, 1, 0
        %v1424 = vsel %vm1408, 1, 0
        %v1425 = vsel %vm1409, 1, 0
        %v1426 = vsel %vm1410, 1, 0
        %v1427 = vsel %vm1411, 1, 0
        %v1428 = vsel %vm1412, 1, 0
        %v1429 = vsel %vm1413, 1, 0
        %v1430 = vsel %vm1414, 1, 0
        %v1431 = vsel %vm1415, 1, 0
        %v1432 = vsel %vm1416, 1, 0
        %v1433 = vsel %vm1417, 1, 0
        %v1434 = vsel %vm1418, 1, 0
        %v1435 = vsel %vm1419, 1, 0
        %v1436 = vsel %vm1420, 1, 0
        %v1437 = vsel %vm1421, 1, 0
        %v1438 = vsel %vm1422, 1, 0
        %v1439 = vcvt.s32.f32 %v1423
        %v1440 = vcvt.s32.f32 %v1424
        %v1441 = vcvt.s32.f32 %v1425
        %v1442 = vcvt.s32.f32 %v1426
        %v1443 = vcvt.s32.f32 %v1427
        %v1444 = vcvt.s32.f32 %v1428
        %v1445 = vcvt.s32.f32 %v1429
        %v1446 = vcvt.s32.f32 %v1430
        %v1447 = vcvt.s32.f32 %v1431
        %v1448 = vcvt.s32.f32 %v1432
        %v1449 = vcvt.s32.f32 %v1433
        %v1450 = vcvt.s32.f32 %v1434
        %v1451 = vcvt.s32.f32 %v1435
        %v1452 = vcvt.s32.f32 %v1436
        %v1453 = vcvt.s32.f32 %v1437
        %v1454 = vcvt.s32.f32 %v1438
        %v1455 = vpack.c.bf16 %v1440, %v1439
        %v1456 = vpack.c.bf16 %v1442, %v1441
        %v1457 = vpack.c.bf16 %v1444, %v1443
        %v1458 = vpack.c.bf16 %v1446, %v1445
        %v1459 = vpack.c.bf16 %v1448, %v1447
        %v1460 = vpack.c.bf16 %v1450, %v1449
        %v1461 = vpack.c.bf16 %v1452, %v1451
        %v1462 = vpack.c.bf16 %v1454, %v1453
        %v1463 = vadd.bf16 %v1394, %v1455
        %v1464 = vadd.bf16 %v1395, %v1456
        %v1465 = vadd.bf16 %v1396, %v1457
        %v1466 = vadd.bf16 %v1397, %v1458
        %v1467 = vadd.bf16 %v1398, %v1459
        %v1468 = vadd.bf16 %v1399, %v1460
        %v1469 = vadd.bf16 %v1400, %v1461
        %v1470 = vadd.bf16 %v1401, %v1462
        %v1471 = vld [vmem:[%s2] sm:$0xf]
        %v1472 = vld [vmem:[%s2 + $0x8] sm:$0xf]
        %v1473 = vld [vmem:[%s2 + $0x10] sm:$0xf]
        %v1474 = vld [vmem:[%s2 + $0x18] sm:$0xf]
        %v1475 = vld [vmem:[%s2 + $0x20] sm:$0xf]
        %v1476 = vld [vmem:[%s2 + $0x28] sm:$0xf]
        %v1477 = vld [vmem:[%s2 + $0x30] sm:$0xf]
        %v1478 = vld [vmem:[%s2 + $0x38] sm:$0xf]
        %v1479 = vld [vmem:[%s2 + $0x40] sm:$0xf]
        %v1480 = vld [vmem:[%s2 + $0x48] sm:$0xf]
        %v1481 = vld [vmem:[%s2 + $0x50] sm:$0xf]
        %v1482 = vld [vmem:[%s2 + $0x58] sm:$0xf]
        %v1483 = vld [vmem:[%s2 + $0x60] sm:$0xf]
        %v1484 = vld [vmem:[%s2 + $0x68] sm:$0xf]
        %v1485 = vld [vmem:[%s2 + $0x70] sm:$0xf]
        %v1486 = vld [vmem:[%s2 + $0x78] sm:$0xf]
        %v1487 = vld [vmem:[%s297] sm:$0x1]
        %v1488 = vlaneseq
        %v1489 = vshrl.u32 %v1488, 7
        %v1490 = vsub.s32 0, %v1489
        %v1491 = vrot.slane %v1487, %v1490
        %vm1492 = vcmp.eq.s32.totalorder %v1491, %v351
        %vm1493 = vcmp.eq.s32.totalorder %v1491, %v352
        %vm1494 = vcmp.eq.s32.totalorder %v1491, %v353
        %vm1495 = vcmp.eq.s32.totalorder %v1491, %v354
        %vm1496 = vcmp.eq.s32.totalorder %v1491, %v355
        %vm1497 = vcmp.eq.s32.totalorder %v1491, %v356
        %vm1498 = vcmp.eq.s32.totalorder %v1491, %v357
        %vm1499 = vcmp.eq.s32.totalorder %v1491, %v358
        %vm1500 = vcmp.eq.s32.totalorder %v1491, %v359
        %vm1501 = vcmp.eq.s32.totalorder %v1491, %v360
        %vm1502 = vcmp.eq.s32.totalorder %v1491, %v361
        %vm1503 = vcmp.eq.s32.totalorder %v1491, %v362
        %vm1504 = vcmp.eq.s32.totalorder %v1491, %v363
        %vm1505 = vcmp.eq.s32.totalorder %v1491, %v364
        %vm1506 = vcmp.eq.s32.totalorder %v1491, %v365
        %vm1507 = vcmp.eq.s32.totalorder %v1491, %v366
        %v1508 = vsel %vm1492, 1, 0
        %v1509 = vsel %vm1493, 1, 0
        %v1510 = vsel %vm1494, 1, 0
        %v1511 = vsel %vm1495, 1, 0
        %v1512 = vsel %vm1496, 1, 0
        %v1513 = vsel %vm1497, 1, 0
        %v1514 = vsel %vm1498, 1, 0
        %v1515 = vsel %vm1499, 1, 0
        %v1516 = vsel %vm1500, 1, 0
        %v1517 = vsel %vm1501, 1, 0
        %v1518 = vsel %vm1502, 1, 0
        %v1519 = vsel %vm1503, 1, 0
        %v1520 = vsel %vm1504, 1, 0
        %v1521 = vsel %vm1505, 1, 0
        %v1522 = vsel %vm1506, 1, 0
        %v1523 = vsel %vm1507, 1, 0
        %v1524 = vcvt.s32.f32 %v1508
        %v1525 = vcvt.s32.f32 %v1509
        %v1526 = vcvt.s32.f32 %v1510
        %v1527 = vcvt.s32.f32 %v1511
        %v1528 = vcvt.s32.f32 %v1512
        %v1529 = vcvt.s32.f32 %v1513
        %v1530 = vcvt.s32.f32 %v1514
        %v1531 = vcvt.s32.f32 %v1515
        %v1532 = vcvt.s32.f32 %v1516
        %v1533 = vcvt.s32.f32 %v1517
        %v1534 = vcvt.s32.f32 %v1518
        %v1535 = vcvt.s32.f32 %v1519
        %v1536 = vcvt.s32.f32 %v1520
        %v1537 = vcvt.s32.f32 %v1521
        %v1538 = vcvt.s32.f32 %v1522
        %v1539 = vcvt.s32.f32 %v1523
        %v1540 = vpack.c.bf16 %v1525, %v1524
        %v1541 = vpack.c.bf16 %v1527, %v1526
        %v1542 = vpack.c.bf16 %v1529, %v1528
        %v1543 = vpack.c.bf16 %v1531, %v1530
        %v1544 = vpack.c.bf16 %v1533, %v1532
        %v1545 = vpack.c.bf16 %v1535, %v1534
        %v1546 = vpack.c.bf16 %v1537, %v1536
        %v1547 = vpack.c.bf16 %v1539, %v1538
        %v1548 = vadd.bf16 %v1540, 0
        %v1549 = vadd.bf16 %v1541, 0
        %v1550 = vadd.bf16 %v1542, 0
        %v1551 = vadd.bf16 %v1543, 0
        %v1552 = vadd.bf16 %v1544, 0
        %v1553 = vadd.bf16 %v1545, 0
        %v1554 = vadd.bf16 %v1546, 0
        %v1555 = vadd.bf16 %v1547, 0
        %v1556 = vld [vmem:[%s297 + $0x1] sm:$0x1]
        %v1557 = vlaneseq
        %v1558 = vshrl.u32 %v1557, 7
        %v1559 = vsub.s32 0, %v1558
        %v1560 = vrot.slane %v1556, %v1559
        %vm1561 = vcmp.eq.s32.totalorder %v1560, %v351
        %vm1562 = vcmp.eq.s32.totalorder %v1560, %v352
        %vm1563 = vcmp.eq.s32.totalorder %v1560, %v353
        %vm1564 = vcmp.eq.s32.totalorder %v1560, %v354
        %vm1565 = vcmp.eq.s32.totalorder %v1560, %v355
        %vm1566 = vcmp.eq.s32.totalorder %v1560, %v356
        %vm1567 = vcmp.eq.s32.totalorder %v1560, %v357
        %vm1568 = vcmp.eq.s32.totalorder %v1560, %v358
        %vm1569 = vcmp.eq.s32.totalorder %v1560, %v359
        %vm1570 = vcmp.eq.s32.totalorder %v1560, %v360
        %vm1571 = vcmp.eq.s32.totalorder %v1560, %v361
        %vm1572 = vcmp.eq.s32.totalorder %v1560, %v362
        %vm1573 = vcmp.eq.s32.totalorder %v1560, %v363
        %vm1574 = vcmp.eq.s32.totalorder %v1560, %v364
        %vm1575 = vcmp.eq.s32.totalorder %v1560, %v365
        %vm1576 = vcmp.eq.s32.totalorder %v1560, %v366
        %v1577 = vsel %vm1561, 1, 0
        %v1578 = vsel %vm1562, 1, 0
        %v1579 = vsel %vm1563, 1, 0
        %v1580 = vsel %vm1564, 1, 0
        %v1581 = vsel %vm1565, 1, 0
        %v1582 = vsel %vm1566, 1, 0
        %v1583 = vsel %vm1567, 1, 0
        %v1584 = vsel %vm1568, 1, 0
        %v1585 = vsel %vm1569, 1, 0
        %v1586 = vsel %vm1570, 1, 0
        %v1587 = vsel %vm1571, 1, 0
        %v1588 = vsel %vm1572, 1, 0
        %v1589 = vsel %vm1573, 1, 0
        %v1590 = vsel %vm1574, 1, 0
        %v1591 = vsel %vm1575, 1, 0
        %v1592 = vsel %vm1576, 1, 0
        %v1593 = vcvt.s32.f32 %v1577
        %v1594 = vcvt.s32.f32 %v1578
        %v1595 = vcvt.s32.f32 %v1579
        %v1596 = vcvt.s32.f32 %v1580
        %v1597 = vcvt.s32.f32 %v1581
        %v1598 = vcvt.s32.f32 %v1582
        %v1599 = vcvt.s32.f32 %v1583
        %v1600 = vcvt.s32.f32 %v1584
        %v1601 = vcvt.s32.f32 %v1585
        %v1602 = vcvt.s32.f32 %v1586
        %v1603 = vcvt.s32.f32 %v1587
        %v1604 = vcvt.s32.f32 %v1588
        %v1605 = vcvt.s32.f32 %v1589
        %v1606 = vcvt.s32.f32 %v1590
        %v1607 = vcvt.s32.f32 %v1591
        %v1608 = vcvt.s32.f32 %v1592
        %v1609 = vpack.c.bf16 %v1594, %v1593
        %v1610 = vpack.c.bf16 %v1596, %v1595
        %v1611 = vpack.c.bf16 %v1598, %v1597
        %v1612 = vpack.c.bf16 %v1600, %v1599
        %v1613 = vpack.c.bf16 %v1602, %v1601
        %v1614 = vpack.c.bf16 %v1604, %v1603
        %v1615 = vpack.c.bf16 %v1606, %v1605
        %v1616 = vpack.c.bf16 %v1608, %v1607
        %v1617 = vadd.bf16 %v1548, %v1609
        %v1618 = vadd.bf16 %v1549, %v1610
        %v1619 = vadd.bf16 %v1550, %v1611
        %v1620 = vadd.bf16 %v1551, %v1612
        %v1621 = vadd.bf16 %v1552, %v1613
        %v1622 = vadd.bf16 %v1553, %v1614
        %v1623 = vadd.bf16 %v1554, %v1615
        %v1624 = vadd.bf16 %v1555, %v1616
        %v1625 = vld [vmem:[%s297 + $0x2] sm:$0x1]
        %v1626 = vlaneseq
        %v1627 = vshrl.u32 %v1626, 7
        %v1628 = vsub.s32 0, %v1627
        %v1629 = vrot.slane %v1625, %v1628
        %vm1630 = vcmp.eq.s32.totalorder %v1629, %v351
        %vm1631 = vcmp.eq.s32.totalorder %v1629, %v352
        %vm1632 = vcmp.eq.s32.totalorder %v1629, %v353
        %vm1633 = vcmp.eq.s32.totalorder %v1629, %v354
        %vm1634 = vcmp.eq.s32.totalorder %v1629, %v355
        %vm1635 = vcmp.eq.s32.totalorder %v1629, %v356
        %vm1636 = vcmp.eq.s32.totalorder %v1629, %v357
        %vm1637 = vcmp.eq.s32.totalorder %v1629, %v358
        %vm1638 = vcmp.eq.s32.totalorder %v1629, %v359
        %vm1639 = vcmp.eq.s32.totalorder %v1629, %v360
        %vm1640 = vcmp.eq.s32.totalorder %v1629, %v361
        %vm1641 = vcmp.eq.s32.totalorder %v1629, %v362
        %vm1642 = vcmp.eq.s32.totalorder %v1629, %v363
        %vm1643 = vcmp.eq.s32.totalorder %v1629, %v364
        %vm1644 = vcmp.eq.s32.totalorder %v1629, %v365
        %vm1645 = vcmp.eq.s32.totalorder %v1629, %v366
        %v1646 = vsel %vm1630, 1, 0
        %v1647 = vsel %vm1631, 1, 0
        %v1648 = vsel %vm1632, 1, 0
        %v1649 = vsel %vm1633, 1, 0
        %v1650 = vsel %vm1634, 1, 0
        %v1651 = vsel %vm1635, 1, 0
        %v1652 = vsel %vm1636, 1, 0
        %v1653 = vsel %vm1637, 1, 0
        %v1654 = vsel %vm1638, 1, 0
        %v1655 = vsel %vm1639, 1, 0
        %v1656 = vsel %vm1640, 1, 0
        %v1657 = vsel %vm1641, 1, 0
        %v1658 = vsel %vm1642, 1, 0
        %v1659 = vsel %vm1643, 1, 0
        %v1660 = vsel %vm1644, 1, 0
        %v1661 = vsel %vm1645, 1, 0
        %v1662 = vcvt.s32.f32 %v1646
        %v1663 = vcvt.s32.f32 %v1647
        %v1664 = vcvt.s32.f32 %v1648
        %v1665 = vcvt.s32.f32 %v1649
        %v1666 = vcvt.s32.f32 %v1650
        %v1667 = vcvt.s32.f32 %v1651
        %v1668 = vcvt.s32.f32 %v1652
        %v1669 = vcvt.s32.f32 %v1653
        %v1670 = vcvt.s32.f32 %v1654
        %v1671 = vcvt.s32.f32 %v1655
        %v1672 = vcvt.s32.f32 %v1656
        %v1673 = vcvt.s32.f32 %v1657
        %v1674 = vcvt.s32.f32 %v1658
        %v1675 = vcvt.s32.f32 %v1659
        %v1676 = vcvt.s32.f32 %v1660
        %v1677 = vcvt.s32.f32 %v1661
        %v1678 = vpack.c.bf16 %v1663, %v1662
        %v1679 = vpack.c.bf16 %v1665, %v1664
        %v1680 = vpack.c.bf16 %v1667, %v1666
        %v1681 = vpack.c.bf16 %v1669, %v1668
        %v1682 = vpack.c.bf16 %v1671, %v1670
        %v1683 = vpack.c.bf16 %v1673, %v1672
        %v1684 = vpack.c.bf16 %v1675, %v1674
        %v1685 = vpack.c.bf16 %v1677, %v1676
        %v1686 = vadd.bf16 %v1617, %v1678
        %v1687 = vadd.bf16 %v1618, %v1679
        %v1688 = vadd.bf16 %v1619, %v1680
        %v1689 = vadd.bf16 %v1620, %v1681
        %v1690 = vadd.bf16 %v1621, %v1682
        %v1691 = vadd.bf16 %v1622, %v1683
        %v1692 = vadd.bf16 %v1623, %v1684
        %v1693 = vadd.bf16 %v1624, %v1685
        %v1694 = vld [vmem:[%s297 + $0x3] sm:$0x1]
        %v1695 = vlaneseq
        %v1696 = vshrl.u32 %v1695, 7
        %v1697 = vsub.s32 0, %v1696
        %v1698 = vrot.slane %v1694, %v1697
        %vm1699 = vcmp.eq.s32.totalorder %v1698, %v351
        %vm1700 = vcmp.eq.s32.totalorder %v1698, %v352
        %vm1701 = vcmp.eq.s32.totalorder %v1698, %v353
        %vm1702 = vcmp.eq.s32.totalorder %v1698, %v354
        %vm1703 = vcmp.eq.s32.totalorder %v1698, %v355
        %vm1704 = vcmp.eq.s32.totalorder %v1698, %v356
        %vm1705 = vcmp.eq.s32.totalorder %v1698, %v357
        %vm1706 = vcmp.eq.s32.totalorder %v1698, %v358
        %vm1707 = vcmp.eq.s32.totalorder %v1698, %v359
        %vm1708 = vcmp.eq.s32.totalorder %v1698, %v360
        %vm1709 = vcmp.eq.s32.totalorder %v1698, %v361
        %vm1710 = vcmp.eq.s32.totalorder %v1698, %v362
        %vm1711 = vcmp.eq.s32.totalorder %v1698, %v363
        %vm1712 = vcmp.eq.s32.totalorder %v1698, %v364
        %vm1713 = vcmp.eq.s32.totalorder %v1698, %v365
        %vm1714 = vcmp.eq.s32.totalorder %v1698, %v366
        %v1715 = vsel %vm1699, 1, 0
        %v1716 = vsel %vm1700, 1, 0
        %v1717 = vsel %vm1701, 1, 0
        %v1718 = vsel %vm1702, 1, 0
        %v1719 = vsel %vm1703, 1, 0
        %v1720 = vsel %vm1704, 1, 0
        %v1721 = vsel %vm1705, 1, 0
        %v1722 = vsel %vm1706, 1, 0
        %v1723 = vsel %vm1707, 1, 0
        %v1724 = vsel %vm1708, 1, 0
        %v1725 = vsel %vm1709, 1, 0
        %v1726 = vsel %vm1710, 1, 0
        %v1727 = vsel %vm1711, 1, 0
        %v1728 = vsel %vm1712, 1, 0
        %v1729 = vsel %vm1713, 1, 0
        %v1730 = vsel %vm1714, 1, 0
        %v1731 = vcvt.s32.f32 %v1715
        %v1732 = vcvt.s32.f32 %v1716
        %v1733 = vcvt.s32.f32 %v1717
        %v1734 = vcvt.s32.f32 %v1718
        %v1735 = vcvt.s32.f32 %v1719
        %v1736 = vcvt.s32.f32 %v1720
        %v1737 = vcvt.s32.f32 %v1721
        %v1738 = vcvt.s32.f32 %v1722
        %v1739 = vcvt.s32.f32 %v1723
        %v1740 = vcvt.s32.f32 %v1724
        %v1741 = vcvt.s32.f32 %v1725
        %v1742 = vcvt.s32.f32 %v1726
        %v1743 = vcvt.s32.f32 %v1727
        %v1744 = vcvt.s32.f32 %v1728
        %v1745 = vcvt.s32.f32 %v1729
        %v1746 = vcvt.s32.f32 %v1730
        %v1747 = vpack.c.bf16 %v1732, %v1731
        %v1748 = vpack.c.bf16 %v1734, %v1733
        %v1749 = vpack.c.bf16 %v1736, %v1735
        %v1750 = vpack.c.bf16 %v1738, %v1737
        %v1751 = vpack.c.bf16 %v1740, %v1739
        %v1752 = vpack.c.bf16 %v1742, %v1741
        %v1753 = vpack.c.bf16 %v1744, %v1743
        %v1754 = vpack.c.bf16 %v1746, %v1745
        %v1755 = vadd.bf16 %v1686, %v1747
        %v1756 = vadd.bf16 %v1687, %v1748
        %v1757 = vadd.bf16 %v1688, %v1749
        %v1758 = vadd.bf16 %v1689, %v1750
        %v1759 = vadd.bf16 %v1690, %v1751
        %v1760 = vadd.bf16 %v1691, %v1752
        %v1761 = vadd.bf16 %v1692, %v1753
        %v1762 = vadd.bf16 %v1693, %v1754
        %v1763 = vld [vmem:[%s297 + $0x4] sm:$0x1]
        %v1764 = vlaneseq
        %v1765 = vshrl.u32 %v1764, 7
        %v1766 = vsub.s32 0, %v1765
        %v1767 = vrot.slane %v1763, %v1766
        %vm1768 = vcmp.eq.s32.totalorder %v1767, %v351
        %vm1769 = vcmp.eq.s32.totalorder %v1767, %v352
        %vm1770 = vcmp.eq.s32.totalorder %v1767, %v353
        %vm1771 = vcmp.eq.s32.totalorder %v1767, %v354
        %vm1772 = vcmp.eq.s32.totalorder %v1767, %v355
        %vm1773 = vcmp.eq.s32.totalorder %v1767, %v356
        %vm1774 = vcmp.eq.s32.totalorder %v1767, %v357
        %vm1775 = vcmp.eq.s32.totalorder %v1767, %v358
        %vm1776 = vcmp.eq.s32.totalorder %v1767, %v359
        %vm1777 = vcmp.eq.s32.totalorder %v1767, %v360
        %vm1778 = vcmp.eq.s32.totalorder %v1767, %v361
        %vm1779 = vcmp.eq.s32.totalorder %v1767, %v362
        %vm1780 = vcmp.eq.s32.totalorder %v1767, %v363
        %vm1781 = vcmp.eq.s32.totalorder %v1767, %v364
        %vm1782 = vcmp.eq.s32.totalorder %v1767, %v365
        %vm1783 = vcmp.eq.s32.totalorder %v1767, %v366
        %v1784 = vsel %vm1768, 1, 0
        %v1785 = vsel %vm1769, 1, 0
        %v1786 = vsel %vm1770, 1, 0
        %v1787 = vsel %vm1771, 1, 0
        %v1788 = vsel %vm1772, 1, 0
        %v1789 = vsel %vm1773, 1, 0
        %v1790 = vsel %vm1774, 1, 0
        %v1791 = vsel %vm1775, 1, 0
        %v1792 = vsel %vm1776, 1, 0
        %v1793 = vsel %vm1777, 1, 0
        %v1794 = vsel %vm1778, 1, 0
        %v1795 = vsel %vm1779, 1, 0
        %v1796 = vsel %vm1780, 1, 0
        %v1797 = vsel %vm1781, 1, 0
        %v1798 = vsel %vm1782, 1, 0
        %v1799 = vsel %vm1783, 1, 0
        %v1800 = vcvt.s32.f32 %v1784
        %v1801 = vcvt.s32.f32 %v1785
        %v1802 = vcvt.s32.f32 %v1786
        %v1803 = vcvt.s32.f32 %v1787
        %v1804 = vcvt.s32.f32 %v1788
        %v1805 = vcvt.s32.f32 %v1789
        %v1806 = vcvt.s32.f32 %v1790
        %v1807 = vcvt.s32.f32 %v1791
        %v1808 = vcvt.s32.f32 %v1792
        %v1809 = vcvt.s32.f32 %v1793
        %v1810 = vcvt.s32.f32 %v1794
        %v1811 = vcvt.s32.f32 %v1795
        %v1812 = vcvt.s32.f32 %v1796
        %v1813 = vcvt.s32.f32 %v1797
        %v1814 = vcvt.s32.f32 %v1798
        %v1815 = vcvt.s32.f32 %v1799
        %v1816 = vpack.c.bf16 %v1801, %v1800
        %v1817 = vpack.c.bf16 %v1803, %v1802
        %v1818 = vpack.c.bf16 %v1805, %v1804
        %v1819 = vpack.c.bf16 %v1807, %v1806
        %v1820 = vpack.c.bf16 %v1809, %v1808
        %v1821 = vpack.c.bf16 %v1811, %v1810
        %v1822 = vpack.c.bf16 %v1813, %v1812
        %v1823 = vpack.c.bf16 %v1815, %v1814
        %v1824 = vadd.bf16 %v1755, %v1816
        %v1825 = vadd.bf16 %v1756, %v1817
        %v1826 = vadd.bf16 %v1757, %v1818
        %v1827 = vadd.bf16 %v1758, %v1819
        %v1828 = vadd.bf16 %v1759, %v1820
        %v1829 = vadd.bf16 %v1760, %v1821
        %v1830 = vadd.bf16 %v1761, %v1822
        %v1831 = vadd.bf16 %v1762, %v1823
        %v1832 = vld [vmem:[%s297 + $0x5] sm:$0x1]
        %v1833 = vlaneseq
        %v1834 = vshrl.u32 %v1833, 7
        %v1835 = vsub.s32 0, %v1834
        %v1836 = vrot.slane %v1832, %v1835
        %vm1837 = vcmp.eq.s32.totalorder %v1836, %v351
        %vm1838 = vcmp.eq.s32.totalorder %v1836, %v352
        %vm1839 = vcmp.eq.s32.totalorder %v1836, %v353
        %vm1840 = vcmp.eq.s32.totalorder %v1836, %v354
        %vm1841 = vcmp.eq.s32.totalorder %v1836, %v355
        %vm1842 = vcmp.eq.s32.totalorder %v1836, %v356
        %vm1843 = vcmp.eq.s32.totalorder %v1836, %v357
        %vm1844 = vcmp.eq.s32.totalorder %v1836, %v358
        %vm1845 = vcmp.eq.s32.totalorder %v1836, %v359
        %vm1846 = vcmp.eq.s32.totalorder %v1836, %v360
        %vm1847 = vcmp.eq.s32.totalorder %v1836, %v361
        %vm1848 = vcmp.eq.s32.totalorder %v1836, %v362
        %vm1849 = vcmp.eq.s32.totalorder %v1836, %v363
        %vm1850 = vcmp.eq.s32.totalorder %v1836, %v364
        %vm1851 = vcmp.eq.s32.totalorder %v1836, %v365
        %vm1852 = vcmp.eq.s32.totalorder %v1836, %v366
        %v1853 = vsel %vm1837, 1, 0
        %v1854 = vsel %vm1838, 1, 0
        %v1855 = vsel %vm1839, 1, 0
        %v1856 = vsel %vm1840, 1, 0
        %v1857 = vsel %vm1841, 1, 0
        %v1858 = vsel %vm1842, 1, 0
        %v1859 = vsel %vm1843, 1, 0
        %v1860 = vsel %vm1844, 1, 0
        %v1861 = vsel %vm1845, 1, 0
        %v1862 = vsel %vm1846, 1, 0
        %v1863 = vsel %vm1847, 1, 0
        %v1864 = vsel %vm1848, 1, 0
        %v1865 = vsel %vm1849, 1, 0
        %v1866 = vsel %vm1850, 1, 0
        %v1867 = vsel %vm1851, 1, 0
        %v1868 = vsel %vm1852, 1, 0
        %v1869 = vcvt.s32.f32 %v1853
        %v1870 = vcvt.s32.f32 %v1854
        %v1871 = vcvt.s32.f32 %v1855
        %v1872 = vcvt.s32.f32 %v1856
        %v1873 = vcvt.s32.f32 %v1857
        %v1874 = vcvt.s32.f32 %v1858
        %v1875 = vcvt.s32.f32 %v1859
        %v1876 = vcvt.s32.f32 %v1860
        %v1877 = vcvt.s32.f32 %v1861
        %v1878 = vcvt.s32.f32 %v1862
        %v1879 = vcvt.s32.f32 %v1863
        %v1880 = vcvt.s32.f32 %v1864
        %v1881 = vcvt.s32.f32 %v1865
        %v1882 = vcvt.s32.f32 %v1866
        %v1883 = vcvt.s32.f32 %v1867
        %v1884 = vcvt.s32.f32 %v1868
        %v1885 = vpack.c.bf16 %v1870, %v1869
        %v1886 = vpack.c.bf16 %v1872, %v1871
        %v1887 = vpack.c.bf16 %v1874, %v1873
        %v1888 = vpack.c.bf16 %v1876, %v1875
        %v1889 = vpack.c.bf16 %v1878, %v1877
        %v1890 = vpack.c.bf16 %v1880, %v1879
        %v1891 = vpack.c.bf16 %v1882, %v1881
        %v1892 = vpack.c.bf16 %v1884, %v1883
        %v1893 = vadd.bf16 %v1824, %v1885
        %v1894 = vadd.bf16 %v1825, %v1886
        %v1895 = vadd.bf16 %v1826, %v1887
        %v1896 = vadd.bf16 %v1827, %v1888
        %v1897 = vadd.bf16 %v1828, %v1889
        %v1898 = vadd.bf16 %v1829, %v1890
        %v1899 = vadd.bf16 %v1830, %v1891
        %v1900 = vadd.bf16 %v1831, %v1892
        %v1901 = vld [vmem:[%s297 + $0x6] sm:$0x1]
        %v1902 = vlaneseq
        %v1903 = vshrl.u32 %v1902, 7
        %v1904 = vsub.s32 0, %v1903
        %v1905 = vrot.slane %v1901, %v1904
        %vm1906 = vcmp.eq.s32.totalorder %v1905, %v351
        %vm1907 = vcmp.eq.s32.totalorder %v1905, %v352
        %vm1908 = vcmp.eq.s32.totalorder %v1905, %v353
        %vm1909 = vcmp.eq.s32.totalorder %v1905, %v354
        %vm1910 = vcmp.eq.s32.totalorder %v1905, %v355
        %vm1911 = vcmp.eq.s32.totalorder %v1905, %v356
        %vm1912 = vcmp.eq.s32.totalorder %v1905, %v357
        %vm1913 = vcmp.eq.s32.totalorder %v1905, %v358
        %vm1914 = vcmp.eq.s32.totalorder %v1905, %v359
        %vm1915 = vcmp.eq.s32.totalorder %v1905, %v360
        %vm1916 = vcmp.eq.s32.totalorder %v1905, %v361
        %vm1917 = vcmp.eq.s32.totalorder %v1905, %v362
        %vm1918 = vcmp.eq.s32.totalorder %v1905, %v363
        %vm1919 = vcmp.eq.s32.totalorder %v1905, %v364
        %vm1920 = vcmp.eq.s32.totalorder %v1905, %v365
        %vm1921 = vcmp.eq.s32.totalorder %v1905, %v366
        %v1922 = vsel %vm1906, 1, 0
        %v1923 = vsel %vm1907, 1, 0
        %v1924 = vsel %vm1908, 1, 0
        %v1925 = vsel %vm1909, 1, 0
        %v1926 = vsel %vm1910, 1, 0
        %v1927 = vsel %vm1911, 1, 0
        %v1928 = vsel %vm1912, 1, 0
        %v1929 = vsel %vm1913, 1, 0
        %v1930 = vsel %vm1914, 1, 0
        %v1931 = vsel %vm1915, 1, 0
        %v1932 = vsel %vm1916, 1, 0
        %v1933 = vsel %vm1917, 1, 0
        %v1934 = vsel %vm1918, 1, 0
        %v1935 = vsel %vm1919, 1, 0
        %v1936 = vsel %vm1920, 1, 0
        %v1937 = vsel %vm1921, 1, 0
        %v1938 = vcvt.s32.f32 %v1922
        %v1939 = vcvt.s32.f32 %v1923
        %v1940 = vcvt.s32.f32 %v1924
        %v1941 = vcvt.s32.f32 %v1925
        %v1942 = vcvt.s32.f32 %v1926
        %v1943 = vcvt.s32.f32 %v1927
        %v1944 = vcvt.s32.f32 %v1928
        %v1945 = vcvt.s32.f32 %v1929
        %v1946 = vcvt.s32.f32 %v1930
        %v1947 = vcvt.s32.f32 %v1931
        %v1948 = vcvt.s32.f32 %v1932
        %v1949 = vcvt.s32.f32 %v1933
        %v1950 = vcvt.s32.f32 %v1934
        %v1951 = vcvt.s32.f32 %v1935
        %v1952 = vcvt.s32.f32 %v1936
        %v1953 = vcvt.s32.f32 %v1937
        %v1954 = vpack.c.bf16 %v1939, %v1938
        %v1955 = vpack.c.bf16 %v1941, %v1940
        %v1956 = vpack.c.bf16 %v1943, %v1942
        %v1957 = vpack.c.bf16 %v1945, %v1944
        %v1958 = vpack.c.bf16 %v1947, %v1946
        %v1959 = vpack.c.bf16 %v1949, %v1948
        %v1960 = vpack.c.bf16 %v1951, %v1950
        %v1961 = vpack.c.bf16 %v1953, %v1952
        %v1962 = vadd.bf16 %v1893, %v1954
        %v1963 = vadd.bf16 %v1894, %v1955
        %v1964 = vadd.bf16 %v1895, %v1956
        %v1965 = vadd.bf16 %v1896, %v1957
        %v1966 = vadd.bf16 %v1897, %v1958
        %v1967 = vadd.bf16 %v1898, %v1959
        %v1968 = vadd.bf16 %v1899, %v1960
        %v1969 = vadd.bf16 %v1900, %v1961
        %v1970 = vld [vmem:[%s297 + $0x7] sm:$0x1]
        %v1971 = vlaneseq
        %v1972 = vshrl.u32 %v1971, 7
        %v1973 = vsub.s32 0, %v1972
        %v1974 = vrot.slane %v1970, %v1973
        %vm1975 = vcmp.eq.s32.totalorder %v1974, %v351
        %vm1976 = vcmp.eq.s32.totalorder %v1974, %v352
        %vm1977 = vcmp.eq.s32.totalorder %v1974, %v353
        %vm1978 = vcmp.eq.s32.totalorder %v1974, %v354
        %vm1979 = vcmp.eq.s32.totalorder %v1974, %v355
        %vm1980 = vcmp.eq.s32.totalorder %v1974, %v356
        %vm1981 = vcmp.eq.s32.totalorder %v1974, %v357
        %vm1982 = vcmp.eq.s32.totalorder %v1974, %v358
        %vm1983 = vcmp.eq.s32.totalorder %v1974, %v359
        %vm1984 = vcmp.eq.s32.totalorder %v1974, %v360
        %vm1985 = vcmp.eq.s32.totalorder %v1974, %v361
        %vm1986 = vcmp.eq.s32.totalorder %v1974, %v362
        %vm1987 = vcmp.eq.s32.totalorder %v1974, %v363
        %vm1988 = vcmp.eq.s32.totalorder %v1974, %v364
        %vm1989 = vcmp.eq.s32.totalorder %v1974, %v365
        %vm1990 = vcmp.eq.s32.totalorder %v1974, %v366
        %v1991 = vsel %vm1975, 1, 0
        %v1992 = vsel %vm1976, 1, 0
        %v1993 = vsel %vm1977, 1, 0
        %v1994 = vsel %vm1978, 1, 0
        %v1995 = vsel %vm1979, 1, 0
        %v1996 = vsel %vm1980, 1, 0
        %v1997 = vsel %vm1981, 1, 0
        %v1998 = vsel %vm1982, 1, 0
        %v1999 = vsel %vm1983, 1, 0
        %v2000 = vsel %vm1984, 1, 0
        %v2001 = vsel %vm1985, 1, 0
        %v2002 = vsel %vm1986, 1, 0
        %v2003 = vsel %vm1987, 1, 0
        %v2004 = vsel %vm1988, 1, 0
        %v2005 = vsel %vm1989, 1, 0
        %v2006 = vsel %vm1990, 1, 0
        %v2007 = vcvt.s32.f32 %v1991
        %v2008 = vcvt.s32.f32 %v1992
        %v2009 = vcvt.s32.f32 %v1993
        %v2010 = vcvt.s32.f32 %v1994
        %v2011 = vcvt.s32.f32 %v1995
        %v2012 = vcvt.s32.f32 %v1996
        %v2013 = vcvt.s32.f32 %v1997
        %v2014 = vcvt.s32.f32 %v1998
        %v2015 = vcvt.s32.f32 %v1999
        %v2016 = vcvt.s32.f32 %v2000
        %v2017 = vcvt.s32.f32 %v2001
        %v2018 = vcvt.s32.f32 %v2002
        %v2019 = vcvt.s32.f32 %v2003
        %v2020 = vcvt.s32.f32 %v2004
        %v2021 = vcvt.s32.f32 %v2005
        %v2022 = vcvt.s32.f32 %v2006
        %v2023 = vpack.c.bf16 %v2008, %v2007
        %v2024 = vpack.c.bf16 %v2010, %v2009
        %v2025 = vpack.c.bf16 %v2012, %v2011
        %v2026 = vpack.c.bf16 %v2014, %v2013
        %v2027 = vpack.c.bf16 %v2016, %v2015
        %v2028 = vpack.c.bf16 %v2018, %v2017
        %v2029 = vpack.c.bf16 %v2020, %v2019
        %v2030 = vpack.c.bf16 %v2022, %v2021
        %v2031 = vadd.bf16 %v1962, %v2023
        %v2032 = vadd.bf16 %v1963, %v2024
        %v2033 = vadd.bf16 %v1964, %v2025
        %v2034 = vadd.bf16 %v1965, %v2026
        %v2035 = vadd.bf16 %v1966, %v2027
        %v2036 = vadd.bf16 %v1967, %v2028
        %v2037 = vadd.bf16 %v1968, %v2029
        %v2038 = vadd.bf16 %v1969, %v2030
        %v2039 = vld [vmem:[%s3] sm:$0xf]
        %v2040 = vld [vmem:[%s3 + $0x8] sm:$0xf]
        %v2041 = vld [vmem:[%s3 + $0x10] sm:$0xf]
        %v2042 = vld [vmem:[%s3 + $0x18] sm:$0xf]
        %v2043 = vld [vmem:[%s3 + $0x20] sm:$0xf]
        %v2044 = vld [vmem:[%s3 + $0x28] sm:$0xf]
        %v2045 = vld [vmem:[%s3 + $0x30] sm:$0xf]
        %v2046 = vld [vmem:[%s3 + $0x38] sm:$0xf]
        %v2047 = vld [vmem:[%s3 + $0x40] sm:$0xf]
        %v2048 = vld [vmem:[%s3 + $0x48] sm:$0xf]
        %v2049 = vld [vmem:[%s3 + $0x50] sm:$0xf]
        %v2050 = vld [vmem:[%s3 + $0x58] sm:$0xf]
        %v2051 = vld [vmem:[%s3 + $0x60] sm:$0xf]
        %v2052 = vld [vmem:[%s3 + $0x68] sm:$0xf]
        %v2053 = vld [vmem:[%s3 + $0x70] sm:$0xf]
        %v2054 = vld [vmem:[%s3 + $0x78] sm:$0xf]
        %v2071 = vunpack.c.l.b16 %v2039
        %v2072 = vunpack.c.l.b16 %v2040
        %v2073 = vunpack.c.l.b16 %v2041
        %v2074 = vunpack.c.l.b16 %v2042
        %v2075 = vunpack.c.l.b16 %v2043
        %v2076 = vunpack.c.l.b16 %v2044
        %v2077 = vunpack.c.l.b16 %v2045
        %v2078 = vunpack.c.l.b16 %v2046
        %v2079 = vunpack.c.l.b16 %v2047
        %v2080 = vunpack.c.l.b16 %v2048
        %v2081 = vunpack.c.l.b16 %v2049
        %v2082 = vunpack.c.l.b16 %v2050
        %v2083 = vunpack.c.l.b16 %v2051
        %v2084 = vunpack.c.l.b16 %v2052
        %v2085 = vunpack.c.l.b16 %v2053
        %v2086 = vunpack.c.l.b16 %v2054
        %v2087 = vpack.c.b16 %v2072, %v2071
        %v2088 = vpack.c.b16 %v2074, %v2073
        %v2089 = vpack.c.b16 %v2076, %v2075
        %v2090 = vpack.c.b16 %v2078, %v2077
        %v2091 = vpack.c.b16 %v2080, %v2079
        %v2092 = vpack.c.b16 %v2082, %v2081
        %v2093 = vpack.c.b16 %v2084, %v2083
        %v2094 = vpack.c.b16 %v2086, %v2085
        %2103 = vmatprep.subr.bf16.mxu0 0
        %2104 = vmatpush1.bf16.msra.mxu0 %v2031
        %2105 = vmatprep.subr.bf16.mxu0 0
        %2106 = vmatpush1.bf16.msra.mxu0 %v2032
        %2107 = vmatprep.subr.bf16.mxu0 0
        %2108 = vmatpush1.bf16.msra.mxu0 %v2033
        %2109 = vmatprep.subr.bf16.mxu0 0
        %2110 = vmatpush1.bf16.msra.mxu0 %v2034
        %2111 = vmatprep.subr.bf16.mxu0 0
        %2112 = vmatpush1.bf16.msra.mxu0 %v2035
        %2113 = vmatprep.subr.bf16.mxu0 0
        %2114 = vmatpush1.bf16.msra.mxu0 %v2036
        %2115 = vmatprep.subr.bf16.mxu0 0
        %2116 = vmatpush1.bf16.msra.mxu0 %v2037
        %2117 = vmatprep.subr.bf16.mxu0 0
        %2118 = vmatpush1.bf16.msra.mxu0 %v2038
        %2119 = vmatprep.subr.bf16.mxu0 0
        %2120 = vmatpush1.bf16.msra.mxu0 0
        %2121 = vmatprep.subr.bf16.mxu0 0
        %2122 = vmatpush1.bf16.msra.mxu0 0
        %2123 = vmatprep.subr.bf16.mxu0 0
        %2124 = vmatpush1.bf16.msra.mxu0 0
        %2125 = vmatprep.subr.bf16.mxu0 0
        %2126 = vmatpush1.bf16.msra.mxu0 0
        %2127 = vmatprep.subr.bf16.mxu0 0
        %2128 = vmatpush1.bf16.msra.mxu0 0
        %2129 = vmatprep.subr.bf16.mxu0 0
        %2130 = vmatpush1.bf16.msra.mxu0 0
        %2131 = vmatprep.subr.bf16.mxu0 0
        %2132 = vmatpush1.bf16.msra.mxu0 0
        %2133 = vmatprep.subr.bf16.mxu0 0
        %2134 = vmatpush1.bf16.msra.mxu0 0
        %2135 = vmatprep.mubr.bf16.mxu0 0
        %2136 = vmatmul.mubr.bf16.gmra.mrb[0].mxu0 %v2087
        %v2137 = vpop.f32.mrb[0].mxu0
        %v2138 = vadd.f32 0.0, %v2137
        %v2139 = vpop.f32.mrb[0].mxu0
        %v2140 = vpop.f32.mrb[0].mxu0
        %v2141 = vadd.f32 0.0, %v2140
        %v2142 = vpop.f32.mrb[0].mxu0
        %2143 = vmatprep.mubr.bf16.mxu0 0
        %2144 = vmatmul.mubr.bf16.gmra.mrb[0].mxu0 %v2088
        %v2145 = vpop.f32.mrb[0].mxu0
        %v2146 = vadd.f32 0.0, %v2145
        %v2147 = vpop.f32.mrb[0].mxu0
        %v2148 = vpop.f32.mrb[0].mxu0
        %v2149 = vadd.f32 0.0, %v2148
        %v2150 = vpop.f32.mrb[0].mxu0
        %2151 = vmatprep.mubr.bf16.mxu0 0
        %2152 = vmatmul.mubr.bf16.gmra.mrb[0].mxu0 %v2089
        %v2153 = vpop.f32.mrb[0].mxu0
        %v2154 = vadd.f32 0.0, %v2153
        %v2155 = vpop.f32.mrb[0].mxu0
        %v2156 = vpop.f32.mrb[0].mxu0
        %v2157 = vadd.f32 0.0, %v2156
        %v2158 = vpop.f32.mrb[0].mxu0
        %2159 = vmatprep.mubr.bf16.mxu0 0
        %2160 = vmatmul.mubr.bf16.gmra.mrb[0].mxu0 %v2090
        %v2161 = vpop.f32.mrb[0].mxu0
        %v2162 = vadd.f32 0.0, %v2161
        %v2163 = vpop.f32.mrb[0].mxu0
        %v2164 = vpop.f32.mrb[0].mxu0
        %v2165 = vadd.f32 0.0, %v2164
        %v2166 = vpop.f32.mrb[0].mxu0
        %2167 = vmatprep.mubr.bf16.mxu0 0
        %2168 = vmatmul.mubr.bf16.gmra.mrb[0].mxu0 %v2091
        %v2169 = vpop.f32.mrb[0].mxu0
        %v2170 = vadd.f32 0.0, %v2169
        %v2171 = vpop.f32.mrb[0].mxu0
        %v2172 = vpop.f32.mrb[0].mxu0
        %v2173 = vadd.f32 0.0, %v2172
        %v2174 = vpop.f32.mrb[0].mxu0
        %2175 = vmatprep.mubr.bf16.mxu0 0
        %2176 = vmatmul.mubr.bf16.gmra.mrb[0].mxu0 %v2092
        %v2177 = vpop.f32.mrb[0].mxu0
        %v2178 = vadd.f32 0.0, %v2177
        %v2179 = vpop.f32.mrb[0].mxu0
        %v2180 = vpop.f32.mrb[0].mxu0
        %v2181 = vadd.f32 0.0, %v2180
        %v2182 = vpop.f32.mrb[0].mxu0
        %2183 = vmatprep.mubr.bf16.mxu0 0
        %2184 = vmatmul.mubr.bf16.gmra.mrb[0].mxu0 %v2093
        %v2185 = vpop.f32.mrb[0].mxu0
        %v2186 = vadd.f32 0.0, %v2185
        %v2187 = vpop.f32.mrb[0].mxu0
        %v2188 = vpop.f32.mrb[0].mxu0
        %v2189 = vadd.f32 0.0, %v2188
        %v2190 = vpop.f32.mrb[0].mxu0
        %2191 = vmatprep.mubr.bf16.mxu0 0
        %2192 = vmatmul.mubr.bf16.gmra.mrb[0].mxu0 %v2094
        %v2193 = vpop.f32.mrb[0].mxu0
        %v2194 = vadd.f32 0.0, %v2193
        %v2195 = vpop.f32.mrb[0].mxu0
        %v2196 = vpop.f32.mrb[0].mxu0
        %v2197 = vadd.f32 0.0, %v2196
        %v2198 = vpop.f32.mrb[0].mxu0
        %2199 = vdwg.mxu0
        %v2216 = vunpack.c.l.b16 %v1471
        %v2217 = vunpack.c.l.b16 %v1472
        %v2218 = vunpack.c.l.b16 %v1473
        %v2219 = vunpack.c.l.b16 %v1474
        %v2220 = vunpack.c.l.b16 %v1475
        %v2221 = vunpack.c.l.b16 %v1476
        %v2222 = vunpack.c.l.b16 %v1477
        %v2223 = vunpack.c.l.b16 %v1478
        %v2224 = vunpack.c.l.b16 %v1479
        %v2225 = vunpack.c.l.b16 %v1480
        %v2226 = vunpack.c.l.b16 %v1481
        %v2227 = vunpack.c.l.b16 %v1482
        %v2228 = vunpack.c.l.b16 %v1483
        %v2229 = vunpack.c.l.b16 %v1484
        %v2230 = vunpack.c.l.b16 %v1485
        %v2231 = vunpack.c.l.b16 %v1486
        %v2232 = vpack.c.b16 %v2217, %v2216
        %v2233 = vpack.c.b16 %v2219, %v2218
        %v2234 = vpack.c.b16 %v2221, %v2220
        %v2235 = vpack.c.b16 %v2223, %v2222
        %v2236 = vpack.c.b16 %v2225, %v2224
        %v2237 = vpack.c.b16 %v2227, %v2226
        %v2238 = vpack.c.b16 %v2229, %v2228
        %v2239 = vpack.c.b16 %v2231, %v2230
        %2248 = vmatprep.subr.bf16.mxu0 0
        %2249 = vmatpush1.bf16.msra.mxu0 %v1463
        %2250 = vmatprep.subr.bf16.mxu0 0
        %2251 = vmatpush1.bf16.msra.mxu0 %v1464
        %2252 = vmatprep.subr.bf16.mxu0 0
        %2253 = vmatpush1.bf16.msra.mxu0 %v1465
        %2254 = vmatprep.subr.bf16.mxu0 0
        %2255 = vmatpush1.bf16.msra.mxu0 %v1466
        %2256 = vmatprep.subr.bf16.mxu0 0
        %2257 = vmatpush1.bf16.msra.mxu0 %v1467
        %2258 = vmatprep.subr.bf16.mxu0 0
        %2259 = vmatpush1.bf16.msra.mxu0 %v1468
        %2260 = vmatprep.subr.bf16.mxu0 0
        %2261 = vmatpush1.bf16.msra.mxu0 %v1469
        %2262 = vmatprep.subr.bf16.mxu0 0
        %2263 = vmatpush1.bf16.msra.mxu0 %v1470
        %2264 = vmatprep.subr.bf16.mxu0 0
        %2265 = vmatpush1.bf16.msra.mxu0 0
        %2266 = vmatprep.subr.bf16.mxu0 0
        %2267 = vmatpush1.bf16.msra.mxu0 0
        %2268 = vmatprep.subr.bf16.mxu0 0
        %2269 = vmatpush1.bf16.msra.mxu0 0
        %2270 = vmatprep.subr.bf16.mxu0 0
        %2271 = vmatpush1.bf16.msra.mxu0 0
        %2272 = vmatprep.subr.bf16.mxu0 0
        %2273 = vmatpush1.bf16.msra.mxu0 0
        %2274 = vmatprep.subr.bf16.mxu0 0
        %2275 = vmatpush1.bf16.msra.mxu0 0
        %2276 = vmatprep.subr.bf16.mxu0 0
        %2277 = vmatpush1.bf16.msra.mxu0 0
        %2278 = vmatprep.subr.bf16.mxu0 0
        %2279 = vmatpush1.bf16.msra.mxu0 0
        %2280 = vmatprep.mubr.bf16.mxu0 0
        %2281 = vmatmul.mubr.bf16.gmra.mrb[0].mxu0 %v2232
        %v2282 = vpop.f32.mrb[0].mxu0
        %v2283 = vadd.f32 %v2138, %v2282
        %v2284 = vpop.f32.mrb[0].mxu0
        %v2285 = vpop.f32.mrb[0].mxu0
        %v2286 = vadd.f32 %v2141, %v2285
        %v2287 = vpop.f32.mrb[0].mxu0
        %2288 = vmatprep.mubr.bf16.mxu0 0
        %2289 = vmatmul.mubr.bf16.gmra.mrb[0].mxu0 %v2233
        %v2290 = vpop.f32.mrb[0].mxu0
        %v2291 = vadd.f32 %v2146, %v2290
        %v2292 = vpop.f32.mrb[0].mxu0
        %v2293 = vpop.f32.mrb[0].mxu0
        %v2294 = vadd.f32 %v2149, %v2293
        %v2295 = vpop.f32.mrb[0].mxu0
        %2296 = vmatprep.mubr.bf16.mxu0 0
        %2297 = vmatmul.mubr.bf16.gmra.mrb[0].mxu0 %v2234
        %v2298 = vpop.f32.mrb[0].mxu0
        %v2299 = vadd.f32 %v2154, %v2298
        %v2300 = vpop.f32.mrb[0].mxu0
        %v2301 = vpop.f32.mrb[0].mxu0
        %v2302 = vadd.f32 %v2157, %v2301
        %v2303 = vpop.f32.mrb[0].mxu0
        %2304 = vmatprep.mubr.bf16.mxu0 0
        %2305 = vmatmul.mubr.bf16.gmra.mrb[0].mxu0 %v2235
        %v2306 = vpop.f32.mrb[0].mxu0
        %v2307 = vadd.f32 %v2162, %v2306
        %v2308 = vpop.f32.mrb[0].mxu0
        %v2309 = vpop.f32.mrb[0].mxu0
        %v2310 = vadd.f32 %v2165, %v2309
        %v2311 = vpop.f32.mrb[0].mxu0
        %2312 = vmatprep.mubr.bf16.mxu0 0
        %2313 = vmatmul.mubr.bf16.gmra.mrb[0].mxu0 %v2236
        %v2314 = vpop.f32.mrb[0].mxu0
        %v2315 = vadd.f32 %v2170, %v2314
        %v2316 = vpop.f32.mrb[0].mxu0
        %v2317 = vpop.f32.mrb[0].mxu0
        %v2318 = vadd.f32 %v2173, %v2317
        %v2319 = vpop.f32.mrb[0].mxu0
        %2320 = vmatprep.mubr.bf16.mxu0 0
        %2321 = vmatmul.mubr.bf16.gmra.mrb[0].mxu0 %v2237
        %v2322 = vpop.f32.mrb[0].mxu0
        %v2323 = vadd.f32 %v2178, %v2322
        %v2324 = vpop.f32.mrb[0].mxu0
        %v2325 = vpop.f32.mrb[0].mxu0
        %v2326 = vadd.f32 %v2181, %v2325
        %v2327 = vpop.f32.mrb[0].mxu0
        %2328 = vmatprep.mubr.bf16.mxu0 0
        %2329 = vmatmul.mubr.bf16.gmra.mrb[0].mxu0 %v2238
        %v2330 = vpop.f32.mrb[0].mxu0
        %v2331 = vadd.f32 %v2186, %v2330
        %v2332 = vpop.f32.mrb[0].mxu0
        %v2333 = vpop.f32.mrb[0].mxu0
        %v2334 = vadd.f32 %v2189, %v2333
        %v2335 = vpop.f32.mrb[0].mxu0
        %2336 = vmatprep.mubr.bf16.mxu0 0
        %2337 = vmatmul.mubr.bf16.gmra.mrb[0].mxu0 %v2239
        %v2338 = vpop.f32.mrb[0].mxu0
        %v2339 = vadd.f32 %v2194, %v2338
        %v2340 = vpop.f32.mrb[0].mxu0
        %v2341 = vpop.f32.mrb[0].mxu0
        %v2342 = vadd.f32 %v2197, %v2341
        %v2343 = vpop.f32.mrb[0].mxu0
        %2344 = vdwg.mxu0
        %v2345 = vadd.s32 %v335, 129
        %v2346 = vadd.s32 %v336, 129
        %v2347 = vadd.s32 %v337, 129
        %v2348 = vadd.s32 %v338, 129
        %v2349 = vadd.s32 %v339, 129
        %v2350 = vadd.s32 %v340, 129
        %v2351 = vadd.s32 %v341, 129
        %v2352 = vadd.s32 %v342, 129
        %v2353 = vadd.s32 %v343, 129
        %v2354 = vadd.s32 %v344, 129
        %v2355 = vadd.s32 %v345, 129
        %v2356 = vadd.s32 %v346, 129
        %v2357 = vadd.s32 %v347, 129
        %v2358 = vadd.s32 %v348, 129
        %v2359 = vadd.s32 %v349, 129
        %v2360 = vadd.s32 %v350, 129
        %vm2361 = vcmp.eq.s32.totalorder %v371, %v2345
        %vm2362 = vcmp.eq.s32.totalorder %v371, %v2346
        %vm2363 = vcmp.eq.s32.totalorder %v371, %v2347
        %vm2364 = vcmp.eq.s32.totalorder %v371, %v2348
        %vm2365 = vcmp.eq.s32.totalorder %v371, %v2349
        %vm2366 = vcmp.eq.s32.totalorder %v371, %v2350
        %vm2367 = vcmp.eq.s32.totalorder %v371, %v2351
        %vm2368 = vcmp.eq.s32.totalorder %v371, %v2352
        %vm2369 = vcmp.eq.s32.totalorder %v371, %v2353
        %vm2370 = vcmp.eq.s32.totalorder %v371, %v2354
        %vm2371 = vcmp.eq.s32.totalorder %v371, %v2355
        %vm2372 = vcmp.eq.s32.totalorder %v371, %v2356
        %vm2373 = vcmp.eq.s32.totalorder %v371, %v2357
        %vm2374 = vcmp.eq.s32.totalorder %v371, %v2358
        %vm2375 = vcmp.eq.s32.totalorder %v371, %v2359
        %vm2376 = vcmp.eq.s32.totalorder %v371, %v2360
        %v2377 = vsel %vm2361, 1, 0
        %v2378 = vsel %vm2362, 1, 0
        %v2379 = vsel %vm2363, 1, 0
        %v2380 = vsel %vm2364, 1, 0
        %v2381 = vsel %vm2365, 1, 0
        %v2382 = vsel %vm2366, 1, 0
        %v2383 = vsel %vm2367, 1, 0
        %v2384 = vsel %vm2368, 1, 0
        %v2385 = vsel %vm2369, 1, 0
        %v2386 = vsel %vm2370, 1, 0
        %v2387 = vsel %vm2371, 1, 0
        %v2388 = vsel %vm2372, 1, 0
        %v2389 = vsel %vm2373, 1, 0
        %v2390 = vsel %vm2374, 1, 0
        %v2391 = vsel %vm2375, 1, 0
        %v2392 = vsel %vm2376, 1, 0
        %v2393 = vcvt.s32.f32 %v2377
        %v2394 = vcvt.s32.f32 %v2378
        %v2395 = vcvt.s32.f32 %v2379
        %v2396 = vcvt.s32.f32 %v2380
        %v2397 = vcvt.s32.f32 %v2381
        %v2398 = vcvt.s32.f32 %v2382
        %v2399 = vcvt.s32.f32 %v2383
        %v2400 = vcvt.s32.f32 %v2384
        %v2401 = vcvt.s32.f32 %v2385
        %v2402 = vcvt.s32.f32 %v2386
        %v2403 = vcvt.s32.f32 %v2387
        %v2404 = vcvt.s32.f32 %v2388
        %v2405 = vcvt.s32.f32 %v2389
        %v2406 = vcvt.s32.f32 %v2390
        %v2407 = vcvt.s32.f32 %v2391
        %v2408 = vcvt.s32.f32 %v2392
        %v2409 = vpack.c.bf16 %v2394, %v2393
        %v2410 = vpack.c.bf16 %v2396, %v2395
        %v2411 = vpack.c.bf16 %v2398, %v2397
        %v2412 = vpack.c.bf16 %v2400, %v2399
        %v2413 = vpack.c.bf16 %v2402, %v2401
        %v2414 = vpack.c.bf16 %v2404, %v2403
        %v2415 = vpack.c.bf16 %v2406, %v2405
        %v2416 = vpack.c.bf16 %v2408, %v2407
        %v2417 = vadd.bf16 %v2409, 0
        %v2418 = vadd.bf16 %v2410, 0
        %v2419 = vadd.bf16 %v2411, 0
        %v2420 = vadd.bf16 %v2412, 0
        %v2421 = vadd.bf16 %v2413, 0
        %v2422 = vadd.bf16 %v2414, 0
        %v2423 = vadd.bf16 %v2415, 0
        %v2424 = vadd.bf16 %v2416, 0
        %vm2425 = vcmp.eq.s32.totalorder %v440, %v2345
        %vm2426 = vcmp.eq.s32.totalorder %v440, %v2346
        %vm2427 = vcmp.eq.s32.totalorder %v440, %v2347
        %vm2428 = vcmp.eq.s32.totalorder %v440, %v2348
        %vm2429 = vcmp.eq.s32.totalorder %v440, %v2349
        %vm2430 = vcmp.eq.s32.totalorder %v440, %v2350
        %vm2431 = vcmp.eq.s32.totalorder %v440, %v2351
        %vm2432 = vcmp.eq.s32.totalorder %v440, %v2352
        %vm2433 = vcmp.eq.s32.totalorder %v440, %v2353
        %vm2434 = vcmp.eq.s32.totalorder %v440, %v2354
        %vm2435 = vcmp.eq.s32.totalorder %v440, %v2355
        %vm2436 = vcmp.eq.s32.totalorder %v440, %v2356
        %vm2437 = vcmp.eq.s32.totalorder %v440, %v2357
        %vm2438 = vcmp.eq.s32.totalorder %v440, %v2358
        %vm2439 = vcmp.eq.s32.totalorder %v440, %v2359
        %vm2440 = vcmp.eq.s32.totalorder %v440, %v2360
        %v2441 = vsel %vm2425, 1, 0
        %v2442 = vsel %vm2426, 1, 0
        %v2443 = vsel %vm2427, 1, 0
        %v2444 = vsel %vm2428, 1, 0
        %v2445 = vsel %vm2429, 1, 0
        %v2446 = vsel %vm2430, 1, 0
        %v2447 = vsel %vm2431, 1, 0
        %v2448 = vsel %vm2432, 1, 0
        %v2449 = vsel %vm2433, 1, 0
        %v2450 = vsel %vm2434, 1, 0
        %v2451 = vsel %vm2435, 1, 0
        %v2452 = vsel %vm2436, 1, 0
        %v2453 = vsel %vm2437, 1, 0
        %v2454 = vsel %vm2438, 1, 0
        %v2455 = vsel %vm2439, 1, 0
        %v2456 = vsel %vm2440, 1, 0
        %v2457 = vcvt.s32.f32 %v2441
        %v2458 = vcvt.s32.f32 %v2442
        %v2459 = vcvt.s32.f32 %v2443
        %v2460 = vcvt.s32.f32 %v2444
        %v2461 = vcvt.s32.f32 %v2445
        %v2462 = vcvt.s32.f32 %v2446
        %v2463 = vcvt.s32.f32 %v2447
        %v2464 = vcvt.s32.f32 %v2448
        %v2465 = vcvt.s32.f32 %v2449
        %v2466 = vcvt.s32.f32 %v2450
        %v2467 = vcvt.s32.f32 %v2451
        %v2468 = vcvt.s32.f32 %v2452
        %v2469 = vcvt.s32.f32 %v2453
        %v2470 = vcvt.s32.f32 %v2454
        %v2471 = vcvt.s32.f32 %v2455
        %v2472 = vcvt.s32.f32 %v2456
        %v2473 = vpack.c.bf16 %v2458, %v2457
        %v2474 = vpack.c.bf16 %v2460, %v2459
        %v2475 = vpack.c.bf16 %v2462, %v2461
        %v2476 = vpack.c.bf16 %v2464, %v2463
        %v2477 = vpack.c.bf16 %v2466, %v2465
        %v2478 = vpack.c.bf16 %v2468, %v2467
        %v2479 = vpack.c.bf16 %v2470, %v2469
        %v2480 = vpack.c.bf16 %v2472, %v2471
        %v2481 = vadd.bf16 %v2417, %v2473
        %v2482 = vadd.bf16 %v2418, %v2474
        %v2483 = vadd.bf16 %v2419, %v2475
        %v2484 = vadd.bf16 %v2420, %v2476
        %v2485 = vadd.bf16 %v2421, %v2477
        %v2486 = vadd.bf16 %v2422, %v2478
        %v2487 = vadd.bf16 %v2423, %v2479
        %v2488 = vadd.bf16 %v2424, %v2480
        %vm2489 = vcmp.eq.s32.totalorder %v509, %v2345
        %vm2490 = vcmp.eq.s32.totalorder %v509, %v2346
        %vm2491 = vcmp.eq.s32.totalorder %v509, %v2347
        %vm2492 = vcmp.eq.s32.totalorder %v509, %v2348
        %vm2493 = vcmp.eq.s32.totalorder %v509, %v2349
        %vm2494 = vcmp.eq.s32.totalorder %v509, %v2350
        %vm2495 = vcmp.eq.s32.totalorder %v509, %v2351
        %vm2496 = vcmp.eq.s32.totalorder %v509, %v2352
        %vm2497 = vcmp.eq.s32.totalorder %v509, %v2353
        %vm2498 = vcmp.eq.s32.totalorder %v509, %v2354
        %vm2499 = vcmp.eq.s32.totalorder %v509, %v2355
        %vm2500 = vcmp.eq.s32.totalorder %v509, %v2356
        %vm2501 = vcmp.eq.s32.totalorder %v509, %v2357
        %vm2502 = vcmp.eq.s32.totalorder %v509, %v2358
        %vm2503 = vcmp.eq.s32.totalorder %v509, %v2359
        %vm2504 = vcmp.eq.s32.totalorder %v509, %v2360
        %v2505 = vsel %vm2489, 1, 0
        %v2506 = vsel %vm2490, 1, 0
        %v2507 = vsel %vm2491, 1, 0
        %v2508 = vsel %vm2492, 1, 0
        %v2509 = vsel %vm2493, 1, 0
        %v2510 = vsel %vm2494, 1, 0
        %v2511 = vsel %vm2495, 1, 0
        %v2512 = vsel %vm2496, 1, 0
        %v2513 = vsel %vm2497, 1, 0
        %v2514 = vsel %vm2498, 1, 0
        %v2515 = vsel %vm2499, 1, 0
        %v2516 = vsel %vm2500, 1, 0
        %v2517 = vsel %vm2501, 1, 0
        %v2518 = vsel %vm2502, 1, 0
        %v2519 = vsel %vm2503, 1, 0
        %v2520 = vsel %vm2504, 1, 0
        %v2521 = vcvt.s32.f32 %v2505
        %v2522 = vcvt.s32.f32 %v2506
        %v2523 = vcvt.s32.f32 %v2507
        %v2524 = vcvt.s32.f32 %v2508
        %v2525 = vcvt.s32.f32 %v2509
        %v2526 = vcvt.s32.f32 %v2510
        %v2527 = vcvt.s32.f32 %v2511
        %v2528 = vcvt.s32.f32 %v2512
        %v2529 = vcvt.s32.f32 %v2513
        %v2530 = vcvt.s32.f32 %v2514
        %v2531 = vcvt.s32.f32 %v2515
        %v2532 = vcvt.s32.f32 %v2516
        %v2533 = vcvt.s32.f32 %v2517
        %v2534 = vcvt.s32.f32 %v2518
        %v2535 = vcvt.s32.f32 %v2519
        %v2536 = vcvt.s32.f32 %v2520
        %v2537 = vpack.c.bf16 %v2522, %v2521
        %v2538 = vpack.c.bf16 %v2524, %v2523
        %v2539 = vpack.c.bf16 %v2526, %v2525
        %v2540 = vpack.c.bf16 %v2528, %v2527
        %v2541 = vpack.c.bf16 %v2530, %v2529
        %v2542 = vpack.c.bf16 %v2532, %v2531
        %v2543 = vpack.c.bf16 %v2534, %v2533
        %v2544 = vpack.c.bf16 %v2536, %v2535
        %v2545 = vadd.bf16 %v2481, %v2537
        %v2546 = vadd.bf16 %v2482, %v2538
        %v2547 = vadd.bf16 %v2483, %v2539
        %v2548 = vadd.bf16 %v2484, %v2540
        %v2549 = vadd.bf16 %v2485, %v2541
        %v2550 = vadd.bf16 %v2486, %v2542
        %v2551 = vadd.bf16 %v2487, %v2543
        %v2552 = vadd.bf16 %v2488, %v2544
        %vm2553 = vcmp.eq.s32.totalorder %v578, %v2345
        %vm2554 = vcmp.eq.s32.totalorder %v578, %v2346
        %vm2555 = vcmp.eq.s32.totalorder %v578, %v2347
        %vm2556 = vcmp.eq.s32.totalorder %v578, %v2348
        %vm2557 = vcmp.eq.s32.totalorder %v578, %v2349
        %vm2558 = vcmp.eq.s32.totalorder %v578, %v2350
        %vm2559 = vcmp.eq.s32.totalorder %v578, %v2351
        %vm2560 = vcmp.eq.s32.totalorder %v578, %v2352
        %vm2561 = vcmp.eq.s32.totalorder %v578, %v2353
        %vm2562 = vcmp.eq.s32.totalorder %v578, %v2354
        %vm2563 = vcmp.eq.s32.totalorder %v578, %v2355
        %vm2564 = vcmp.eq.s32.totalorder %v578, %v2356
        %vm2565 = vcmp.eq.s32.totalorder %v578, %v2357
        %vm2566 = vcmp.eq.s32.totalorder %v578, %v2358
        %vm2567 = vcmp.eq.s32.totalorder %v578, %v2359
        %vm2568 = vcmp.eq.s32.totalorder %v578, %v2360
        %v2569 = vsel %vm2553, 1, 0
        %v2570 = vsel %vm2554, 1, 0
        %v2571 = vsel %vm2555, 1, 0
        %v2572 = vsel %vm2556, 1, 0
        %v2573 = vsel %vm2557, 1, 0
        %v2574 = vsel %vm2558, 1, 0
        %v2575 = vsel %vm2559, 1, 0
        %v2576 = vsel %vm2560, 1, 0
        %v2577 = vsel %vm2561, 1, 0
        %v2578 = vsel %vm2562, 1, 0
        %v2579 = vsel %vm2563, 1, 0
        %v2580 = vsel %vm2564, 1, 0
        %v2581 = vsel %vm2565, 1, 0
        %v2582 = vsel %vm2566, 1, 0
        %v2583 = vsel %vm2567, 1, 0
        %v2584 = vsel %vm2568, 1, 0
        %v2585 = vcvt.s32.f32 %v2569
        %v2586 = vcvt.s32.f32 %v2570
        %v2587 = vcvt.s32.f32 %v2571
        %v2588 = vcvt.s32.f32 %v2572
        %v2589 = vcvt.s32.f32 %v2573
        %v2590 = vcvt.s32.f32 %v2574
        %v2591 = vcvt.s32.f32 %v2575
        %v2592 = vcvt.s32.f32 %v2576
        %v2593 = vcvt.s32.f32 %v2577
        %v2594 = vcvt.s32.f32 %v2578
        %v2595 = vcvt.s32.f32 %v2579
        %v2596 = vcvt.s32.f32 %v2580
        %v2597 = vcvt.s32.f32 %v2581
        %v2598 = vcvt.s32.f32 %v2582
        %v2599 = vcvt.s32.f32 %v2583
        %v2600 = vcvt.s32.f32 %v2584
        %v2601 = vpack.c.bf16 %v2586, %v2585
        %v2602 = vpack.c.bf16 %v2588, %v2587
        %v2603 = vpack.c.bf16 %v2590, %v2589
        %v2604 = vpack.c.bf16 %v2592, %v2591
        %v2605 = vpack.c.bf16 %v2594, %v2593
        %v2606 = vpack.c.bf16 %v2596, %v2595
        %v2607 = vpack.c.bf16 %v2598, %v2597
        %v2608 = vpack.c.bf16 %v2600, %v2599
        %v2609 = vadd.bf16 %v2545, %v2601
        %v2610 = vadd.bf16 %v2546, %v2602
        %v2611 = vadd.bf16 %v2547, %v2603
        %v2612 = vadd.bf16 %v2548, %v2604
        %v2613 = vadd.bf16 %v2549, %v2605
        %v2614 = vadd.bf16 %v2550, %v2606
        %v2615 = vadd.bf16 %v2551, %v2607
        %v2616 = vadd.bf16 %v2552, %v2608
        %vm2617 = vcmp.eq.s32.totalorder %v647, %v2345
        %vm2618 = vcmp.eq.s32.totalorder %v647, %v2346
        %vm2619 = vcmp.eq.s32.totalorder %v647, %v2347
        %vm2620 = vcmp.eq.s32.totalorder %v647, %v2348
        %vm2621 = vcmp.eq.s32.totalorder %v647, %v2349
        %vm2622 = vcmp.eq.s32.totalorder %v647, %v2350
        %vm2623 = vcmp.eq.s32.totalorder %v647, %v2351
        %vm2624 = vcmp.eq.s32.totalorder %v647, %v2352
        %vm2625 = vcmp.eq.s32.totalorder %v647, %v2353
        %vm2626 = vcmp.eq.s32.totalorder %v647, %v2354
        %vm2627 = vcmp.eq.s32.totalorder %v647, %v2355
        %vm2628 = vcmp.eq.s32.totalorder %v647, %v2356
        %vm2629 = vcmp.eq.s32.totalorder %v647, %v2357
        %vm2630 = vcmp.eq.s32.totalorder %v647, %v2358
        %vm2631 = vcmp.eq.s32.totalorder %v647, %v2359
        %vm2632 = vcmp.eq.s32.totalorder %v647, %v2360
        %v2633 = vsel %vm2617, 1, 0
        %v2634 = vsel %vm2618, 1, 0
        %v2635 = vsel %vm2619, 1, 0
        %v2636 = vsel %vm2620, 1, 0
        %v2637 = vsel %vm2621, 1, 0
        %v2638 = vsel %vm2622, 1, 0
        %v2639 = vsel %vm2623, 1, 0
        %v2640 = vsel %vm2624, 1, 0
        %v2641 = vsel %vm2625, 1, 0
        %v2642 = vsel %vm2626, 1, 0
        %v2643 = vsel %vm2627, 1, 0
        %v2644 = vsel %vm2628, 1, 0
        %v2645 = vsel %vm2629, 1, 0
        %v2646 = vsel %vm2630, 1, 0
        %v2647 = vsel %vm2631, 1, 0
        %v2648 = vsel %vm2632, 1, 0
        %v2649 = vcvt.s32.f32 %v2633
        %v2650 = vcvt.s32.f32 %v2634
        %v2651 = vcvt.s32.f32 %v2635
        %v2652 = vcvt.s32.f32 %v2636
        %v2653 = vcvt.s32.f32 %v2637
        %v2654 = vcvt.s32.f32 %v2638
        %v2655 = vcvt.s32.f32 %v2639
        %v2656 = vcvt.s32.f32 %v2640
        %v2657 = vcvt.s32.f32 %v2641
        %v2658 = vcvt.s32.f32 %v2642
        %v2659 = vcvt.s32.f32 %v2643
        %v2660 = vcvt.s32.f32 %v2644
        %v2661 = vcvt.s32.f32 %v2645
        %v2662 = vcvt.s32.f32 %v2646
        %v2663 = vcvt.s32.f32 %v2647
        %v2664 = vcvt.s32.f32 %v2648
        %v2665 = vpack.c.bf16 %v2650, %v2649
        %v2666 = vpack.c.bf16 %v2652, %v2651
        %v2667 = vpack.c.bf16 %v2654, %v2653
        %v2668 = vpack.c.bf16 %v2656, %v2655
        %v2669 = vpack.c.bf16 %v2658, %v2657
        %v2670 = vpack.c.bf16 %v2660, %v2659
        %v2671 = vpack.c.bf16 %v2662, %v2661
        %v2672 = vpack.c.bf16 %v2664, %v2663
        %v2673 = vadd.bf16 %v2609, %v2665
        %v2674 = vadd.bf16 %v2610, %v2666
        %v2675 = vadd.bf16 %v2611, %v2667
        %v2676 = vadd.bf16 %v2612, %v2668
        %v2677 = vadd.bf16 %v2613, %v2669
        %v2678 = vadd.bf16 %v2614, %v2670
        %v2679 = vadd.bf16 %v2615, %v2671
        %v2680 = vadd.bf16 %v2616, %v2672
        %vm2681 = vcmp.eq.s32.totalorder %v716, %v2345
        %vm2682 = vcmp.eq.s32.totalorder %v716, %v2346
        %vm2683 = vcmp.eq.s32.totalorder %v716, %v2347
        %vm2684 = vcmp.eq.s32.totalorder %v716, %v2348
        %vm2685 = vcmp.eq.s32.totalorder %v716, %v2349
        %vm2686 = vcmp.eq.s32.totalorder %v716, %v2350
        %vm2687 = vcmp.eq.s32.totalorder %v716, %v2351
        %vm2688 = vcmp.eq.s32.totalorder %v716, %v2352
        %vm2689 = vcmp.eq.s32.totalorder %v716, %v2353
        %vm2690 = vcmp.eq.s32.totalorder %v716, %v2354
        %vm2691 = vcmp.eq.s32.totalorder %v716, %v2355
        %vm2692 = vcmp.eq.s32.totalorder %v716, %v2356
        %vm2693 = vcmp.eq.s32.totalorder %v716, %v2357
        %vm2694 = vcmp.eq.s32.totalorder %v716, %v2358
        %vm2695 = vcmp.eq.s32.totalorder %v716, %v2359
        %vm2696 = vcmp.eq.s32.totalorder %v716, %v2360
        %v2697 = vsel %vm2681, 1, 0
        %v2698 = vsel %vm2682, 1, 0
        %v2699 = vsel %vm2683, 1, 0
        %v2700 = vsel %vm2684, 1, 0
        %v2701 = vsel %vm2685, 1, 0
        %v2702 = vsel %vm2686, 1, 0
        %v2703 = vsel %vm2687, 1, 0
        %v2704 = vsel %vm2688, 1, 0
        %v2705 = vsel %vm2689, 1, 0
        %v2706 = vsel %vm2690, 1, 0
        %v2707 = vsel %vm2691, 1, 0
        %v2708 = vsel %vm2692, 1, 0
        %v2709 = vsel %vm2693, 1, 0
        %v2710 = vsel %vm2694, 1, 0
        %v2711 = vsel %vm2695, 1, 0
        %v2712 = vsel %vm2696, 1, 0
        %v2713 = vcvt.s32.f32 %v2697
        %v2714 = vcvt.s32.f32 %v2698
        %v2715 = vcvt.s32.f32 %v2699
        %v2716 = vcvt.s32.f32 %v2700
        %v2717 = vcvt.s32.f32 %v2701
        %v2718 = vcvt.s32.f32 %v2702
        %v2719 = vcvt.s32.f32 %v2703
        %v2720 = vcvt.s32.f32 %v2704
        %v2721 = vcvt.s32.f32 %v2705
        %v2722 = vcvt.s32.f32 %v2706
        %v2723 = vcvt.s32.f32 %v2707
        %v2724 = vcvt.s32.f32 %v2708
        %v2725 = vcvt.s32.f32 %v2709
        %v2726 = vcvt.s32.f32 %v2710
        %v2727 = vcvt.s32.f32 %v2711
        %v2728 = vcvt.s32.f32 %v2712
        %v2729 = vpack.c.bf16 %v2714, %v2713
        %v2730 = vpack.c.bf16 %v2716, %v2715
        %v2731 = vpack.c.bf16 %v2718, %v2717
        %v2732 = vpack.c.bf16 %v2720, %v2719
        %v2733 = vpack.c.bf16 %v2722, %v2721
        %v2734 = vpack.c.bf16 %v2724, %v2723
        %v2735 = vpack.c.bf16 %v2726, %v2725
        %v2736 = vpack.c.bf16 %v2728, %v2727
        %v2737 = vadd.bf16 %v2673, %v2729
        %v2738 = vadd.bf16 %v2674, %v2730
        %v2739 = vadd.bf16 %v2675, %v2731
        %v2740 = vadd.bf16 %v2676, %v2732
        %v2741 = vadd.bf16 %v2677, %v2733
        %v2742 = vadd.bf16 %v2678, %v2734
        %v2743 = vadd.bf16 %v2679, %v2735
        %v2744 = vadd.bf16 %v2680, %v2736
        %vm2745 = vcmp.eq.s32.totalorder %v785, %v2345
        %vm2746 = vcmp.eq.s32.totalorder %v785, %v2346
        %vm2747 = vcmp.eq.s32.totalorder %v785, %v2347
        %vm2748 = vcmp.eq.s32.totalorder %v785, %v2348
        %vm2749 = vcmp.eq.s32.totalorder %v785, %v2349
        %vm2750 = vcmp.eq.s32.totalorder %v785, %v2350
        %vm2751 = vcmp.eq.s32.totalorder %v785, %v2351
        %vm2752 = vcmp.eq.s32.totalorder %v785, %v2352
        %vm2753 = vcmp.eq.s32.totalorder %v785, %v2353
        %vm2754 = vcmp.eq.s32.totalorder %v785, %v2354
        %vm2755 = vcmp.eq.s32.totalorder %v785, %v2355
        %vm2756 = vcmp.eq.s32.totalorder %v785, %v2356
        %vm2757 = vcmp.eq.s32.totalorder %v785, %v2357
        %vm2758 = vcmp.eq.s32.totalorder %v785, %v2358
        %vm2759 = vcmp.eq.s32.totalorder %v785, %v2359
        %vm2760 = vcmp.eq.s32.totalorder %v785, %v2360
        %v2761 = vsel %vm2745, 1, 0
        %v2762 = vsel %vm2746, 1, 0
        %v2763 = vsel %vm2747, 1, 0
        %v2764 = vsel %vm2748, 1, 0
        %v2765 = vsel %vm2749, 1, 0
        %v2766 = vsel %vm2750, 1, 0
        %v2767 = vsel %vm2751, 1, 0
        %v2768 = vsel %vm2752, 1, 0
        %v2769 = vsel %vm2753, 1, 0
        %v2770 = vsel %vm2754, 1, 0
        %v2771 = vsel %vm2755, 1, 0
        %v2772 = vsel %vm2756, 1, 0
        %v2773 = vsel %vm2757, 1, 0
        %v2774 = vsel %vm2758, 1, 0
        %v2775 = vsel %vm2759, 1, 0
        %v2776 = vsel %vm2760, 1, 0
        %v2777 = vcvt.s32.f32 %v2761
        %v2778 = vcvt.s32.f32 %v2762
        %v2779 = vcvt.s32.f32 %v2763
        %v2780 = vcvt.s32.f32 %v2764
        %v2781 = vcvt.s32.f32 %v2765
        %v2782 = vcvt.s32.f32 %v2766
        %v2783 = vcvt.s32.f32 %v2767
        %v2784 = vcvt.s32.f32 %v2768
        %v2785 = vcvt.s32.f32 %v2769
        %v2786 = vcvt.s32.f32 %v2770
        %v2787 = vcvt.s32.f32 %v2771
        %v2788 = vcvt.s32.f32 %v2772
        %v2789 = vcvt.s32.f32 %v2773
        %v2790 = vcvt.s32.f32 %v2774
        %v2791 = vcvt.s32.f32 %v2775
        %v2792 = vcvt.s32.f32 %v2776
        %v2793 = vpack.c.bf16 %v2778, %v2777
        %v2794 = vpack.c.bf16 %v2780, %v2779
        %v2795 = vpack.c.bf16 %v2782, %v2781
        %v2796 = vpack.c.bf16 %v2784, %v2783
        %v2797 = vpack.c.bf16 %v2786, %v2785
        %v2798 = vpack.c.bf16 %v2788, %v2787
        %v2799 = vpack.c.bf16 %v2790, %v2789
        %v2800 = vpack.c.bf16 %v2792, %v2791
        %v2801 = vadd.bf16 %v2737, %v2793
        %v2802 = vadd.bf16 %v2738, %v2794
        %v2803 = vadd.bf16 %v2739, %v2795
        %v2804 = vadd.bf16 %v2740, %v2796
        %v2805 = vadd.bf16 %v2741, %v2797
        %v2806 = vadd.bf16 %v2742, %v2798
        %v2807 = vadd.bf16 %v2743, %v2799
        %v2808 = vadd.bf16 %v2744, %v2800
        %vm2809 = vcmp.eq.s32.totalorder %v854, %v2345
        %vm2810 = vcmp.eq.s32.totalorder %v854, %v2346
        %vm2811 = vcmp.eq.s32.totalorder %v854, %v2347
        %vm2812 = vcmp.eq.s32.totalorder %v854, %v2348
        %vm2813 = vcmp.eq.s32.totalorder %v854, %v2349
        %vm2814 = vcmp.eq.s32.totalorder %v854, %v2350
        %vm2815 = vcmp.eq.s32.totalorder %v854, %v2351
        %vm2816 = vcmp.eq.s32.totalorder %v854, %v2352
        %vm2817 = vcmp.eq.s32.totalorder %v854, %v2353
        %vm2818 = vcmp.eq.s32.totalorder %v854, %v2354
        %vm2819 = vcmp.eq.s32.totalorder %v854, %v2355
        %vm2820 = vcmp.eq.s32.totalorder %v854, %v2356
        %vm2821 = vcmp.eq.s32.totalorder %v854, %v2357
        %vm2822 = vcmp.eq.s32.totalorder %v854, %v2358
        %vm2823 = vcmp.eq.s32.totalorder %v854, %v2359
        %vm2824 = vcmp.eq.s32.totalorder %v854, %v2360
        %v2825 = vsel %vm2809, 1, 0
        %v2826 = vsel %vm2810, 1, 0
        %v2827 = vsel %vm2811, 1, 0
        %v2828 = vsel %vm2812, 1, 0
        %v2829 = vsel %vm2813, 1, 0
        %v2830 = vsel %vm2814, 1, 0
        %v2831 = vsel %vm2815, 1, 0
        %v2832 = vsel %vm2816, 1, 0
        %v2833 = vsel %vm2817, 1, 0
        %v2834 = vsel %vm2818, 1, 0
        %v2835 = vsel %vm2819, 1, 0
        %v2836 = vsel %vm2820, 1, 0
        %v2837 = vsel %vm2821, 1, 0
        %v2838 = vsel %vm2822, 1, 0
        %v2839 = vsel %vm2823, 1, 0
        %v2840 = vsel %vm2824, 1, 0
        %v2841 = vcvt.s32.f32 %v2825
        %v2842 = vcvt.s32.f32 %v2826
        %v2843 = vcvt.s32.f32 %v2827
        %v2844 = vcvt.s32.f32 %v2828
        %v2845 = vcvt.s32.f32 %v2829
        %v2846 = vcvt.s32.f32 %v2830
        %v2847 = vcvt.s32.f32 %v2831
        %v2848 = vcvt.s32.f32 %v2832
        %v2849 = vcvt.s32.f32 %v2833
        %v2850 = vcvt.s32.f32 %v2834
        %v2851 = vcvt.s32.f32 %v2835
        %v2852 = vcvt.s32.f32 %v2836
        %v2853 = vcvt.s32.f32 %v2837
        %v2854 = vcvt.s32.f32 %v2838
        %v2855 = vcvt.s32.f32 %v2839
        %v2856 = vcvt.s32.f32 %v2840
        %v2857 = vpack.c.bf16 %v2842, %v2841
        %v2858 = vpack.c.bf16 %v2844, %v2843
        %v2859 = vpack.c.bf16 %v2846, %v2845
        %v2860 = vpack.c.bf16 %v2848, %v2847
        %v2861 = vpack.c.bf16 %v2850, %v2849
        %v2862 = vpack.c.bf16 %v2852, %v2851
        %v2863 = vpack.c.bf16 %v2854, %v2853
        %v2864 = vpack.c.bf16 %v2856, %v2855
        %v2865 = vadd.bf16 %v2801, %v2857
        %v2866 = vadd.bf16 %v2802, %v2858
        %v2867 = vadd.bf16 %v2803, %v2859
        %v2868 = vadd.bf16 %v2804, %v2860
        %v2869 = vadd.bf16 %v2805, %v2861
        %v2870 = vadd.bf16 %v2806, %v2862
        %v2871 = vadd.bf16 %v2807, %v2863
        %v2872 = vadd.bf16 %v2808, %v2864
        %vm2873 = vcmp.eq.s32.totalorder %v923, %v2345
        %vm2874 = vcmp.eq.s32.totalorder %v923, %v2346
        %vm2875 = vcmp.eq.s32.totalorder %v923, %v2347
        %vm2876 = vcmp.eq.s32.totalorder %v923, %v2348
        %vm2877 = vcmp.eq.s32.totalorder %v923, %v2349
        %vm2878 = vcmp.eq.s32.totalorder %v923, %v2350
        %vm2879 = vcmp.eq.s32.totalorder %v923, %v2351
        %vm2880 = vcmp.eq.s32.totalorder %v923, %v2352
        %vm2881 = vcmp.eq.s32.totalorder %v923, %v2353
        %vm2882 = vcmp.eq.s32.totalorder %v923, %v2354
        %vm2883 = vcmp.eq.s32.totalorder %v923, %v2355
        %vm2884 = vcmp.eq.s32.totalorder %v923, %v2356
        %vm2885 = vcmp.eq.s32.totalorder %v923, %v2357
        %vm2886 = vcmp.eq.s32.totalorder %v923, %v2358
        %vm2887 = vcmp.eq.s32.totalorder %v923, %v2359
        %vm2888 = vcmp.eq.s32.totalorder %v923, %v2360
        %v2889 = vsel %vm2873, 1, 0
        %v2890 = vsel %vm2874, 1, 0
        %v2891 = vsel %vm2875, 1, 0
        %v2892 = vsel %vm2876, 1, 0
        %v2893 = vsel %vm2877, 1, 0
        %v2894 = vsel %vm2878, 1, 0
        %v2895 = vsel %vm2879, 1, 0
        %v2896 = vsel %vm2880, 1, 0
        %v2897 = vsel %vm2881, 1, 0
        %v2898 = vsel %vm2882, 1, 0
        %v2899 = vsel %vm2883, 1, 0
        %v2900 = vsel %vm2884, 1, 0
        %v2901 = vsel %vm2885, 1, 0
        %v2902 = vsel %vm2886, 1, 0
        %v2903 = vsel %vm2887, 1, 0
        %v2904 = vsel %vm2888, 1, 0
        %v2905 = vcvt.s32.f32 %v2889
        %v2906 = vcvt.s32.f32 %v2890
        %v2907 = vcvt.s32.f32 %v2891
        %v2908 = vcvt.s32.f32 %v2892
        %v2909 = vcvt.s32.f32 %v2893
        %v2910 = vcvt.s32.f32 %v2894
        %v2911 = vcvt.s32.f32 %v2895
        %v2912 = vcvt.s32.f32 %v2896
        %v2913 = vcvt.s32.f32 %v2897
        %v2914 = vcvt.s32.f32 %v2898
        %v2915 = vcvt.s32.f32 %v2899
        %v2916 = vcvt.s32.f32 %v2900
        %v2917 = vcvt.s32.f32 %v2901
        %v2918 = vcvt.s32.f32 %v2902
        %v2919 = vcvt.s32.f32 %v2903
        %v2920 = vcvt.s32.f32 %v2904
        %v2921 = vpack.c.bf16 %v2906, %v2905
        %v2922 = vpack.c.bf16 %v2908, %v2907
        %v2923 = vpack.c.bf16 %v2910, %v2909
        %v2924 = vpack.c.bf16 %v2912, %v2911
        %v2925 = vpack.c.bf16 %v2914, %v2913
        %v2926 = vpack.c.bf16 %v2916, %v2915
        %v2927 = vpack.c.bf16 %v2918, %v2917
        %v2928 = vpack.c.bf16 %v2920, %v2919
        %v2929 = vadd.bf16 %v2865, %v2921
        %v2930 = vadd.bf16 %v2866, %v2922
        %v2931 = vadd.bf16 %v2867, %v2923
        %v2932 = vadd.bf16 %v2868, %v2924
        %v2933 = vadd.bf16 %v2869, %v2925
        %v2934 = vadd.bf16 %v2870, %v2926
        %v2935 = vadd.bf16 %v2871, %v2927
        %v2936 = vadd.bf16 %v2872, %v2928
        %vm2937 = vcmp.eq.s32.totalorder %v992, %v2345
        %vm2938 = vcmp.eq.s32.totalorder %v992, %v2346
        %vm2939 = vcmp.eq.s32.totalorder %v992, %v2347
        %vm2940 = vcmp.eq.s32.totalorder %v992, %v2348
        %vm2941 = vcmp.eq.s32.totalorder %v992, %v2349
        %vm2942 = vcmp.eq.s32.totalorder %v992, %v2350
        %vm2943 = vcmp.eq.s32.totalorder %v992, %v2351
        %vm2944 = vcmp.eq.s32.totalorder %v992, %v2352
        %vm2945 = vcmp.eq.s32.totalorder %v992, %v2353
        %vm2946 = vcmp.eq.s32.totalorder %v992, %v2354
        %vm2947 = vcmp.eq.s32.totalorder %v992, %v2355
        %vm2948 = vcmp.eq.s32.totalorder %v992, %v2356
        %vm2949 = vcmp.eq.s32.totalorder %v992, %v2357
        %vm2950 = vcmp.eq.s32.totalorder %v992, %v2358
        %vm2951 = vcmp.eq.s32.totalorder %v992, %v2359
        %vm2952 = vcmp.eq.s32.totalorder %v992, %v2360
        %v2953 = vsel %vm2937, 1, 0
        %v2954 = vsel %vm2938, 1, 0
        %v2955 = vsel %vm2939, 1, 0
        %v2956 = vsel %vm2940, 1, 0
        %v2957 = vsel %vm2941, 1, 0
        %v2958 = vsel %vm2942, 1, 0
        %v2959 = vsel %vm2943, 1, 0
        %v2960 = vsel %vm2944, 1, 0
        %v2961 = vsel %vm2945, 1, 0
        %v2962 = vsel %vm2946, 1, 0
        %v2963 = vsel %vm2947, 1, 0
        %v2964 = vsel %vm2948, 1, 0
        %v2965 = vsel %vm2949, 1, 0
        %v2966 = vsel %vm2950, 1, 0
        %v2967 = vsel %vm2951, 1, 0
        %v2968 = vsel %vm2952, 1, 0
        %v2969 = vcvt.s32.f32 %v2953
        %v2970 = vcvt.s32.f32 %v2954
        %v2971 = vcvt.s32.f32 %v2955
        %v2972 = vcvt.s32.f32 %v2956
        %v2973 = vcvt.s32.f32 %v2957
        %v2974 = vcvt.s32.f32 %v2958
        %v2975 = vcvt.s32.f32 %v2959
        %v2976 = vcvt.s32.f32 %v2960
        %v2977 = vcvt.s32.f32 %v2961
        %v2978 = vcvt.s32.f32 %v2962
        %v2979 = vcvt.s32.f32 %v2963
        %v2980 = vcvt.s32.f32 %v2964
        %v2981 = vcvt.s32.f32 %v2965
        %v2982 = vcvt.s32.f32 %v2966
        %v2983 = vcvt.s32.f32 %v2967
        %v2984 = vcvt.s32.f32 %v2968
        %v2985 = vpack.c.bf16 %v2970, %v2969
        %v2986 = vpack.c.bf16 %v2972, %v2971
        %v2987 = vpack.c.bf16 %v2974, %v2973
        %v2988 = vpack.c.bf16 %v2976, %v2975
        %v2989 = vpack.c.bf16 %v2978, %v2977
        %v2990 = vpack.c.bf16 %v2980, %v2979
        %v2991 = vpack.c.bf16 %v2982, %v2981
        %v2992 = vpack.c.bf16 %v2984, %v2983
        %v2993 = vadd.bf16 %v2929, %v2985
        %v2994 = vadd.bf16 %v2930, %v2986
        %v2995 = vadd.bf16 %v2931, %v2987
        %v2996 = vadd.bf16 %v2932, %v2988
        %v2997 = vadd.bf16 %v2933, %v2989
        %v2998 = vadd.bf16 %v2934, %v2990
        %v2999 = vadd.bf16 %v2935, %v2991
        %v3000 = vadd.bf16 %v2936, %v2992
        %vm3001 = vcmp.eq.s32.totalorder %v1061, %v2345
        %vm3002 = vcmp.eq.s32.totalorder %v1061, %v2346
        %vm3003 = vcmp.eq.s32.totalorder %v1061, %v2347
        %vm3004 = vcmp.eq.s32.totalorder %v1061, %v2348
        %vm3005 = vcmp.eq.s32.totalorder %v1061, %v2349
        %vm3006 = vcmp.eq.s32.totalorder %v1061, %v2350
        %vm3007 = vcmp.eq.s32.totalorder %v1061, %v2351
        %vm3008 = vcmp.eq.s32.totalorder %v1061, %v2352
        %vm3009 = vcmp.eq.s32.totalorder %v1061, %v2353
        %vm3010 = vcmp.eq.s32.totalorder %v1061, %v2354
        %vm3011 = vcmp.eq.s32.totalorder %v1061, %v2355
        %vm3012 = vcmp.eq.s32.totalorder %v1061, %v2356
        %vm3013 = vcmp.eq.s32.totalorder %v1061, %v2357
        %vm3014 = vcmp.eq.s32.totalorder %v1061, %v2358
        %vm3015 = vcmp.eq.s32.totalorder %v1061, %v2359
        %vm3016 = vcmp.eq.s32.totalorder %v1061, %v2360
        %v3017 = vsel %vm3001, 1, 0
        %v3018 = vsel %vm3002, 1, 0
        %v3019 = vsel %vm3003, 1, 0
        %v3020 = vsel %vm3004, 1, 0
        %v3021 = vsel %vm3005, 1, 0
        %v3022 = vsel %vm3006, 1, 0
        %v3023 = vsel %vm3007, 1, 0
        %v3024 = vsel %vm3008, 1, 0
        %v3025 = vsel %vm3009, 1, 0
        %v3026 = vsel %vm3010, 1, 0
        %v3027 = vsel %vm3011, 1, 0
        %v3028 = vsel %vm3012, 1, 0
        %v3029 = vsel %vm3013, 1, 0
        %v3030 = vsel %vm3014, 1, 0
        %v3031 = vsel %vm3015, 1, 0
        %v3032 = vsel %vm3016, 1, 0
        %v3033 = vcvt.s32.f32 %v3017
        %v3034 = vcvt.s32.f32 %v3018
        %v3035 = vcvt.s32.f32 %v3019
        %v3036 = vcvt.s32.f32 %v3020
        %v3037 = vcvt.s32.f32 %v3021
        %v3038 = vcvt.s32.f32 %v3022
        %v3039 = vcvt.s32.f32 %v3023
        %v3040 = vcvt.s32.f32 %v3024
        %v3041 = vcvt.s32.f32 %v3025
        %v3042 = vcvt.s32.f32 %v3026
        %v3043 = vcvt.s32.f32 %v3027
        %v3044 = vcvt.s32.f32 %v3028
        %v3045 = vcvt.s32.f32 %v3029
        %v3046 = vcvt.s32.f32 %v3030
        %v3047 = vcvt.s32.f32 %v3031
        %v3048 = vcvt.s32.f32 %v3032
        %v3049 = vpack.c.bf16 %v3034, %v3033
        %v3050 = vpack.c.bf16 %v3036, %v3035
        %v3051 = vpack.c.bf16 %v3038, %v3037
        %v3052 = vpack.c.bf16 %v3040, %v3039
        %v3053 = vpack.c.bf16 %v3042, %v3041
        %v3054 = vpack.c.bf16 %v3044, %v3043
        %v3055 = vpack.c.bf16 %v3046, %v3045
        %v3056 = vpack.c.bf16 %v3048, %v3047
        %v3057 = vadd.bf16 %v2993, %v3049
        %v3058 = vadd.bf16 %v2994, %v3050
        %v3059 = vadd.bf16 %v2995, %v3051
        %v3060 = vadd.bf16 %v2996, %v3052
        %v3061 = vadd.bf16 %v2997, %v3053
        %v3062 = vadd.bf16 %v2998, %v3054
        %v3063 = vadd.bf16 %v2999, %v3055
        %v3064 = vadd.bf16 %v3000, %v3056
        %vm3065 = vcmp.eq.s32.totalorder %v1130, %v2345
        %vm3066 = vcmp.eq.s32.totalorder %v1130, %v2346
        %vm3067 = vcmp.eq.s32.totalorder %v1130, %v2347
        %vm3068 = vcmp.eq.s32.totalorder %v1130, %v2348
        %vm3069 = vcmp.eq.s32.totalorder %v1130, %v2349
        %vm3070 = vcmp.eq.s32.totalorder %v1130, %v2350
        %vm3071 = vcmp.eq.s32.totalorder %v1130, %v2351
        %vm3072 = vcmp.eq.s32.totalorder %v1130, %v2352
        %vm3073 = vcmp.eq.s32.totalorder %v1130, %v2353
        %vm3074 = vcmp.eq.s32.totalorder %v1130, %v2354
        %vm3075 = vcmp.eq.s32.totalorder %v1130, %v2355
        %vm3076 = vcmp.eq.s32.totalorder %v1130, %v2356
        %vm3077 = vcmp.eq.s32.totalorder %v1130, %v2357
        %vm3078 = vcmp.eq.s32.totalorder %v1130, %v2358
        %vm3079 = vcmp.eq.s32.totalorder %v1130, %v2359
        %vm3080 = vcmp.eq.s32.totalorder %v1130, %v2360
        %v3081 = vsel %vm3065, 1, 0
        %v3082 = vsel %vm3066, 1, 0
        %v3083 = vsel %vm3067, 1, 0
        %v3084 = vsel %vm3068, 1, 0
        %v3085 = vsel %vm3069, 1, 0
        %v3086 = vsel %vm3070, 1, 0
        %v3087 = vsel %vm3071, 1, 0
        %v3088 = vsel %vm3072, 1, 0
        %v3089 = vsel %vm3073, 1, 0
        %v3090 = vsel %vm3074, 1, 0
        %v3091 = vsel %vm3075, 1, 0
        %v3092 = vsel %vm3076, 1, 0
        %v3093 = vsel %vm3077, 1, 0
        %v3094 = vsel %vm3078, 1, 0
        %v3095 = vsel %vm3079, 1, 0
        %v3096 = vsel %vm3080, 1, 0
        %v3097 = vcvt.s32.f32 %v3081
        %v3098 = vcvt.s32.f32 %v3082
        %v3099 = vcvt.s32.f32 %v3083
        %v3100 = vcvt.s32.f32 %v3084
        %v3101 = vcvt.s32.f32 %v3085
        %v3102 = vcvt.s32.f32 %v3086
        %v3103 = vcvt.s32.f32 %v3087
        %v3104 = vcvt.s32.f32 %v3088
        %v3105 = vcvt.s32.f32 %v3089
        %v3106 = vcvt.s32.f32 %v3090
        %v3107 = vcvt.s32.f32 %v3091
        %v3108 = vcvt.s32.f32 %v3092
        %v3109 = vcvt.s32.f32 %v3093
        %v3110 = vcvt.s32.f32 %v3094
        %v3111 = vcvt.s32.f32 %v3095
        %v3112 = vcvt.s32.f32 %v3096
        %v3113 = vpack.c.bf16 %v3098, %v3097
        %v3114 = vpack.c.bf16 %v3100, %v3099
        %v3115 = vpack.c.bf16 %v3102, %v3101
        %v3116 = vpack.c.bf16 %v3104, %v3103
        %v3117 = vpack.c.bf16 %v3106, %v3105
        %v3118 = vpack.c.bf16 %v3108, %v3107
        %v3119 = vpack.c.bf16 %v3110, %v3109
        %v3120 = vpack.c.bf16 %v3112, %v3111
        %v3121 = vadd.bf16 %v3057, %v3113
        %v3122 = vadd.bf16 %v3058, %v3114
        %v3123 = vadd.bf16 %v3059, %v3115
        %v3124 = vadd.bf16 %v3060, %v3116
        %v3125 = vadd.bf16 %v3061, %v3117
        %v3126 = vadd.bf16 %v3062, %v3118
        %v3127 = vadd.bf16 %v3063, %v3119
        %v3128 = vadd.bf16 %v3064, %v3120
        %vm3129 = vcmp.eq.s32.totalorder %v1199, %v2345
        %vm3130 = vcmp.eq.s32.totalorder %v1199, %v2346
        %vm3131 = vcmp.eq.s32.totalorder %v1199, %v2347
        %vm3132 = vcmp.eq.s32.totalorder %v1199, %v2348
        %vm3133 = vcmp.eq.s32.totalorder %v1199, %v2349
        %vm3134 = vcmp.eq.s32.totalorder %v1199, %v2350
        %vm3135 = vcmp.eq.s32.totalorder %v1199, %v2351
        %vm3136 = vcmp.eq.s32.totalorder %v1199, %v2352
        %vm3137 = vcmp.eq.s32.totalorder %v1199, %v2353
        %vm3138 = vcmp.eq.s32.totalorder %v1199, %v2354
        %vm3139 = vcmp.eq.s32.totalorder %v1199, %v2355
        %vm3140 = vcmp.eq.s32.totalorder %v1199, %v2356
        %vm3141 = vcmp.eq.s32.totalorder %v1199, %v2357
        %vm3142 = vcmp.eq.s32.totalorder %v1199, %v2358
        %vm3143 = vcmp.eq.s32.totalorder %v1199, %v2359
        %vm3144 = vcmp.eq.s32.totalorder %v1199, %v2360
        %v3145 = vsel %vm3129, 1, 0
        %v3146 = vsel %vm3130, 1, 0
        %v3147 = vsel %vm3131, 1, 0
        %v3148 = vsel %vm3132, 1, 0
        %v3149 = vsel %vm3133, 1, 0
        %v3150 = vsel %vm3134, 1, 0
        %v3151 = vsel %vm3135, 1, 0
        %v3152 = vsel %vm3136, 1, 0
        %v3153 = vsel %vm3137, 1, 0
        %v3154 = vsel %vm3138, 1, 0
        %v3155 = vsel %vm3139, 1, 0
        %v3156 = vsel %vm3140, 1, 0
        %v3157 = vsel %vm3141, 1, 0
        %v3158 = vsel %vm3142, 1, 0
        %v3159 = vsel %vm3143, 1, 0
        %v3160 = vsel %vm3144, 1, 0
        %v3161 = vcvt.s32.f32 %v3145
        %v3162 = vcvt.s32.f32 %v3146
        %v3163 = vcvt.s32.f32 %v3147
        %v3164 = vcvt.s32.f32 %v3148
        %v3165 = vcvt.s32.f32 %v3149
        %v3166 = vcvt.s32.f32 %v3150
        %v3167 = vcvt.s32.f32 %v3151
        %v3168 = vcvt.s32.f32 %v3152
        %v3169 = vcvt.s32.f32 %v3153
        %v3170 = vcvt.s32.f32 %v3154
        %v3171 = vcvt.s32.f32 %v3155
        %v3172 = vcvt.s32.f32 %v3156
        %v3173 = vcvt.s32.f32 %v3157
        %v3174 = vcvt.s32.f32 %v3158
        %v3175 = vcvt.s32.f32 %v3159
        %v3176 = vcvt.s32.f32 %v3160
        %v3177 = vpack.c.bf16 %v3162, %v3161
        %v3178 = vpack.c.bf16 %v3164, %v3163
        %v3179 = vpack.c.bf16 %v3166, %v3165
        %v3180 = vpack.c.bf16 %v3168, %v3167
        %v3181 = vpack.c.bf16 %v3170, %v3169
        %v3182 = vpack.c.bf16 %v3172, %v3171
        %v3183 = vpack.c.bf16 %v3174, %v3173
        %v3184 = vpack.c.bf16 %v3176, %v3175
        %v3185 = vadd.bf16 %v3121, %v3177
        %v3186 = vadd.bf16 %v3122, %v3178
        %v3187 = vadd.bf16 %v3123, %v3179
        %v3188 = vadd.bf16 %v3124, %v3180
        %v3189 = vadd.bf16 %v3125, %v3181
        %v3190 = vadd.bf16 %v3126, %v3182
        %v3191 = vadd.bf16 %v3127, %v3183
        %v3192 = vadd.bf16 %v3128, %v3184
        %vm3193 = vcmp.eq.s32.totalorder %v1268, %v2345
        %vm3194 = vcmp.eq.s32.totalorder %v1268, %v2346
        %vm3195 = vcmp.eq.s32.totalorder %v1268, %v2347
        %vm3196 = vcmp.eq.s32.totalorder %v1268, %v2348
        %vm3197 = vcmp.eq.s32.totalorder %v1268, %v2349
        %vm3198 = vcmp.eq.s32.totalorder %v1268, %v2350
        %vm3199 = vcmp.eq.s32.totalorder %v1268, %v2351
        %vm3200 = vcmp.eq.s32.totalorder %v1268, %v2352
        %vm3201 = vcmp.eq.s32.totalorder %v1268, %v2353
        %vm3202 = vcmp.eq.s32.totalorder %v1268, %v2354
        %vm3203 = vcmp.eq.s32.totalorder %v1268, %v2355
        %vm3204 = vcmp.eq.s32.totalorder %v1268, %v2356
        %vm3205 = vcmp.eq.s32.totalorder %v1268, %v2357
        %vm3206 = vcmp.eq.s32.totalorder %v1268, %v2358
        %vm3207 = vcmp.eq.s32.totalorder %v1268, %v2359
        %vm3208 = vcmp.eq.s32.totalorder %v1268, %v2360
        %v3209 = vsel %vm3193, 1, 0
        %v3210 = vsel %vm3194, 1, 0
        %v3211 = vsel %vm3195, 1, 0
        %v3212 = vsel %vm3196, 1, 0
        %v3213 = vsel %vm3197, 1, 0
        %v3214 = vsel %vm3198, 1, 0
        %v3215 = vsel %vm3199, 1, 0
        %v3216 = vsel %vm3200, 1, 0
        %v3217 = vsel %vm3201, 1, 0
        %v3218 = vsel %vm3202, 1, 0
        %v3219 = vsel %vm3203, 1, 0
        %v3220 = vsel %vm3204, 1, 0
        %v3221 = vsel %vm3205, 1, 0
        %v3222 = vsel %vm3206, 1, 0
        %v3223 = vsel %vm3207, 1, 0
        %v3224 = vsel %vm3208, 1, 0
        %v3225 = vcvt.s32.f32 %v3209
        %v3226 = vcvt.s32.f32 %v3210
        %v3227 = vcvt.s32.f32 %v3211
        %v3228 = vcvt.s32.f32 %v3212
        %v3229 = vcvt.s32.f32 %v3213
        %v3230 = vcvt.s32.f32 %v3214
        %v3231 = vcvt.s32.f32 %v3215
        %v3232 = vcvt.s32.f32 %v3216
        %v3233 = vcvt.s32.f32 %v3217
        %v3234 = vcvt.s32.f32 %v3218
        %v3235 = vcvt.s32.f32 %v3219
        %v3236 = vcvt.s32.f32 %v3220
        %v3237 = vcvt.s32.f32 %v3221
        %v3238 = vcvt.s32.f32 %v3222
        %v3239 = vcvt.s32.f32 %v3223
        %v3240 = vcvt.s32.f32 %v3224
        %v3241 = vpack.c.bf16 %v3226, %v3225
        %v3242 = vpack.c.bf16 %v3228, %v3227
        %v3243 = vpack.c.bf16 %v3230, %v3229
        %v3244 = vpack.c.bf16 %v3232, %v3231
        %v3245 = vpack.c.bf16 %v3234, %v3233
        %v3246 = vpack.c.bf16 %v3236, %v3235
        %v3247 = vpack.c.bf16 %v3238, %v3237
        %v3248 = vpack.c.bf16 %v3240, %v3239
        %v3249 = vadd.bf16 %v3185, %v3241
        %v3250 = vadd.bf16 %v3186, %v3242
        %v3251 = vadd.bf16 %v3187, %v3243
        %v3252 = vadd.bf16 %v3188, %v3244
        %v3253 = vadd.bf16 %v3189, %v3245
        %v3254 = vadd.bf16 %v3190, %v3246
        %v3255 = vadd.bf16 %v3191, %v3247
        %v3256 = vadd.bf16 %v3192, %v3248
        %vm3257 = vcmp.eq.s32.totalorder %v1337, %v2345
        %vm3258 = vcmp.eq.s32.totalorder %v1337, %v2346
        %vm3259 = vcmp.eq.s32.totalorder %v1337, %v2347
        %vm3260 = vcmp.eq.s32.totalorder %v1337, %v2348
        %vm3261 = vcmp.eq.s32.totalorder %v1337, %v2349
        %vm3262 = vcmp.eq.s32.totalorder %v1337, %v2350
        %vm3263 = vcmp.eq.s32.totalorder %v1337, %v2351
        %vm3264 = vcmp.eq.s32.totalorder %v1337, %v2352
        %vm3265 = vcmp.eq.s32.totalorder %v1337, %v2353
        %vm3266 = vcmp.eq.s32.totalorder %v1337, %v2354
        %vm3267 = vcmp.eq.s32.totalorder %v1337, %v2355
        %vm3268 = vcmp.eq.s32.totalorder %v1337, %v2356
        %vm3269 = vcmp.eq.s32.totalorder %v1337, %v2357
        %vm3270 = vcmp.eq.s32.totalorder %v1337, %v2358
        %vm3271 = vcmp.eq.s32.totalorder %v1337, %v2359
        %vm3272 = vcmp.eq.s32.totalorder %v1337, %v2360
        %v3273 = vsel %vm3257, 1, 0
        %v3274 = vsel %vm3258, 1, 0
        %v3275 = vsel %vm3259, 1, 0
        %v3276 = vsel %vm3260, 1, 0
        %v3277 = vsel %vm3261, 1, 0
        %v3278 = vsel %vm3262, 1, 0
        %v3279 = vsel %vm3263, 1, 0
        %v3280 = vsel %vm3264, 1, 0
        %v3281 = vsel %vm3265, 1, 0
        %v3282 = vsel %vm3266, 1, 0
        %v3283 = vsel %vm3267, 1, 0
        %v3284 = vsel %vm3268, 1, 0
        %v3285 = vsel %vm3269, 1, 0
        %v3286 = vsel %vm3270, 1, 0
        %v3287 = vsel %vm3271, 1, 0
        %v3288 = vsel %vm3272, 1, 0
        %v3289 = vcvt.s32.f32 %v3273
        %v3290 = vcvt.s32.f32 %v3274
        %v3291 = vcvt.s32.f32 %v3275
        %v3292 = vcvt.s32.f32 %v3276
        %v3293 = vcvt.s32.f32 %v3277
        %v3294 = vcvt.s32.f32 %v3278
        %v3295 = vcvt.s32.f32 %v3279
        %v3296 = vcvt.s32.f32 %v3280
        %v3297 = vcvt.s32.f32 %v3281
        %v3298 = vcvt.s32.f32 %v3282
        %v3299 = vcvt.s32.f32 %v3283
        %v3300 = vcvt.s32.f32 %v3284
        %v3301 = vcvt.s32.f32 %v3285
        %v3302 = vcvt.s32.f32 %v3286
        %v3303 = vcvt.s32.f32 %v3287
        %v3304 = vcvt.s32.f32 %v3288
        %v3305 = vpack.c.bf16 %v3290, %v3289
        %v3306 = vpack.c.bf16 %v3292, %v3291
        %v3307 = vpack.c.bf16 %v3294, %v3293
        %v3308 = vpack.c.bf16 %v3296, %v3295
        %v3309 = vpack.c.bf16 %v3298, %v3297
        %v3310 = vpack.c.bf16 %v3300, %v3299
        %v3311 = vpack.c.bf16 %v3302, %v3301
        %v3312 = vpack.c.bf16 %v3304, %v3303
        %v3313 = vadd.bf16 %v3249, %v3305
        %v3314 = vadd.bf16 %v3250, %v3306
        %v3315 = vadd.bf16 %v3251, %v3307
        %v3316 = vadd.bf16 %v3252, %v3308
        %v3317 = vadd.bf16 %v3253, %v3309
        %v3318 = vadd.bf16 %v3254, %v3310
        %v3319 = vadd.bf16 %v3255, %v3311
        %v3320 = vadd.bf16 %v3256, %v3312
        %vm3321 = vcmp.eq.s32.totalorder %v1406, %v2345
        %vm3322 = vcmp.eq.s32.totalorder %v1406, %v2346
        %vm3323 = vcmp.eq.s32.totalorder %v1406, %v2347
        %vm3324 = vcmp.eq.s32.totalorder %v1406, %v2348
        %vm3325 = vcmp.eq.s32.totalorder %v1406, %v2349
        %vm3326 = vcmp.eq.s32.totalorder %v1406, %v2350
        %vm3327 = vcmp.eq.s32.totalorder %v1406, %v2351
        %vm3328 = vcmp.eq.s32.totalorder %v1406, %v2352
        %vm3329 = vcmp.eq.s32.totalorder %v1406, %v2353
        %vm3330 = vcmp.eq.s32.totalorder %v1406, %v2354
        %vm3331 = vcmp.eq.s32.totalorder %v1406, %v2355
        %vm3332 = vcmp.eq.s32.totalorder %v1406, %v2356
        %vm3333 = vcmp.eq.s32.totalorder %v1406, %v2357
        %vm3334 = vcmp.eq.s32.totalorder %v1406, %v2358
        %vm3335 = vcmp.eq.s32.totalorder %v1406, %v2359
        %vm3336 = vcmp.eq.s32.totalorder %v1406, %v2360
        %v3337 = vsel %vm3321, 1, 0
        %v3338 = vsel %vm3322, 1, 0
        %v3339 = vsel %vm3323, 1, 0
        %v3340 = vsel %vm3324, 1, 0
        %v3341 = vsel %vm3325, 1, 0
        %v3342 = vsel %vm3326, 1, 0
        %v3343 = vsel %vm3327, 1, 0
        %v3344 = vsel %vm3328, 1, 0
        %v3345 = vsel %vm3329, 1, 0
        %v3346 = vsel %vm3330, 1, 0
        %v3347 = vsel %vm3331, 1, 0
        %v3348 = vsel %vm3332, 1, 0
        %v3349 = vsel %vm3333, 1, 0
        %v3350 = vsel %vm3334, 1, 0
        %v3351 = vsel %vm3335, 1, 0
        %v3352 = vsel %vm3336, 1, 0
        %v3353 = vcvt.s32.f32 %v3337
        %v3354 = vcvt.s32.f32 %v3338
        %v3355 = vcvt.s32.f32 %v3339
        %v3356 = vcvt.s32.f32 %v3340
        %v3357 = vcvt.s32.f32 %v3341
        %v3358 = vcvt.s32.f32 %v3342
        %v3359 = vcvt.s32.f32 %v3343
        %v3360 = vcvt.s32.f32 %v3344
        %v3361 = vcvt.s32.f32 %v3345
        %v3362 = vcvt.s32.f32 %v3346
        %v3363 = vcvt.s32.f32 %v3347
        %v3364 = vcvt.s32.f32 %v3348
        %v3365 = vcvt.s32.f32 %v3349
        %v3366 = vcvt.s32.f32 %v3350
        %v3367 = vcvt.s32.f32 %v3351
        %v3368 = vcvt.s32.f32 %v3352
        %v3369 = vpack.c.bf16 %v3354, %v3353
        %v3370 = vpack.c.bf16 %v3356, %v3355
        %v3371 = vpack.c.bf16 %v3358, %v3357
        %v3372 = vpack.c.bf16 %v3360, %v3359
        %v3373 = vpack.c.bf16 %v3362, %v3361
        %v3374 = vpack.c.bf16 %v3364, %v3363
        %v3375 = vpack.c.bf16 %v3366, %v3365
        %v3376 = vpack.c.bf16 %v3368, %v3367
        %v3377 = vadd.bf16 %v3313, %v3369
        %v3378 = vadd.bf16 %v3314, %v3370
        %v3379 = vadd.bf16 %v3315, %v3371
        %v3380 = vadd.bf16 %v3316, %v3372
        %v3381 = vadd.bf16 %v3317, %v3373
        %v3382 = vadd.bf16 %v3318, %v3374
        %v3383 = vadd.bf16 %v3319, %v3375
        %v3384 = vadd.bf16 %v3320, %v3376
        %v3385 = vld [vmem:[%s2 + $0x4] sm:$0xf]
        %v3386 = vld [vmem:[%s2 + $0xc] sm:$0xf]
        %v3387 = vld [vmem:[%s2 + $0x14] sm:$0xf]
        %v3388 = vld [vmem:[%s2 + $0x1c] sm:$0xf]
        %v3389 = vld [vmem:[%s2 + $0x24] sm:$0xf]
        %v3390 = vld [vmem:[%s2 + $0x2c] sm:$0xf]
        %v3391 = vld [vmem:[%s2 + $0x34] sm:$0xf]
        %v3392 = vld [vmem:[%s2 + $0x3c] sm:$0xf]
        %v3393 = vld [vmem:[%s2 + $0x44] sm:$0xf]
        %v3394 = vld [vmem:[%s2 + $0x4c] sm:$0xf]
        %v3395 = vld [vmem:[%s2 + $0x54] sm:$0xf]
        %v3396 = vld [vmem:[%s2 + $0x5c] sm:$0xf]
        %v3397 = vld [vmem:[%s2 + $0x64] sm:$0xf]
        %v3398 = vld [vmem:[%s2 + $0x6c] sm:$0xf]
        %v3399 = vld [vmem:[%s2 + $0x74] sm:$0xf]
        %v3400 = vld [vmem:[%s2 + $0x7c] sm:$0xf]
        %v3417 = vunpack.c.l.b16 %v3385
        %v3418 = vunpack.c.l.b16 %v3386
        %v3419 = vunpack.c.l.b16 %v3387
        %v3420 = vunpack.c.l.b16 %v3388
        %v3421 = vunpack.c.l.b16 %v3389
        %v3422 = vunpack.c.l.b16 %v3390
        %v3423 = vunpack.c.l.b16 %v3391
        %v3424 = vunpack.c.l.b16 %v3392
        %v3425 = vunpack.c.l.b16 %v3393
        %v3426 = vunpack.c.l.b16 %v3394
        %v3427 = vunpack.c.l.b16 %v3395
        %v3428 = vunpack.c.l.b16 %v3396
        %v3429 = vunpack.c.l.b16 %v3397
        %v3430 = vunpack.c.l.b16 %v3398
        %v3431 = vunpack.c.l.b16 %v3399
        %v3432 = vunpack.c.l.b16 %v3400
        %v3433 = vpack.c.b16 %v3418, %v3417
        %v3434 = vpack.c.b16 %v3420, %v3419
        %v3435 = vpack.c.b16 %v3422, %v3421
        %v3436 = vpack.c.b16 %v3424, %v3423
        %v3437 = vpack.c.b16 %v3426, %v3425
        %v3438 = vpack.c.b16 %v3428, %v3427
        %v3439 = vpack.c.b16 %v3430, %v3429
        %v3440 = vpack.c.b16 %v3432, %v3431
        %3449 = vmatprep.subr.bf16.mxu0 0
        %3450 = vmatpush1.bf16.msra.mxu0 %v3377
        %3451 = vmatprep.subr.bf16.mxu0 0
        %3452 = vmatpush1.bf16.msra.mxu0 %v3378
        %3453 = vmatprep.subr.bf16.mxu0 0
        %3454 = vmatpush1.bf16.msra.mxu0 %v3379
        %3455 = vmatprep.subr.bf16.mxu0 0
        %3456 = vmatpush1.bf16.msra.mxu0 %v3380
        %3457 = vmatprep.subr.bf16.mxu0 0
        %3458 = vmatpush1.bf16.msra.mxu0 %v3381
        %3459 = vmatprep.subr.bf16.mxu0 0
        %3460 = vmatpush1.bf16.msra.mxu0 %v3382
        %3461 = vmatprep.subr.bf16.mxu0 0
        %3462 = vmatpush1.bf16.msra.mxu0 %v3383
        %3463 = vmatprep.subr.bf16.mxu0 0
        %3464 = vmatpush1.bf16.msra.mxu0 %v3384
        %3465 = vmatprep.subr.bf16.mxu0 0
        %3466 = vmatpush1.bf16.msra.mxu0 0
        %3467 = vmatprep.subr.bf16.mxu0 0
        %3468 = vmatpush1.bf16.msra.mxu0 0
        %3469 = vmatprep.subr.bf16.mxu0 0
        %3470 = vmatpush1.bf16.msra.mxu0 0
        %3471 = vmatprep.subr.bf16.mxu0 0
        %3472 = vmatpush1.bf16.msra.mxu0 0
        %3473 = vmatprep.subr.bf16.mxu0 0
        %3474 = vmatpush1.bf16.msra.mxu0 0
        %3475 = vmatprep.subr.bf16.mxu0 0
        %3476 = vmatpush1.bf16.msra.mxu0 0
        %3477 = vmatprep.subr.bf16.mxu0 0
        %3478 = vmatpush1.bf16.msra.mxu0 0
        %3479 = vmatprep.subr.bf16.mxu0 0
        %3480 = vmatpush1.bf16.msra.mxu0 0
        %3481 = vmatprep.mubr.bf16.mxu0 0
        %3482 = vmatmul.mubr.bf16.gmra.mrb[0].mxu0 %v3433
        %v3483 = vpop.f32.mrb[0].mxu0
        %v3484 = vadd.f32 0.0, %v3483
        %v3485 = vpop.f32.mrb[0].mxu0
        %v3486 = vpop.f32.mrb[0].mxu0
        %v3487 = vadd.f32 0.0, %v3486
        %v3488 = vpop.f32.mrb[0].mxu0
        %3489 = vmatprep.mubr.bf16.mxu0 0
        %3490 = vmatmul.mubr.bf16.gmra.mrb[0].mxu0 %v3434
        %v3491 = vpop.f32.mrb[0].mxu0
        %v3492 = vadd.f32 0.0, %v3491
        %v3493 = vpop.f32.mrb[0].mxu0
        %v3494 = vpop.f32.mrb[0].mxu0
        %v3495 = vadd.f32 0.0, %v3494
        %v3496 = vpop.f32.mrb[0].mxu0
        %3497 = vmatprep.mubr.bf16.mxu0 0
        %3498 = vmatmul.mubr.bf16.gmra.mrb[0].mxu0 %v3435
        %v3499 = vpop.f32.mrb[0].mxu0
        %v3500 = vadd.f32 0.0, %v3499
        %v3501 = vpop.f32.mrb[0].mxu0
        %v3502 = vpop.f32.mrb[0].mxu0
        %v3503 = vadd.f32 0.0, %v3502
        %v3504 = vpop.f32.mrb[0].mxu0
        %3505 = vmatprep.mubr.bf16.mxu0 0
        %3506 = vmatmul.mubr.bf16.gmra.mrb[0].mxu0 %v3436
        %v3507 = vpop.f32.mrb[0].mxu0
        %v3508 = vadd.f32 0.0, %v3507
        %v3509 = vpop.f32.mrb[0].mxu0
        %v3510 = vpop.f32.mrb[0].mxu0
        %v3511 = vadd.f32 0.0, %v3510
        %v3512 = vpop.f32.mrb[0].mxu0
        %3513 = vmatprep.mubr.bf16.mxu0 0
        %3514 = vmatmul.mubr.bf16.gmra.mrb[0].mxu0 %v3437
        %v3515 = vpop.f32.mrb[0].mxu0
        %v3516 = vadd.f32 0.0, %v3515
        %v3517 = vpop.f32.mrb[0].mxu0
        %v3518 = vpop.f32.mrb[0].mxu0
        %v3519 = vadd.f32 0.0, %v3518
        %v3520 = vpop.f32.mrb[0].mxu0
        %3521 = vmatprep.mubr.bf16.mxu0 0
        %3522 = vmatmul.mubr.bf16.gmra.mrb[0].mxu0 %v3438
        %v3523 = vpop.f32.mrb[0].mxu0
        %v3524 = vadd.f32 0.0, %v3523
        %v3525 = vpop.f32.mrb[0].mxu0
        %v3526 = vpop.f32.mrb[0].mxu0
        %v3527 = vadd.f32 0.0, %v3526
        %v3528 = vpop.f32.mrb[0].mxu0
        %3529 = vmatprep.mubr.bf16.mxu0 0
        %3530 = vmatmul.mubr.bf16.gmra.mrb[0].mxu0 %v3439
        %v3531 = vpop.f32.mrb[0].mxu0
        %v3532 = vadd.f32 0.0, %v3531
        %v3533 = vpop.f32.mrb[0].mxu0
        %v3534 = vpop.f32.mrb[0].mxu0
        %v3535 = vadd.f32 0.0, %v3534
        %v3536 = vpop.f32.mrb[0].mxu0
        %3537 = vmatprep.mubr.bf16.mxu0 0
        %3538 = vmatmul.mubr.bf16.gmra.mrb[0].mxu0 %v3440
        %v3539 = vpop.f32.mrb[0].mxu0
        %v3540 = vadd.f32 0.0, %v3539
        %v3541 = vpop.f32.mrb[0].mxu0
        %v3542 = vpop.f32.mrb[0].mxu0
        %v3543 = vadd.f32 0.0, %v3542
        %v3544 = vpop.f32.mrb[0].mxu0
        %3545 = vdwg.mxu0
        %v3546 = vadd.f32 %v2283, %v3484
        %v3547 = vadd.f32 %v2286, %v3487
        %v3548 = vadd.f32 %v2291, %v3492
        %v3549 = vadd.f32 %v2294, %v3495
        %v3550 = vadd.f32 %v2299, %v3500
        %v3551 = vadd.f32 %v2302, %v3503
        %v3552 = vadd.f32 %v2307, %v3508
        %v3553 = vadd.f32 %v2310, %v3511
        %v3554 = vadd.f32 %v2315, %v3516
        %v3555 = vadd.f32 %v2318, %v3519
        %v3556 = vadd.f32 %v2323, %v3524
        %v3557 = vadd.f32 %v2326, %v3527
        %v3558 = vadd.f32 %v2331, %v3532
        %v3559 = vadd.f32 %v2334, %v3535
        %v3560 = vadd.f32 %v2339, %v3540
        %v3561 = vadd.f32 %v2342, %v3543
        %vm3562 = vcmp.eq.s32.totalorder %v1491, %v2345
        %vm3563 = vcmp.eq.s32.totalorder %v1491, %v2346
        %vm3564 = vcmp.eq.s32.totalorder %v1491, %v2347
        %vm3565 = vcmp.eq.s32.totalorder %v1491, %v2348
        %vm3566 = vcmp.eq.s32.totalorder %v1491, %v2349
        %vm3567 = vcmp.eq.s32.totalorder %v1491, %v2350
        %vm3568 = vcmp.eq.s32.totalorder %v1491, %v2351
        %vm3569 = vcmp.eq.s32.totalorder %v1491, %v2352
        %vm3570 = vcmp.eq.s32.totalorder %v1491, %v2353
        %vm3571 = vcmp.eq.s32.totalorder %v1491, %v2354
        %vm3572 = vcmp.eq.s32.totalorder %v1491, %v2355
        %vm3573 = vcmp.eq.s32.totalorder %v1491, %v2356
        %vm3574 = vcmp.eq.s32.totalorder %v1491, %v2357
        %vm3575 = vcmp.eq.s32.totalorder %v1491, %v2358
        %vm3576 = vcmp.eq.s32.totalorder %v1491, %v2359
        %vm3577 = vcmp.eq.s32.totalorder %v1491, %v2360
        %v3578 = vsel %vm3562, 1, 0
        %v3579 = vsel %vm3563, 1, 0
        %v3580 = vsel %vm3564, 1, 0
        %v3581 = vsel %vm3565, 1, 0
        %v3582 = vsel %vm3566, 1, 0
        %v3583 = vsel %vm3567, 1, 0
        %v3584 = vsel %vm3568, 1, 0
        %v3585 = vsel %vm3569, 1, 0
        %v3586 = vsel %vm3570, 1, 0
        %v3587 = vsel %vm3571, 1, 0
        %v3588 = vsel %vm3572, 1, 0
        %v3589 = vsel %vm3573, 1, 0
        %v3590 = vsel %vm3574, 1, 0
        %v3591 = vsel %vm3575, 1, 0
        %v3592 = vsel %vm3576, 1, 0
        %v3593 = vsel %vm3577, 1, 0
        %v3594 = vcvt.s32.f32 %v3578
        %v3595 = vcvt.s32.f32 %v3579
        %v3596 = vcvt.s32.f32 %v3580
        %v3597 = vcvt.s32.f32 %v3581
        %v3598 = vcvt.s32.f32 %v3582
        %v3599 = vcvt.s32.f32 %v3583
        %v3600 = vcvt.s32.f32 %v3584
        %v3601 = vcvt.s32.f32 %v3585
        %v3602 = vcvt.s32.f32 %v3586
        %v3603 = vcvt.s32.f32 %v3587
        %v3604 = vcvt.s32.f32 %v3588
        %v3605 = vcvt.s32.f32 %v3589
        %v3606 = vcvt.s32.f32 %v3590
        %v3607 = vcvt.s32.f32 %v3591
        %v3608 = vcvt.s32.f32 %v3592
        %v3609 = vcvt.s32.f32 %v3593
        %v3610 = vpack.c.bf16 %v3595, %v3594
        %v3611 = vpack.c.bf16 %v3597, %v3596
        %v3612 = vpack.c.bf16 %v3599, %v3598
        %v3613 = vpack.c.bf16 %v3601, %v3600
        %v3614 = vpack.c.bf16 %v3603, %v3602
        %v3615 = vpack.c.bf16 %v3605, %v3604
        %v3616 = vpack.c.bf16 %v3607, %v3606
        %v3617 = vpack.c.bf16 %v3609, %v3608
        %v3618 = vadd.bf16 %v3610, 0
        %v3619 = vadd.bf16 %v3611, 0
        %v3620 = vadd.bf16 %v3612, 0
        %v3621 = vadd.bf16 %v3613, 0
        %v3622 = vadd.bf16 %v3614, 0
        %v3623 = vadd.bf16 %v3615, 0
        %v3624 = vadd.bf16 %v3616, 0
        %v3625 = vadd.bf16 %v3617, 0
        %vm3626 = vcmp.eq.s32.totalorder %v1560, %v2345
        %vm3627 = vcmp.eq.s32.totalorder %v1560, %v2346
        %vm3628 = vcmp.eq.s32.totalorder %v1560, %v2347
        %vm3629 = vcmp.eq.s32.totalorder %v1560, %v2348
        %vm3630 = vcmp.eq.s32.totalorder %v1560, %v2349
        %vm3631 = vcmp.eq.s32.totalorder %v1560, %v2350
        %vm3632 = vcmp.eq.s32.totalorder %v1560, %v2351
        %vm3633 = vcmp.eq.s32.totalorder %v1560, %v2352
        %vm3634 = vcmp.eq.s32.totalorder %v1560, %v2353
        %vm3635 = vcmp.eq.s32.totalorder %v1560, %v2354
        %vm3636 = vcmp.eq.s32.totalorder %v1560, %v2355
        %vm3637 = vcmp.eq.s32.totalorder %v1560, %v2356
        %vm3638 = vcmp.eq.s32.totalorder %v1560, %v2357
        %vm3639 = vcmp.eq.s32.totalorder %v1560, %v2358
        %vm3640 = vcmp.eq.s32.totalorder %v1560, %v2359
        %vm3641 = vcmp.eq.s32.totalorder %v1560, %v2360
        %v3642 = vsel %vm3626, 1, 0
        %v3643 = vsel %vm3627, 1, 0
        %v3644 = vsel %vm3628, 1, 0
        %v3645 = vsel %vm3629, 1, 0
        %v3646 = vsel %vm3630, 1, 0
        %v3647 = vsel %vm3631, 1, 0
        %v3648 = vsel %vm3632, 1, 0
        %v3649 = vsel %vm3633, 1, 0
        %v3650 = vsel %vm3634, 1, 0
        %v3651 = vsel %vm3635, 1, 0
        %v3652 = vsel %vm3636, 1, 0
        %v3653 = vsel %vm3637, 1, 0
        %v3654 = vsel %vm3638, 1, 0
        %v3655 = vsel %vm3639, 1, 0
        %v3656 = vsel %vm3640, 1, 0
        %v3657 = vsel %vm3641, 1, 0
        %v3658 = vcvt.s32.f32 %v3642
        %v3659 = vcvt.s32.f32 %v3643
        %v3660 = vcvt.s32.f32 %v3644
        %v3661 = vcvt.s32.f32 %v3645
        %v3662 = vcvt.s32.f32 %v3646
        %v3663 = vcvt.s32.f32 %v3647
        %v3664 = vcvt.s32.f32 %v3648
        %v3665 = vcvt.s32.f32 %v3649
        %v3666 = vcvt.s32.f32 %v3650
        %v3667 = vcvt.s32.f32 %v3651
        %v3668 = vcvt.s32.f32 %v3652
        %v3669 = vcvt.s32.f32 %v3653
        %v3670 = vcvt.s32.f32 %v3654
        %v3671 = vcvt.s32.f32 %v3655
        %v3672 = vcvt.s32.f32 %v3656
        %v3673 = vcvt.s32.f32 %v3657
        %v3674 = vpack.c.bf16 %v3659, %v3658
        %v3675 = vpack.c.bf16 %v3661, %v3660
        %v3676 = vpack.c.bf16 %v3663, %v3662
        %v3677 = vpack.c.bf16 %v3665, %v3664
        %v3678 = vpack.c.bf16 %v3667, %v3666
        %v3679 = vpack.c.bf16 %v3669, %v3668
        %v3680 = vpack.c.bf16 %v3671, %v3670
        %v3681 = vpack.c.bf16 %v3673, %v3672
        %v3682 = vadd.bf16 %v3618, %v3674
        %v3683 = vadd.bf16 %v3619, %v3675
        %v3684 = vadd.bf16 %v3620, %v3676
        %v3685 = vadd.bf16 %v3621, %v3677
        %v3686 = vadd.bf16 %v3622, %v3678
        %v3687 = vadd.bf16 %v3623, %v3679
        %v3688 = vadd.bf16 %v3624, %v3680
        %v3689 = vadd.bf16 %v3625, %v3681
        %vm3690 = vcmp.eq.s32.totalorder %v1629, %v2345
        %vm3691 = vcmp.eq.s32.totalorder %v1629, %v2346
        %vm3692 = vcmp.eq.s32.totalorder %v1629, %v2347
        %vm3693 = vcmp.eq.s32.totalorder %v1629, %v2348
        %vm3694 = vcmp.eq.s32.totalorder %v1629, %v2349
        %vm3695 = vcmp.eq.s32.totalorder %v1629, %v2350
        %vm3696 = vcmp.eq.s32.totalorder %v1629, %v2351
        %vm3697 = vcmp.eq.s32.totalorder %v1629, %v2352
        %vm3698 = vcmp.eq.s32.totalorder %v1629, %v2353
        %vm3699 = vcmp.eq.s32.totalorder %v1629, %v2354
        %vm3700 = vcmp.eq.s32.totalorder %v1629, %v2355
        %vm3701 = vcmp.eq.s32.totalorder %v1629, %v2356
        %vm3702 = vcmp.eq.s32.totalorder %v1629, %v2357
        %vm3703 = vcmp.eq.s32.totalorder %v1629, %v2358
        %vm3704 = vcmp.eq.s32.totalorder %v1629, %v2359
        %vm3705 = vcmp.eq.s32.totalorder %v1629, %v2360
        %v3706 = vsel %vm3690, 1, 0
        %v3707 = vsel %vm3691, 1, 0
        %v3708 = vsel %vm3692, 1, 0
        %v3709 = vsel %vm3693, 1, 0
        %v3710 = vsel %vm3694, 1, 0
        %v3711 = vsel %vm3695, 1, 0
        %v3712 = vsel %vm3696, 1, 0
        %v3713 = vsel %vm3697, 1, 0
        %v3714 = vsel %vm3698, 1, 0
        %v3715 = vsel %vm3699, 1, 0
        %v3716 = vsel %vm3700, 1, 0
        %v3717 = vsel %vm3701, 1, 0
        %v3718 = vsel %vm3702, 1, 0
        %v3719 = vsel %vm3703, 1, 0
        %v3720 = vsel %vm3704, 1, 0
        %v3721 = vsel %vm3705, 1, 0
        %v3722 = vcvt.s32.f32 %v3706
        %v3723 = vcvt.s32.f32 %v3707
        %v3724 = vcvt.s32.f32 %v3708
        %v3725 = vcvt.s32.f32 %v3709
        %v3726 = vcvt.s32.f32 %v3710
        %v3727 = vcvt.s32.f32 %v3711
        %v3728 = vcvt.s32.f32 %v3712
        %v3729 = vcvt.s32.f32 %v3713
        %v3730 = vcvt.s32.f32 %v3714
        %v3731 = vcvt.s32.f32 %v3715
        %v3732 = vcvt.s32.f32 %v3716
        %v3733 = vcvt.s32.f32 %v3717
        %v3734 = vcvt.s32.f32 %v3718
        %v3735 = vcvt.s32.f32 %v3719
        %v3736 = vcvt.s32.f32 %v3720
        %v3737 = vcvt.s32.f32 %v3721
        %v3738 = vpack.c.bf16 %v3723, %v3722
        %v3739 = vpack.c.bf16 %v3725, %v3724
        %v3740 = vpack.c.bf16 %v3727, %v3726
        %v3741 = vpack.c.bf16 %v3729, %v3728
        %v3742 = vpack.c.bf16 %v3731, %v3730
        %v3743 = vpack.c.bf16 %v3733, %v3732
        %v3744 = vpack.c.bf16 %v3735, %v3734
        %v3745 = vpack.c.bf16 %v3737, %v3736
        %v3746 = vadd.bf16 %v3682, %v3738
        %v3747 = vadd.bf16 %v3683, %v3739
        %v3748 = vadd.bf16 %v3684, %v3740
        %v3749 = vadd.bf16 %v3685, %v3741
        %v3750 = vadd.bf16 %v3686, %v3742
        %v3751 = vadd.bf16 %v3687, %v3743
        %v3752 = vadd.bf16 %v3688, %v3744
        %v3753 = vadd.bf16 %v3689, %v3745
        %vm3754 = vcmp.eq.s32.totalorder %v1698, %v2345
        %vm3755 = vcmp.eq.s32.totalorder %v1698, %v2346
        %vm3756 = vcmp.eq.s32.totalorder %v1698, %v2347
        %vm3757 = vcmp.eq.s32.totalorder %v1698, %v2348
        %vm3758 = vcmp.eq.s32.totalorder %v1698, %v2349
        %vm3759 = vcmp.eq.s32.totalorder %v1698, %v2350
        %vm3760 = vcmp.eq.s32.totalorder %v1698, %v2351
        %vm3761 = vcmp.eq.s32.totalorder %v1698, %v2352
        %vm3762 = vcmp.eq.s32.totalorder %v1698, %v2353
        %vm3763 = vcmp.eq.s32.totalorder %v1698, %v2354
        %vm3764 = vcmp.eq.s32.totalorder %v1698, %v2355
        %vm3765 = vcmp.eq.s32.totalorder %v1698, %v2356
        %vm3766 = vcmp.eq.s32.totalorder %v1698, %v2357
        %vm3767 = vcmp.eq.s32.totalorder %v1698, %v2358
        %vm3768 = vcmp.eq.s32.totalorder %v1698, %v2359
        %vm3769 = vcmp.eq.s32.totalorder %v1698, %v2360
        %v3770 = vsel %vm3754, 1, 0
        %v3771 = vsel %vm3755, 1, 0
        %v3772 = vsel %vm3756, 1, 0
        %v3773 = vsel %vm3757, 1, 0
        %v3774 = vsel %vm3758, 1, 0
        %v3775 = vsel %vm3759, 1, 0
        %v3776 = vsel %vm3760, 1, 0
        %v3777 = vsel %vm3761, 1, 0
        %v3778 = vsel %vm3762, 1, 0
        %v3779 = vsel %vm3763, 1, 0
        %v3780 = vsel %vm3764, 1, 0
        %v3781 = vsel %vm3765, 1, 0
        %v3782 = vsel %vm3766, 1, 0
        %v3783 = vsel %vm3767, 1, 0
        %v3784 = vsel %vm3768, 1, 0
        %v3785 = vsel %vm3769, 1, 0
        %v3786 = vcvt.s32.f32 %v3770
        %v3787 = vcvt.s32.f32 %v3771
        %v3788 = vcvt.s32.f32 %v3772
        %v3789 = vcvt.s32.f32 %v3773
        %v3790 = vcvt.s32.f32 %v3774
        %v3791 = vcvt.s32.f32 %v3775
        %v3792 = vcvt.s32.f32 %v3776
        %v3793 = vcvt.s32.f32 %v3777
        %v3794 = vcvt.s32.f32 %v3778
        %v3795 = vcvt.s32.f32 %v3779
        %v3796 = vcvt.s32.f32 %v3780
        %v3797 = vcvt.s32.f32 %v3781
        %v3798 = vcvt.s32.f32 %v3782
        %v3799 = vcvt.s32.f32 %v3783
        %v3800 = vcvt.s32.f32 %v3784
        %v3801 = vcvt.s32.f32 %v3785
        %v3802 = vpack.c.bf16 %v3787, %v3786
        %v3803 = vpack.c.bf16 %v3789, %v3788
        %v3804 = vpack.c.bf16 %v3791, %v3790
        %v3805 = vpack.c.bf16 %v3793, %v3792
        %v3806 = vpack.c.bf16 %v3795, %v3794
        %v3807 = vpack.c.bf16 %v3797, %v3796
        %v3808 = vpack.c.bf16 %v3799, %v3798
        %v3809 = vpack.c.bf16 %v3801, %v3800
        %v3810 = vadd.bf16 %v3746, %v3802
        %v3811 = vadd.bf16 %v3747, %v3803
        %v3812 = vadd.bf16 %v3748, %v3804
        %v3813 = vadd.bf16 %v3749, %v3805
        %v3814 = vadd.bf16 %v3750, %v3806
        %v3815 = vadd.bf16 %v3751, %v3807
        %v3816 = vadd.bf16 %v3752, %v3808
        %v3817 = vadd.bf16 %v3753, %v3809
        %vm3818 = vcmp.eq.s32.totalorder %v1767, %v2345
        %vm3819 = vcmp.eq.s32.totalorder %v1767, %v2346
        %vm3820 = vcmp.eq.s32.totalorder %v1767, %v2347
        %vm3821 = vcmp.eq.s32.totalorder %v1767, %v2348
        %vm3822 = vcmp.eq.s32.totalorder %v1767, %v2349
        %vm3823 = vcmp.eq.s32.totalorder %v1767, %v2350
        %vm3824 = vcmp.eq.s32.totalorder %v1767, %v2351
        %vm3825 = vcmp.eq.s32.totalorder %v1767, %v2352
        %vm3826 = vcmp.eq.s32.totalorder %v1767, %v2353
        %vm3827 = vcmp.eq.s32.totalorder %v1767, %v2354
        %vm3828 = vcmp.eq.s32.totalorder %v1767, %v2355
        %vm3829 = vcmp.eq.s32.totalorder %v1767, %v2356
        %vm3830 = vcmp.eq.s32.totalorder %v1767, %v2357
        %vm3831 = vcmp.eq.s32.totalorder %v1767, %v2358
        %vm3832 = vcmp.eq.s32.totalorder %v1767, %v2359
        %vm3833 = vcmp.eq.s32.totalorder %v1767, %v2360
        %v3834 = vsel %vm3818, 1, 0
        %v3835 = vsel %vm3819, 1, 0
        %v3836 = vsel %vm3820, 1, 0
        %v3837 = vsel %vm3821, 1, 0
        %v3838 = vsel %vm3822, 1, 0
        %v3839 = vsel %vm3823, 1, 0
        %v3840 = vsel %vm3824, 1, 0
        %v3841 = vsel %vm3825, 1, 0
        %v3842 = vsel %vm3826, 1, 0
        %v3843 = vsel %vm3827, 1, 0
        %v3844 = vsel %vm3828, 1, 0
        %v3845 = vsel %vm3829, 1, 0
        %v3846 = vsel %vm3830, 1, 0
        %v3847 = vsel %vm3831, 1, 0
        %v3848 = vsel %vm3832, 1, 0
        %v3849 = vsel %vm3833, 1, 0
        %v3850 = vcvt.s32.f32 %v3834
        %v3851 = vcvt.s32.f32 %v3835
        %v3852 = vcvt.s32.f32 %v3836
        %v3853 = vcvt.s32.f32 %v3837
        %v3854 = vcvt.s32.f32 %v3838
        %v3855 = vcvt.s32.f32 %v3839
        %v3856 = vcvt.s32.f32 %v3840
        %v3857 = vcvt.s32.f32 %v3841
        %v3858 = vcvt.s32.f32 %v3842
        %v3859 = vcvt.s32.f32 %v3843
        %v3860 = vcvt.s32.f32 %v3844
        %v3861 = vcvt.s32.f32 %v3845
        %v3862 = vcvt.s32.f32 %v3846
        %v3863 = vcvt.s32.f32 %v3847
        %v3864 = vcvt.s32.f32 %v3848
        %v3865 = vcvt.s32.f32 %v3849
        %v3866 = vpack.c.bf16 %v3851, %v3850
        %v3867 = vpack.c.bf16 %v3853, %v3852
        %v3868 = vpack.c.bf16 %v3855, %v3854
        %v3869 = vpack.c.bf16 %v3857, %v3856
        %v3870 = vpack.c.bf16 %v3859, %v3858
        %v3871 = vpack.c.bf16 %v3861, %v3860
        %v3872 = vpack.c.bf16 %v3863, %v3862
        %v3873 = vpack.c.bf16 %v3865, %v3864
        %v3874 = vadd.bf16 %v3810, %v3866
        %v3875 = vadd.bf16 %v3811, %v3867
        %v3876 = vadd.bf16 %v3812, %v3868
        %v3877 = vadd.bf16 %v3813, %v3869
        %v3878 = vadd.bf16 %v3814, %v3870
        %v3879 = vadd.bf16 %v3815, %v3871
        %v3880 = vadd.bf16 %v3816, %v3872
        %v3881 = vadd.bf16 %v3817, %v3873
        %vm3882 = vcmp.eq.s32.totalorder %v1836, %v2345
        %vm3883 = vcmp.eq.s32.totalorder %v1836, %v2346
        %vm3884 = vcmp.eq.s32.totalorder %v1836, %v2347
        %vm3885 = vcmp.eq.s32.totalorder %v1836, %v2348
        %vm3886 = vcmp.eq.s32.totalorder %v1836, %v2349
        %vm3887 = vcmp.eq.s32.totalorder %v1836, %v2350
        %vm3888 = vcmp.eq.s32.totalorder %v1836, %v2351
        %vm3889 = vcmp.eq.s32.totalorder %v1836, %v2352
        %vm3890 = vcmp.eq.s32.totalorder %v1836, %v2353
        %vm3891 = vcmp.eq.s32.totalorder %v1836, %v2354
        %vm3892 = vcmp.eq.s32.totalorder %v1836, %v2355
        %vm3893 = vcmp.eq.s32.totalorder %v1836, %v2356
        %vm3894 = vcmp.eq.s32.totalorder %v1836, %v2357
        %vm3895 = vcmp.eq.s32.totalorder %v1836, %v2358
        %vm3896 = vcmp.eq.s32.totalorder %v1836, %v2359
        %vm3897 = vcmp.eq.s32.totalorder %v1836, %v2360
        %v3898 = vsel %vm3882, 1, 0
        %v3899 = vsel %vm3883, 1, 0
        %v3900 = vsel %vm3884, 1, 0
        %v3901 = vsel %vm3885, 1, 0
        %v3902 = vsel %vm3886, 1, 0
        %v3903 = vsel %vm3887, 1, 0
        %v3904 = vsel %vm3888, 1, 0
        %v3905 = vsel %vm3889, 1, 0
        %v3906 = vsel %vm3890, 1, 0
        %v3907 = vsel %vm3891, 1, 0
        %v3908 = vsel %vm3892, 1, 0
        %v3909 = vsel %vm3893, 1, 0
        %v3910 = vsel %vm3894, 1, 0
        %v3911 = vsel %vm3895, 1, 0
        %v3912 = vsel %vm3896, 1, 0
        %v3913 = vsel %vm3897, 1, 0
        %v3914 = vcvt.s32.f32 %v3898
        %v3915 = vcvt.s32.f32 %v3899
        %v3916 = vcvt.s32.f32 %v3900
        %v3917 = vcvt.s32.f32 %v3901
        %v3918 = vcvt.s32.f32 %v3902
        %v3919 = vcvt.s32.f32 %v3903
        %v3920 = vcvt.s32.f32 %v3904
        %v3921 = vcvt.s32.f32 %v3905
        %v3922 = vcvt.s32.f32 %v3906
        %v3923 = vcvt.s32.f32 %v3907
        %v3924 = vcvt.s32.f32 %v3908
        %v3925 = vcvt.s32.f32 %v3909
        %v3926 = vcvt.s32.f32 %v3910
        %v3927 = vcvt.s32.f32 %v3911
        %v3928 = vcvt.s32.f32 %v3912
        %v3929 = vcvt.s32.f32 %v3913
        %v3930 = vpack.c.bf16 %v3915, %v3914
        %v3931 = vpack.c.bf16 %v3917, %v3916
        %v3932 = vpack.c.bf16 %v3919, %v3918
        %v3933 = vpack.c.bf16 %v3921, %v3920
        %v3934 = vpack.c.bf16 %v3923, %v3922
        %v3935 = vpack.c.bf16 %v3925, %v3924
        %v3936 = vpack.c.bf16 %v3927, %v3926
        %v3937 = vpack.c.bf16 %v3929, %v3928
        %v3938 = vadd.bf16 %v3874, %v3930
        %v3939 = vadd.bf16 %v3875, %v3931
        %v3940 = vadd.bf16 %v3876, %v3932
        %v3941 = vadd.bf16 %v3877, %v3933
        %v3942 = vadd.bf16 %v3878, %v3934
        %v3943 = vadd.bf16 %v3879, %v3935
        %v3944 = vadd.bf16 %v3880, %v3936
        %v3945 = vadd.bf16 %v3881, %v3937
        %vm3946 = vcmp.eq.s32.totalorder %v1905, %v2345
        %vm3947 = vcmp.eq.s32.totalorder %v1905, %v2346
        %vm3948 = vcmp.eq.s32.totalorder %v1905, %v2347
        %vm3949 = vcmp.eq.s32.totalorder %v1905, %v2348
        %vm3950 = vcmp.eq.s32.totalorder %v1905, %v2349
        %vm3951 = vcmp.eq.s32.totalorder %v1905, %v2350
        %vm3952 = vcmp.eq.s32.totalorder %v1905, %v2351
        %vm3953 = vcmp.eq.s32.totalorder %v1905, %v2352
        %vm3954 = vcmp.eq.s32.totalorder %v1905, %v2353
        %vm3955 = vcmp.eq.s32.totalorder %v1905, %v2354
        %vm3956 = vcmp.eq.s32.totalorder %v1905, %v2355
        %vm3957 = vcmp.eq.s32.totalorder %v1905, %v2356
        %vm3958 = vcmp.eq.s32.totalorder %v1905, %v2357
        %vm3959 = vcmp.eq.s32.totalorder %v1905, %v2358
        %vm3960 = vcmp.eq.s32.totalorder %v1905, %v2359
        %vm3961 = vcmp.eq.s32.totalorder %v1905, %v2360
        %v3962 = vsel %vm3946, 1, 0
        %v3963 = vsel %vm3947, 1, 0
        %v3964 = vsel %vm3948, 1, 0
        %v3965 = vsel %vm3949, 1, 0
        %v3966 = vsel %vm3950, 1, 0
        %v3967 = vsel %vm3951, 1, 0
        %v3968 = vsel %vm3952, 1, 0
        %v3969 = vsel %vm3953, 1, 0
        %v3970 = vsel %vm3954, 1, 0
        %v3971 = vsel %vm3955, 1, 0
        %v3972 = vsel %vm3956, 1, 0
        %v3973 = vsel %vm3957, 1, 0
        %v3974 = vsel %vm3958, 1, 0
        %v3975 = vsel %vm3959, 1, 0
        %v3976 = vsel %vm3960, 1, 0
        %v3977 = vsel %vm3961, 1, 0
        %v3978 = vcvt.s32.f32 %v3962
        %v3979 = vcvt.s32.f32 %v3963
        %v3980 = vcvt.s32.f32 %v3964
        %v3981 = vcvt.s32.f32 %v3965
        %v3982 = vcvt.s32.f32 %v3966
        %v3983 = vcvt.s32.f32 %v3967
        %v3984 = vcvt.s32.f32 %v3968
        %v3985 = vcvt.s32.f32 %v3969
        %v3986 = vcvt.s32.f32 %v3970
        %v3987 = vcvt.s32.f32 %v3971
        %v3988 = vcvt.s32.f32 %v3972
        %v3989 = vcvt.s32.f32 %v3973
        %v3990 = vcvt.s32.f32 %v3974
        %v3991 = vcvt.s32.f32 %v3975
        %v3992 = vcvt.s32.f32 %v3976
        %v3993 = vcvt.s32.f32 %v3977
        %v3994 = vpack.c.bf16 %v3979, %v3978
        %v3995 = vpack.c.bf16 %v3981, %v3980
        %v3996 = vpack.c.bf16 %v3983, %v3982
        %v3997 = vpack.c.bf16 %v3985, %v3984
        %v3998 = vpack.c.bf16 %v3987, %v3986
        %v3999 = vpack.c.bf16 %v3989, %v3988
        %v4000 = vpack.c.bf16 %v3991, %v3990
        %v4001 = vpack.c.bf16 %v3993, %v3992
        %v4002 = vadd.bf16 %v3938, %v3994
        %v4003 = vadd.bf16 %v3939, %v3995
        %v4004 = vadd.bf16 %v3940, %v3996
        %v4005 = vadd.bf16 %v3941, %v3997
        %v4006 = vadd.bf16 %v3942, %v3998
        %v4007 = vadd.bf16 %v3943, %v3999
        %v4008 = vadd.bf16 %v3944, %v4000
        %v4009 = vadd.bf16 %v3945, %v4001
        %vm4010 = vcmp.eq.s32.totalorder %v1974, %v2345
        %vm4011 = vcmp.eq.s32.totalorder %v1974, %v2346
        %vm4012 = vcmp.eq.s32.totalorder %v1974, %v2347
        %vm4013 = vcmp.eq.s32.totalorder %v1974, %v2348
        %vm4014 = vcmp.eq.s32.totalorder %v1974, %v2349
        %vm4015 = vcmp.eq.s32.totalorder %v1974, %v2350
        %vm4016 = vcmp.eq.s32.totalorder %v1974, %v2351
        %vm4017 = vcmp.eq.s32.totalorder %v1974, %v2352
        %vm4018 = vcmp.eq.s32.totalorder %v1974, %v2353
        %vm4019 = vcmp.eq.s32.totalorder %v1974, %v2354
        %vm4020 = vcmp.eq.s32.totalorder %v1974, %v2355
        %vm4021 = vcmp.eq.s32.totalorder %v1974, %v2356
        %vm4022 = vcmp.eq.s32.totalorder %v1974, %v2357
        %vm4023 = vcmp.eq.s32.totalorder %v1974, %v2358
        %vm4024 = vcmp.eq.s32.totalorder %v1974, %v2359
        %vm4025 = vcmp.eq.s32.totalorder %v1974, %v2360
        %v4026 = vsel %vm4010, 1, 0
        %v4027 = vsel %vm4011, 1, 0
        %v4028 = vsel %vm4012, 1, 0
        %v4029 = vsel %vm4013, 1, 0
        %v4030 = vsel %vm4014, 1, 0
        %v4031 = vsel %vm4015, 1, 0
        %v4032 = vsel %vm4016, 1, 0
        %v4033 = vsel %vm4017, 1, 0
        %v4034 = vsel %vm4018, 1, 0
        %v4035 = vsel %vm4019, 1, 0
        %v4036 = vsel %vm4020, 1, 0
        %v4037 = vsel %vm4021, 1, 0
        %v4038 = vsel %vm4022, 1, 0
        %v4039 = vsel %vm4023, 1, 0
        %v4040 = vsel %vm4024, 1, 0
        %v4041 = vsel %vm4025, 1, 0
        %v4042 = vcvt.s32.f32 %v4026
        %v4043 = vcvt.s32.f32 %v4027
        %v4044 = vcvt.s32.f32 %v4028
        %v4045 = vcvt.s32.f32 %v4029
        %v4046 = vcvt.s32.f32 %v4030
        %v4047 = vcvt.s32.f32 %v4031
        %v4048 = vcvt.s32.f32 %v4032
        %v4049 = vcvt.s32.f32 %v4033
        %v4050 = vcvt.s32.f32 %v4034
        %v4051 = vcvt.s32.f32 %v4035
        %v4052 = vcvt.s32.f32 %v4036
        %v4053 = vcvt.s32.f32 %v4037
        %v4054 = vcvt.s32.f32 %v4038
        %v4055 = vcvt.s32.f32 %v4039
        %v4056 = vcvt.s32.f32 %v4040
        %v4057 = vcvt.s32.f32 %v4041
        %v4058 = vpack.c.bf16 %v4043, %v4042
        %v4059 = vpack.c.bf16 %v4045, %v4044
        %v4060 = vpack.c.bf16 %v4047, %v4046
        %v4061 = vpack.c.bf16 %v4049, %v4048
        %v4062 = vpack.c.bf16 %v4051, %v4050
        %v4063 = vpack.c.bf16 %v4053, %v4052
        %v4064 = vpack.c.bf16 %v4055, %v4054
        %v4065 = vpack.c.bf16 %v4057, %v4056
        %v4066 = vadd.bf16 %v4002, %v4058
        %v4067 = vadd.bf16 %v4003, %v4059
        %v4068 = vadd.bf16 %v4004, %v4060
        %v4069 = vadd.bf16 %v4005, %v4061
        %v4070 = vadd.bf16 %v4006, %v4062
        %v4071 = vadd.bf16 %v4007, %v4063
        %v4072 = vadd.bf16 %v4008, %v4064
        %v4073 = vadd.bf16 %v4009, %v4065
        %v4074 = vld [vmem:[%s3 + $0x4] sm:$0xf]
        %v4075 = vld [vmem:[%s3 + $0xc] sm:$0xf]
        %v4076 = vld [vmem:[%s3 + $0x14] sm:$0xf]
        %v4077 = vld [vmem:[%s3 + $0x1c] sm:$0xf]
        %v4078 = vld [vmem:[%s3 + $0x24] sm:$0xf]
        %v4079 = vld [vmem:[%s3 + $0x2c] sm:$0xf]
        %v4080 = vld [vmem:[%s3 + $0x34] sm:$0xf]
        %v4081 = vld [vmem:[%s3 + $0x3c] sm:$0xf]
        %v4082 = vld [vmem:[%s3 + $0x44] sm:$0xf]
        %v4083 = vld [vmem:[%s3 + $0x4c] sm:$0xf]
        %v4084 = vld [vmem:[%s3 + $0x54] sm:$0xf]
        %v4085 = vld [vmem:[%s3 + $0x5c] sm:$0xf]
        %v4086 = vld [vmem:[%s3 + $0x64] sm:$0xf]
        %v4087 = vld [vmem:[%s3 + $0x6c] sm:$0xf]
        %v4088 = vld [vmem:[%s3 + $0x74] sm:$0xf]
        %v4089 = vld [vmem:[%s3 + $0x7c] sm:$0xf]
        %v4106 = vunpack.c.l.b16 %v4074
        %v4107 = vunpack.c.l.b16 %v4075
        %v4108 = vunpack.c.l.b16 %v4076
        %v4109 = vunpack.c.l.b16 %v4077
        %v4110 = vunpack.c.l.b16 %v4078
        %v4111 = vunpack.c.l.b16 %v4079
        %v4112 = vunpack.c.l.b16 %v4080
        %v4113 = vunpack.c.l.b16 %v4081
        %v4114 = vunpack.c.l.b16 %v4082
        %v4115 = vunpack.c.l.b16 %v4083
        %v4116 = vunpack.c.l.b16 %v4084
        %v4117 = vunpack.c.l.b16 %v4085
        %v4118 = vunpack.c.l.b16 %v4086
        %v4119 = vunpack.c.l.b16 %v4087
        %v4120 = vunpack.c.l.b16 %v4088
        %v4121 = vunpack.c.l.b16 %v4089
        %v4122 = vpack.c.b16 %v4107, %v4106
        %v4123 = vpack.c.b16 %v4109, %v4108
        %v4124 = vpack.c.b16 %v4111, %v4110
        %v4125 = vpack.c.b16 %v4113, %v4112
        %v4126 = vpack.c.b16 %v4115, %v4114
        %v4127 = vpack.c.b16 %v4117, %v4116
        %v4128 = vpack.c.b16 %v4119, %v4118
        %v4129 = vpack.c.b16 %v4121, %v4120
        %4138 = vmatprep.subr.bf16.mxu0 0
        %4139 = vmatpush1.bf16.msra.mxu0 %v4066
        %4140 = vmatprep.subr.bf16.mxu0 0
        %4141 = vmatpush1.bf16.msra.mxu0 %v4067
        %4142 = vmatprep.subr.bf16.mxu0 0
        %4143 = vmatpush1.bf16.msra.mxu0 %v4068
        %4144 = vmatprep.subr.bf16.mxu0 0
        %4145 = vmatpush1.bf16.msra.mxu0 %v4069
        %4146 = vmatprep.subr.bf16.mxu0 0
        %4147 = vmatpush1.bf16.msra.mxu0 %v4070
        %4148 = vmatprep.subr.bf16.mxu0 0
        %4149 = vmatpush1.bf16.msra.mxu0 %v4071
        %4150 = vmatprep.subr.bf16.mxu0 0
        %4151 = vmatpush1.bf16.msra.mxu0 %v4072
        %4152 = vmatprep.subr.bf16.mxu0 0
        %4153 = vmatpush1.bf16.msra.mxu0 %v4073
        %4154 = vmatprep.subr.bf16.mxu0 0
        %4155 = vmatpush1.bf16.msra.mxu0 0
        %4156 = vmatprep.subr.bf16.mxu0 0
        %4157 = vmatpush1.bf16.msra.mxu0 0
        %4158 = vmatprep.subr.bf16.mxu0 0
        %4159 = vmatpush1.bf16.msra.mxu0 0
        %4160 = vmatprep.subr.bf16.mxu0 0
        %4161 = vmatpush1.bf16.msra.mxu0 0
        %4162 = vmatprep.subr.bf16.mxu0 0
        %4163 = vmatpush1.bf16.msra.mxu0 0
        %4164 = vmatprep.subr.bf16.mxu0 0
        %4165 = vmatpush1.bf16.msra.mxu0 0
        %4166 = vmatprep.subr.bf16.mxu0 0
        %4167 = vmatpush1.bf16.msra.mxu0 0
        %4168 = vmatprep.subr.bf16.mxu0 0
        %4169 = vmatpush1.bf16.msra.mxu0 0
        %4170 = vmatprep.mubr.bf16.mxu0 0
        %4171 = vmatmul.mubr.bf16.gmra.mrb[0].mxu0 %v4122
        %v4172 = vpop.f32.mrb[0].mxu0
        %v4173 = vadd.f32 0.0, %v4172
        %v4174 = vpop.f32.mrb[0].mxu0
        %v4175 = vpop.f32.mrb[0].mxu0
        %v4176 = vadd.f32 0.0, %v4175
        %v4177 = vpop.f32.mrb[0].mxu0
        %4178 = vmatprep.mubr.bf16.mxu0 0
        %4179 = vmatmul.mubr.bf16.gmra.mrb[0].mxu0 %v4123
        %v4180 = vpop.f32.mrb[0].mxu0
        %v4181 = vadd.f32 0.0, %v4180
        %v4182 = vpop.f32.mrb[0].mxu0
        %v4183 = vpop.f32.mrb[0].mxu0
        %v4184 = vadd.f32 0.0, %v4183
        %v4185 = vpop.f32.mrb[0].mxu0
        %4186 = vmatprep.mubr.bf16.mxu0 0
        %4187 = vmatmul.mubr.bf16.gmra.mrb[0].mxu0 %v4124
        %v4188 = vpop.f32.mrb[0].mxu0
        %v4189 = vadd.f32 0.0, %v4188
        %v4190 = vpop.f32.mrb[0].mxu0
        %v4191 = vpop.f32.mrb[0].mxu0
        %v4192 = vadd.f32 0.0, %v4191
        %v4193 = vpop.f32.mrb[0].mxu0
        %4194 = vmatprep.mubr.bf16.mxu0 0
        %4195 = vmatmul.mubr.bf16.gmra.mrb[0].mxu0 %v4125
        %v4196 = vpop.f32.mrb[0].mxu0
        %v4197 = vadd.f32 0.0, %v4196
        %v4198 = vpop.f32.mrb[0].mxu0
        %v4199 = vpop.f32.mrb[0].mxu0
        %v4200 = vadd.f32 0.0, %v4199
        %v4201 = vpop.f32.mrb[0].mxu0
        %4202 = vmatprep.mubr.bf16.mxu0 0
        %4203 = vmatmul.mubr.bf16.gmra.mrb[0].mxu0 %v4126
        %v4204 = vpop.f32.mrb[0].mxu0
        %v4205 = vadd.f32 0.0, %v4204
        %v4206 = vpop.f32.mrb[0].mxu0
        %v4207 = vpop.f32.mrb[0].mxu0
        %v4208 = vadd.f32 0.0, %v4207
        %v4209 = vpop.f32.mrb[0].mxu0
        %4210 = vmatprep.mubr.bf16.mxu0 0
        %4211 = vmatmul.mubr.bf16.gmra.mrb[0].mxu0 %v4127
        %v4212 = vpop.f32.mrb[0].mxu0
        %v4213 = vadd.f32 0.0, %v4212
        %v4214 = vpop.f32.mrb[0].mxu0
        %v4215 = vpop.f32.mrb[0].mxu0
        %v4216 = vadd.f32 0.0, %v4215
        %v4217 = vpop.f32.mrb[0].mxu0
        %4218 = vmatprep.mubr.bf16.mxu0 0
        %4219 = vmatmul.mubr.bf16.gmra.mrb[0].mxu0 %v4128
        %v4220 = vpop.f32.mrb[0].mxu0
        %v4221 = vadd.f32 0.0, %v4220
        %v4222 = vpop.f32.mrb[0].mxu0
        %v4223 = vpop.f32.mrb[0].mxu0
        %v4224 = vadd.f32 0.0, %v4223
        %v4225 = vpop.f32.mrb[0].mxu0
        %4226 = vmatprep.mubr.bf16.mxu0 0
        %4227 = vmatmul.mubr.bf16.gmra.mrb[0].mxu0 %v4129
        %v4228 = vpop.f32.mrb[0].mxu0
        %v4229 = vadd.f32 0.0, %v4228
        %v4230 = vpop.f32.mrb[0].mxu0
        %v4231 = vpop.f32.mrb[0].mxu0
        %v4232 = vadd.f32 0.0, %v4231
        %v4233 = vpop.f32.mrb[0].mxu0
        %4234 = vdwg.mxu0
        %v4235 = vadd.f32 %v3546, %v4173
        %v4236 = vadd.f32 %v3547, %v4176
        %v4237 = vadd.f32 %v3548, %v4181
        %v4238 = vadd.f32 %v3549, %v4184
        %v4239 = vadd.f32 %v3550, %v4189
        %v4240 = vadd.f32 %v3551, %v4192
        %v4241 = vadd.f32 %v3552, %v4197
        %v4242 = vadd.f32 %v3553, %v4200
        %v4243 = vadd.f32 %v3554, %v4205
        %v4244 = vadd.f32 %v3555, %v4208
        %v4245 = vadd.f32 %v3556, %v4213
        %v4246 = vadd.f32 %v3557, %v4216
        %v4247 = vadd.f32 %v3558, %v4221
        %v4248 = vadd.f32 %v3559, %v4224
        %v4249 = vadd.f32 %v3560, %v4229
        %v4250 = vadd.f32 %v3561, %v4232
        %v4251 = vld [vmem:[%s4] sm:$0xff]
        %v4252 = vld [vmem:[%s4 + $0x8] sm:$0xff]
        %v4253 = vld [vmem:[%s4 + $0x10] sm:$0xff]
        %v4254 = vld [vmem:[%s4 + $0x18] sm:$0xff]
        %v4255 = vld [vmem:[%s4 + $0x20] sm:$0xff]
        %v4256 = vld [vmem:[%s4 + $0x28] sm:$0xff]
        %v4257 = vld [vmem:[%s4 + $0x30] sm:$0xff]
        %v4258 = vld [vmem:[%s4 + $0x38] sm:$0xff]
        %v4259 = vld [vmem:[%s4 + $0x40] sm:$0xff]
        %v4260 = vld [vmem:[%s4 + $0x48] sm:$0xff]
        %v4261 = vld [vmem:[%s4 + $0x50] sm:$0xff]
        %v4262 = vld [vmem:[%s4 + $0x58] sm:$0xff]
        %v4263 = vld [vmem:[%s4 + $0x60] sm:$0xff]
        %v4264 = vld [vmem:[%s4 + $0x68] sm:$0xff]
        %v4265 = vld [vmem:[%s4 + $0x70] sm:$0xff]
        %v4266 = vld [vmem:[%s4 + $0x78] sm:$0xff]
        %4268 = vset.pattern.permute.xlu0 0
        %4269 = vperm.xlu0 %4268, %v4251
        %v4270 = vpop.permute.xlu0 %4269
        %4273 = vset.pattern.permute.xlu0 0
        %4274 = vperm.xlu0 %4273, %v4252
        %v4275 = vpop.permute.xlu0 %4274
        %4278 = vset.pattern.permute.xlu0 0
        %4279 = vperm.xlu0 %4278, %v4253
        %v4280 = vpop.permute.xlu0 %4279
        %4283 = vset.pattern.permute.xlu0 0
        %4284 = vperm.xlu0 %4283, %v4254
        %v4285 = vpop.permute.xlu0 %4284
        %4288 = vset.pattern.permute.xlu0 0
        %4289 = vperm.xlu0 %4288, %v4255
        %v4290 = vpop.permute.xlu0 %4289
        %4293 = vset.pattern.permute.xlu0 0
        %4294 = vperm.xlu0 %4293, %v4256
        %v4295 = vpop.permute.xlu0 %4294
        %4298 = vset.pattern.permute.xlu0 0
        %4299 = vperm.xlu0 %4298, %v4257
        %v4300 = vpop.permute.xlu0 %4299
        %4303 = vset.pattern.permute.xlu0 0
        %4304 = vperm.xlu0 %4303, %v4258
        %v4305 = vpop.permute.xlu0 %4304
        %4308 = vset.pattern.permute.xlu0 0
        %4309 = vperm.xlu0 %4308, %v4259
        %v4310 = vpop.permute.xlu0 %4309
        %4313 = vset.pattern.permute.xlu0 0
        %4314 = vperm.xlu0 %4313, %v4260
        %v4315 = vpop.permute.xlu0 %4314
        %4318 = vset.pattern.permute.xlu0 0
        %4319 = vperm.xlu0 %4318, %v4261
        %v4320 = vpop.permute.xlu0 %4319
        %4323 = vset.pattern.permute.xlu0 0
        %4324 = vperm.xlu0 %4323, %v4262
        %v4325 = vpop.permute.xlu0 %4324
        %4328 = vset.pattern.permute.xlu0 0
        %4329 = vperm.xlu0 %4328, %v4263
        %v4330 = vpop.permute.xlu0 %4329
        %4333 = vset.pattern.permute.xlu0 0
        %4334 = vperm.xlu0 %4333, %v4264
        %v4335 = vpop.permute.xlu0 %4334
        %4338 = vset.pattern.permute.xlu0 0
        %4339 = vperm.xlu0 %4338, %v4265
        %v4340 = vpop.permute.xlu0 %4339
        %4343 = vset.pattern.permute.xlu0 0
        %4344 = vperm.xlu0 %4343, %v4266
        %v4345 = vpop.permute.xlu0 %4344
        %v4347 = vadd.f32 %v4235, %v4270
        %v4348 = vadd.f32 %v4236, %v4275
        %v4349 = vadd.f32 %v4237, %v4280
        %v4350 = vadd.f32 %v4238, %v4285
        %v4351 = vadd.f32 %v4239, %v4290
        %v4352 = vadd.f32 %v4240, %v4295
        %v4353 = vadd.f32 %v4241, %v4300
        %v4354 = vadd.f32 %v4242, %v4305
        %v4355 = vadd.f32 %v4243, %v4310
        %v4356 = vadd.f32 %v4244, %v4315
        %v4357 = vadd.f32 %v4245, %v4320
        %v4358 = vadd.f32 %v4246, %v4325
        %v4359 = vadd.f32 %v4247, %v4330
        %v4360 = vadd.f32 %v4248, %v4335
        %v4361 = vadd.f32 %v4249, %v4340
        %v4362 = vadd.f32 %v4250, %v4345
        %v4363 = vmax.f32 %v4347, 0.0
        %v4364 = vmax.f32 %v4348, 0.0
        %v4365 = vmax.f32 %v4349, 0.0
        %v4366 = vmax.f32 %v4350, 0.0
        %v4367 = vmax.f32 %v4351, 0.0
        %v4368 = vmax.f32 %v4352, 0.0
        %v4369 = vmax.f32 %v4353, 0.0
        %v4370 = vmax.f32 %v4354, 0.0
        %v4371 = vmax.f32 %v4355, 0.0
        %v4372 = vmax.f32 %v4356, 0.0
        %v4373 = vmax.f32 %v4357, 0.0
        %v4374 = vmax.f32 %v4358, 0.0
        %v4375 = vmax.f32 %v4359, 0.0
        %v4376 = vmax.f32 %v4360, 0.0
        %v4377 = vmax.f32 %v4361, 0.0
        %v4378 = vmax.f32 %v4362, 0.0
        %v4379 = vld [vmem:[%s5] sm:$0xf]
        %v4380 = vld [vmem:[%s5 + $0x4] sm:$0xf]
        %v4381 = vld [vmem:[%s5 + $0x8] sm:$0xf]
        %v4382 = vld [vmem:[%s5 + $0xc] sm:$0xf]
        %v4383 = vld [vmem:[%s5 + $0x10] sm:$0xf]
        %v4384 = vld [vmem:[%s5 + $0x14] sm:$0xf]
        %v4385 = vld [vmem:[%s5 + $0x18] sm:$0xf]
        %v4386 = vld [vmem:[%s5 + $0x1c] sm:$0xf]
        %v4387 = vld [vmem:[%s5 + $0x20] sm:$0xf]
        %v4388 = vld [vmem:[%s5 + $0x24] sm:$0xf]
        %v4389 = vld [vmem:[%s5 + $0x28] sm:$0xf]
        %v4390 = vld [vmem:[%s5 + $0x2c] sm:$0xf]
        %v4391 = vld [vmem:[%s5 + $0x30] sm:$0xf]
        %v4392 = vld [vmem:[%s5 + $0x34] sm:$0xf]
        %v4393 = vld [vmem:[%s5 + $0x38] sm:$0xf]
        %v4394 = vld [vmem:[%s5 + $0x3c] sm:$0xf]
        %v4395 = vld [vmem:[%s5 + $0x40] sm:$0xf]
        %v4396 = vld [vmem:[%s5 + $0x44] sm:$0xf]
        %v4397 = vld [vmem:[%s5 + $0x48] sm:$0xf]
        %v4398 = vld [vmem:[%s5 + $0x4c] sm:$0xf]
        %v4399 = vld [vmem:[%s5 + $0x50] sm:$0xf]
        %v4400 = vld [vmem:[%s5 + $0x54] sm:$0xf]
        %v4401 = vld [vmem:[%s5 + $0x58] sm:$0xf]
        %v4402 = vld [vmem:[%s5 + $0x5c] sm:$0xf]
        %v4403 = vld [vmem:[%s5 + $0x60] sm:$0xf]
        %v4404 = vld [vmem:[%s5 + $0x64] sm:$0xf]
        %v4405 = vld [vmem:[%s5 + $0x68] sm:$0xf]
        %v4406 = vld [vmem:[%s5 + $0x6c] sm:$0xf]
        %v4407 = vld [vmem:[%s5 + $0x70] sm:$0xf]
        %v4408 = vld [vmem:[%s5 + $0x74] sm:$0xf]
        %v4409 = vld [vmem:[%s5 + $0x78] sm:$0xf]
        %v4410 = vld [vmem:[%s5 + $0x7c] sm:$0xf]
        %v4411 = vld [vmem:[%s6] sm:$0xff]
        %v4412 = vld [vmem:[%s6 + $0x8] sm:$0xff]
        %v4413 = vld [vmem:[%s6 + $0x10] sm:$0xff]
        %v4414 = vld [vmem:[%s6 + $0x18] sm:$0xff]
        %v4415 = vld [vmem:[%s6 + $0x20] sm:$0xff]
        %v4416 = vld [vmem:[%s6 + $0x28] sm:$0xff]
        %v4417 = vld [vmem:[%s6 + $0x30] sm:$0xff]
        %v4418 = vld [vmem:[%s6 + $0x38] sm:$0xff]
        %v4419 = vld [vmem:[%s6 + $0x40] sm:$0xff]
        %v4420 = vld [vmem:[%s6 + $0x48] sm:$0xff]
        %v4421 = vld [vmem:[%s6 + $0x50] sm:$0xff]
        %v4422 = vld [vmem:[%s6 + $0x58] sm:$0xff]
        %v4423 = vld [vmem:[%s6 + $0x60] sm:$0xff]
        %v4424 = vld [vmem:[%s6 + $0x68] sm:$0xff]
        %v4425 = vld [vmem:[%s6 + $0x70] sm:$0xff]
        %v4426 = vld [vmem:[%s6 + $0x78] sm:$0xff]
        %v4427 = vld [vmem:[%s6 + $0x80] sm:$0xff]
        %v4428 = vld [vmem:[%s6 + $0x88] sm:$0xff]
        %v4429 = vld [vmem:[%s6 + $0x90] sm:$0xff]
        %v4430 = vld [vmem:[%s6 + $0x98] sm:$0xff]
        %v4431 = vld [vmem:[%s6 + $0xa0] sm:$0xff]
        %v4432 = vld [vmem:[%s6 + $0xa8] sm:$0xff]
        %v4433 = vld [vmem:[%s6 + $0xb0] sm:$0xff]
        %v4434 = vld [vmem:[%s6 + $0xb8] sm:$0xff]
        %v4435 = vld [vmem:[%s6 + $0xc0] sm:$0xff]
        %v4436 = vld [vmem:[%s6 + $0xc8] sm:$0xff]
        %v4437 = vld [vmem:[%s6 + $0xd0] sm:$0xff]
        %v4438 = vld [vmem:[%s6 + $0xd8] sm:$0xff]
        %v4439 = vld [vmem:[%s6 + $0xe0] sm:$0xff]
        %v4440 = vld [vmem:[%s6 + $0xe8] sm:$0xff]
        %v4441 = vld [vmem:[%s6 + $0xf0] sm:$0xff]
        %v4442 = vld [vmem:[%s6 + $0xf8] sm:$0xff]
        %v4443 = vpack.c.bf16 %v4364, %v4363
        %v4444 = vpack.c.bf16 %v4366, %v4365
        %v4445 = vpack.c.bf16 %v4368, %v4367
        %v4446 = vpack.c.bf16 %v4370, %v4369
        %v4447 = vpack.c.bf16 %v4372, %v4371
        %v4448 = vpack.c.bf16 %v4374, %v4373
        %v4449 = vpack.c.bf16 %v4376, %v4375
        %v4450 = vpack.c.bf16 %v4378, %v4377
        %4452 = vset.pattern.permute.xlu0 0
        %4453 = vperm.xlu0 %4452, %v4411
        %v4454 = vpop.permute.xlu0 %4453
        %4457 = vset.pattern.permute.xlu0 0
        %4458 = vperm.xlu0 %4457, %v4412
        %v4459 = vpop.permute.xlu0 %4458
        %4462 = vset.pattern.permute.xlu0 0
        %4463 = vperm.xlu0 %4462, %v4413
        %v4464 = vpop.permute.xlu0 %4463
        %4467 = vset.pattern.permute.xlu0 0
        %4468 = vperm.xlu0 %4467, %v4414
        %v4469 = vpop.permute.xlu0 %4468
        %4472 = vset.pattern.permute.xlu0 0
        %4473 = vperm.xlu0 %4472, %v4415
        %v4474 = vpop.permute.xlu0 %4473
        %4477 = vset.pattern.permute.xlu0 0
        %4478 = vperm.xlu0 %4477, %v4416
        %v4479 = vpop.permute.xlu0 %4478
        %4482 = vset.pattern.permute.xlu0 0
        %4483 = vperm.xlu0 %4482, %v4417
        %v4484 = vpop.permute.xlu0 %4483
        %4487 = vset.pattern.permute.xlu0 0
        %4488 = vperm.xlu0 %4487, %v4418
        %v4489 = vpop.permute.xlu0 %4488
        %4492 = vset.pattern.permute.xlu0 0
        %4493 = vperm.xlu0 %4492, %v4419
        %v4494 = vpop.permute.xlu0 %4493
        %4497 = vset.pattern.permute.xlu0 0
        %4498 = vperm.xlu0 %4497, %v4420
        %v4499 = vpop.permute.xlu0 %4498
        %4502 = vset.pattern.permute.xlu0 0
        %4503 = vperm.xlu0 %4502, %v4421
        %v4504 = vpop.permute.xlu0 %4503
        %4507 = vset.pattern.permute.xlu0 0
        %4508 = vperm.xlu0 %4507, %v4422
        %v4509 = vpop.permute.xlu0 %4508
        %4512 = vset.pattern.permute.xlu0 0
        %4513 = vperm.xlu0 %4512, %v4423
        %v4514 = vpop.permute.xlu0 %4513
        %4517 = vset.pattern.permute.xlu0 0
        %4518 = vperm.xlu0 %4517, %v4424
        %v4519 = vpop.permute.xlu0 %4518
        %4522 = vset.pattern.permute.xlu0 0
        %4523 = vperm.xlu0 %4522, %v4425
        %v4524 = vpop.permute.xlu0 %4523
        %4527 = vset.pattern.permute.xlu0 0
        %4528 = vperm.xlu0 %4527, %v4426
        %v4529 = vpop.permute.xlu0 %4528
        %4532 = vset.pattern.permute.xlu0 0
        %4533 = vperm.xlu0 %4532, %v4427
        %v4534 = vpop.permute.xlu0 %4533
        %4537 = vset.pattern.permute.xlu0 0
        %4538 = vperm.xlu0 %4537, %v4428
        %v4539 = vpop.permute.xlu0 %4538
        %4542 = vset.pattern.permute.xlu0 0
        %4543 = vperm.xlu0 %4542, %v4429
        %v4544 = vpop.permute.xlu0 %4543
        %4547 = vset.pattern.permute.xlu0 0
        %4548 = vperm.xlu0 %4547, %v4430
        %v4549 = vpop.permute.xlu0 %4548
        %4552 = vset.pattern.permute.xlu0 0
        %4553 = vperm.xlu0 %4552, %v4431
        %v4554 = vpop.permute.xlu0 %4553
        %4557 = vset.pattern.permute.xlu0 0
        %4558 = vperm.xlu0 %4557, %v4432
        %v4559 = vpop.permute.xlu0 %4558
        %4562 = vset.pattern.permute.xlu0 0
        %4563 = vperm.xlu0 %4562, %v4433
        %v4564 = vpop.permute.xlu0 %4563
        %4567 = vset.pattern.permute.xlu0 0
        %4568 = vperm.xlu0 %4567, %v4434
        %v4569 = vpop.permute.xlu0 %4568
        %4572 = vset.pattern.permute.xlu0 0
        %4573 = vperm.xlu0 %4572, %v4435
        %v4574 = vpop.permute.xlu0 %4573
        %4577 = vset.pattern.permute.xlu0 0
        %4578 = vperm.xlu0 %4577, %v4436
        %v4579 = vpop.permute.xlu0 %4578
        %4582 = vset.pattern.permute.xlu0 0
        %4583 = vperm.xlu0 %4582, %v4437
        %v4584 = vpop.permute.xlu0 %4583
        %4587 = vset.pattern.permute.xlu0 0
        %4588 = vperm.xlu0 %4587, %v4438
        %v4589 = vpop.permute.xlu0 %4588
        %4592 = vset.pattern.permute.xlu0 0
        %4593 = vperm.xlu0 %4592, %v4439
        %v4594 = vpop.permute.xlu0 %4593
        %4597 = vset.pattern.permute.xlu0 0
        %4598 = vperm.xlu0 %4597, %v4440
        %v4599 = vpop.permute.xlu0 %4598
        %4602 = vset.pattern.permute.xlu0 0
        %4603 = vperm.xlu0 %4602, %v4441
        %v4604 = vpop.permute.xlu0 %4603
        %4607 = vset.pattern.permute.xlu0 0
        %4608 = vperm.xlu0 %4607, %v4442
        %v4609 = vpop.permute.xlu0 %4608
        %v4643 = vunpack.c.l.b16 %v4379
        %v4644 = vunpack.c.l.b16 %v4380
        %v4645 = vunpack.c.l.b16 %v4381
        %v4646 = vunpack.c.l.b16 %v4382
        %v4647 = vunpack.c.l.b16 %v4383
        %v4648 = vunpack.c.l.b16 %v4384
        %v4649 = vunpack.c.l.b16 %v4385
        %v4650 = vunpack.c.l.b16 %v4386
        %v4651 = vunpack.c.l.b16 %v4387
        %v4652 = vunpack.c.l.b16 %v4388
        %v4653 = vunpack.c.l.b16 %v4389
        %v4654 = vunpack.c.l.b16 %v4390
        %v4655 = vunpack.c.l.b16 %v4391
        %v4656 = vunpack.c.l.b16 %v4392
        %v4657 = vunpack.c.l.b16 %v4393
        %v4658 = vunpack.c.l.b16 %v4394
        %v4659 = vunpack.c.l.b16 %v4395
        %v4660 = vunpack.c.l.b16 %v4396
        %v4661 = vunpack.c.l.b16 %v4397
        %v4662 = vunpack.c.l.b16 %v4398
        %v4663 = vunpack.c.l.b16 %v4399
        %v4664 = vunpack.c.l.b16 %v4400
        %v4665 = vunpack.c.l.b16 %v4401
        %v4666 = vunpack.c.l.b16 %v4402
        %v4667 = vunpack.c.l.b16 %v4403
        %v4668 = vunpack.c.l.b16 %v4404
        %v4669 = vunpack.c.l.b16 %v4405
        %v4670 = vunpack.c.l.b16 %v4406
        %v4671 = vunpack.c.l.b16 %v4407
        %v4672 = vunpack.c.l.b16 %v4408
        %v4673 = vunpack.c.l.b16 %v4409
        %v4674 = vunpack.c.l.b16 %v4410
        %v4675 = vpack.c.b16 %v4644, %v4643
        %v4676 = vpack.c.b16 %v4646, %v4645
        %v4677 = vpack.c.b16 %v4648, %v4647
        %v4678 = vpack.c.b16 %v4650, %v4649
        %v4679 = vpack.c.b16 %v4652, %v4651
        %v4680 = vpack.c.b16 %v4654, %v4653
        %v4681 = vpack.c.b16 %v4656, %v4655
        %v4682 = vpack.c.b16 %v4658, %v4657
        %v4683 = vpack.c.b16 %v4660, %v4659
        %v4684 = vpack.c.b16 %v4662, %v4661
        %v4685 = vpack.c.b16 %v4664, %v4663
        %v4686 = vpack.c.b16 %v4666, %v4665
        %v4687 = vpack.c.b16 %v4668, %v4667
        %v4688 = vpack.c.b16 %v4670, %v4669
        %v4689 = vpack.c.b16 %v4672, %v4671
        %v4690 = vpack.c.b16 %v4674, %v4673
        %4707 = vmatprep.subr.bf16.mxu0 0
        %4708 = vmatpush1.bf16.msra.mxu0 %v4443
        %4709 = vmatprep.subr.bf16.mxu0 0
        %4710 = vmatpush1.bf16.msra.mxu0 %v4444
        %4711 = vmatprep.subr.bf16.mxu0 0
        %4712 = vmatpush1.bf16.msra.mxu0 %v4445
        %4713 = vmatprep.subr.bf16.mxu0 0
        %4714 = vmatpush1.bf16.msra.mxu0 %v4446
        %4715 = vmatprep.subr.bf16.mxu0 0
        %4716 = vmatpush1.bf16.msra.mxu0 %v4447
        %4717 = vmatprep.subr.bf16.mxu0 0
        %4718 = vmatpush1.bf16.msra.mxu0 %v4448
        %4719 = vmatprep.subr.bf16.mxu0 0
        %4720 = vmatpush1.bf16.msra.mxu0 %v4449
        %4721 = vmatprep.subr.bf16.mxu0 0
        %4722 = vmatpush1.bf16.msra.mxu0 %v4450
        %4723 = vmatprep.subr.bf16.mxu0 0
        %4724 = vmatpush1.bf16.msra.mxu0 0
        %4725 = vmatprep.subr.bf16.mxu0 0
        %4726 = vmatpush1.bf16.msra.mxu0 0
        %4727 = vmatprep.subr.bf16.mxu0 0
        %4728 = vmatpush1.bf16.msra.mxu0 0
        %4729 = vmatprep.subr.bf16.mxu0 0
        %4730 = vmatpush1.bf16.msra.mxu0 0
        %4731 = vmatprep.subr.bf16.mxu0 0
        %4732 = vmatpush1.bf16.msra.mxu0 0
        %4733 = vmatprep.subr.bf16.mxu0 0
        %4734 = vmatpush1.bf16.msra.mxu0 0
        %4735 = vmatprep.subr.bf16.mxu0 0
        %4736 = vmatpush1.bf16.msra.mxu0 0
        %4737 = vmatprep.subr.bf16.mxu0 0
        %4738 = vmatpush1.bf16.msra.mxu0 0
        %4739 = vmatprep.mubr.bf16.mxu0 0
        %4740 = vmatmul.mubr.bf16.gmra.mrb[0].mxu0 %v4675
        %v4741 = vpop.f32.mrb[0].mxu0
        %v4742 = vadd.f32 %v4454, %v4741
        %v4743 = vpop.f32.mrb[0].mxu0
        %v4744 = vpop.f32.mrb[0].mxu0
        %v4745 = vadd.f32 %v4459, %v4744
        %v4746 = vpop.f32.mrb[0].mxu0
        %4747 = vmatprep.mubr.bf16.mxu0 0
        %4748 = vmatmul.mubr.bf16.gmra.mrb[0].mxu0 %v4676
        %v4749 = vpop.f32.mrb[0].mxu0
        %v4750 = vadd.f32 %v4464, %v4749
        %v4751 = vpop.f32.mrb[0].mxu0
        %v4752 = vpop.f32.mrb[0].mxu0
        %v4753 = vadd.f32 %v4469, %v4752
        %v4754 = vpop.f32.mrb[0].mxu0
        %4755 = vmatprep.mubr.bf16.mxu0 0
        %4756 = vmatmul.mubr.bf16.gmra.mrb[0].mxu0 %v4677
        %v4757 = vpop.f32.mrb[0].mxu0
        %v4758 = vadd.f32 %v4474, %v4757
        %v4759 = vpop.f32.mrb[0].mxu0
        %v4760 = vpop.f32.mrb[0].mxu0
        %v4761 = vadd.f32 %v4479, %v4760
        %v4762 = vpop.f32.mrb[0].mxu0
        %4763 = vmatprep.mubr.bf16.mxu0 0
        %4764 = vmatmul.mubr.bf16.gmra.mrb[0].mxu0 %v4678
        %v4765 = vpop.f32.mrb[0].mxu0
        %v4766 = vadd.f32 %v4484, %v4765
        %v4767 = vpop.f32.mrb[0].mxu0
        %v4768 = vpop.f32.mrb[0].mxu0
        %v4769 = vadd.f32 %v4489, %v4768
        %v4770 = vpop.f32.mrb[0].mxu0
        %4771 = vmatprep.mubr.bf16.mxu0 0
        %4772 = vmatmul.mubr.bf16.gmra.mrb[0].mxu0 %v4679
        %v4773 = vpop.f32.mrb[0].mxu0
        %v4774 = vadd.f32 %v4494, %v4773
        %v4775 = vpop.f32.mrb[0].mxu0
        %v4776 = vpop.f32.mrb[0].mxu0
        %v4777 = vadd.f32 %v4499, %v4776
        %v4778 = vpop.f32.mrb[0].mxu0
        %4779 = vmatprep.mubr.bf16.mxu0 0
        %4780 = vmatmul.mubr.bf16.gmra.mrb[0].mxu0 %v4680
        %v4781 = vpop.f32.mrb[0].mxu0
        %v4782 = vadd.f32 %v4504, %v4781
        %v4783 = vpop.f32.mrb[0].mxu0
        %v4784 = vpop.f32.mrb[0].mxu0
        %v4785 = vadd.f32 %v4509, %v4784
        %v4786 = vpop.f32.mrb[0].mxu0
        %4787 = vmatprep.mubr.bf16.mxu0 0
        %4788 = vmatmul.mubr.bf16.gmra.mrb[0].mxu0 %v4681
        %v4789 = vpop.f32.mrb[0].mxu0
        %v4790 = vadd.f32 %v4514, %v4789
        %v4791 = vpop.f32.mrb[0].mxu0
        %v4792 = vpop.f32.mrb[0].mxu0
        %v4793 = vadd.f32 %v4519, %v4792
        %v4794 = vpop.f32.mrb[0].mxu0
        %4795 = vmatprep.mubr.bf16.mxu0 0
        %4796 = vmatmul.mubr.bf16.gmra.mrb[0].mxu0 %v4682
        %v4797 = vpop.f32.mrb[0].mxu0
        %v4798 = vadd.f32 %v4524, %v4797
        %v4799 = vpop.f32.mrb[0].mxu0
        %v4800 = vpop.f32.mrb[0].mxu0
        %v4801 = vadd.f32 %v4529, %v4800
        %v4802 = vpop.f32.mrb[0].mxu0
        %4803 = vmatprep.mubr.bf16.mxu0 0
        %4804 = vmatmul.mubr.bf16.gmra.mrb[0].mxu0 %v4683
        %v4805 = vpop.f32.mrb[0].mxu0
        %v4806 = vadd.f32 %v4534, %v4805
        %v4807 = vpop.f32.mrb[0].mxu0
        %v4808 = vpop.f32.mrb[0].mxu0
        %v4809 = vadd.f32 %v4539, %v4808
        %v4810 = vpop.f32.mrb[0].mxu0
        %4811 = vmatprep.mubr.bf16.mxu0 0
        %4812 = vmatmul.mubr.bf16.gmra.mrb[0].mxu0 %v4684
        %v4813 = vpop.f32.mrb[0].mxu0
        %v4814 = vadd.f32 %v4544, %v4813
        %v4815 = vpop.f32.mrb[0].mxu0
        %v4816 = vpop.f32.mrb[0].mxu0
        %v4817 = vadd.f32 %v4549, %v4816
        %v4818 = vpop.f32.mrb[0].mxu0
        %4819 = vmatprep.mubr.bf16.mxu0 0
        %4820 = vmatmul.mubr.bf16.gmra.mrb[0].mxu0 %v4685
        %v4821 = vpop.f32.mrb[0].mxu0
        %v4822 = vadd.f32 %v4554, %v4821
        %v4823 = vpop.f32.mrb[0].mxu0
        %v4824 = vpop.f32.mrb[0].mxu0
        %v4825 = vadd.f32 %v4559, %v4824
        %v4826 = vpop.f32.mrb[0].mxu0
        %4827 = vmatprep.mubr.bf16.mxu0 0
        %4828 = vmatmul.mubr.bf16.gmra.mrb[0].mxu0 %v4686
        %v4829 = vpop.f32.mrb[0].mxu0
        %v4830 = vadd.f32 %v4564, %v4829
        %v4831 = vpop.f32.mrb[0].mxu0
        %v4832 = vpop.f32.mrb[0].mxu0
        %v4833 = vadd.f32 %v4569, %v4832
        %v4834 = vpop.f32.mrb[0].mxu0
        %4835 = vmatprep.mubr.bf16.mxu0 0
        %4836 = vmatmul.mubr.bf16.gmra.mrb[0].mxu0 %v4687
        %v4837 = vpop.f32.mrb[0].mxu0
        %v4838 = vadd.f32 %v4574, %v4837
        %v4839 = vpop.f32.mrb[0].mxu0
        %v4840 = vpop.f32.mrb[0].mxu0
        %v4841 = vadd.f32 %v4579, %v4840
        %v4842 = vpop.f32.mrb[0].mxu0
        %4843 = vmatprep.mubr.bf16.mxu0 0
        %4844 = vmatmul.mubr.bf16.gmra.mrb[0].mxu0 %v4688
        %v4845 = vpop.f32.mrb[0].mxu0
        %v4846 = vadd.f32 %v4584, %v4845
        %v4847 = vpop.f32.mrb[0].mxu0
        %v4848 = vpop.f32.mrb[0].mxu0
        %v4849 = vadd.f32 %v4589, %v4848
        %v4850 = vpop.f32.mrb[0].mxu0
        %4851 = vmatprep.mubr.bf16.mxu0 0
        %4852 = vmatmul.mubr.bf16.gmra.mrb[0].mxu0 %v4689
        %v4853 = vpop.f32.mrb[0].mxu0
        %v4854 = vadd.f32 %v4594, %v4853
        %v4855 = vpop.f32.mrb[0].mxu0
        %v4856 = vpop.f32.mrb[0].mxu0
        %v4857 = vadd.f32 %v4599, %v4856
        %v4858 = vpop.f32.mrb[0].mxu0
        %4859 = vmatprep.mubr.bf16.mxu0 0
        %4860 = vmatmul.mubr.bf16.gmra.mrb[0].mxu0 %v4690
        %v4861 = vpop.f32.mrb[0].mxu0
        %v4862 = vadd.f32 %v4604, %v4861
        %v4863 = vpop.f32.mrb[0].mxu0
        %v4864 = vpop.f32.mrb[0].mxu0
        %v4865 = vadd.f32 %v4609, %v4864
        %v4866 = vpop.f32.mrb[0].mxu0
        %4867 = vdwg.mxu0
        %4868 = vst [vmem:[%s332] sm:$0xff] %v4742
        %4869 = vst [vmem:[%s332 + $0x8] sm:$0xff] %v4745
        %4870 = vst [vmem:[%s332 + $0x10] sm:$0xff] %v4750
        %4871 = vst [vmem:[%s332 + $0x18] sm:$0xff] %v4753
        %4872 = vst [vmem:[%s332 + $0x20] sm:$0xff] %v4758
        %4873 = vst [vmem:[%s332 + $0x28] sm:$0xff] %v4761
        %4874 = vst [vmem:[%s332 + $0x30] sm:$0xff] %v4766
        %4875 = vst [vmem:[%s332 + $0x38] sm:$0xff] %v4769
        %4876 = vst [vmem:[%s332 + $0x40] sm:$0xff] %v4774
        %4877 = vst [vmem:[%s332 + $0x48] sm:$0xff] %v4777
        %4878 = vst [vmem:[%s332 + $0x50] sm:$0xff] %v4782
        %4879 = vst [vmem:[%s332 + $0x58] sm:$0xff] %v4785
        %4880 = vst [vmem:[%s332 + $0x60] sm:$0xff] %v4790
        %4881 = vst [vmem:[%s332 + $0x68] sm:$0xff] %v4793
        %4882 = vst [vmem:[%s332 + $0x70] sm:$0xff] %v4798
        %4883 = vst [vmem:[%s332 + $0x78] sm:$0xff] %v4801
        %4884 = vst [vmem:[%s332 + $0x80] sm:$0xff] %v4806
        %4885 = vst [vmem:[%s332 + $0x88] sm:$0xff] %v4809
        %4886 = vst [vmem:[%s332 + $0x90] sm:$0xff] %v4814
        %4887 = vst [vmem:[%s332 + $0x98] sm:$0xff] %v4817
        %4888 = vst [vmem:[%s332 + $0xa0] sm:$0xff] %v4822
        %4889 = vst [vmem:[%s332 + $0xa8] sm:$0xff] %v4825
        %4890 = vst [vmem:[%s332 + $0xb0] sm:$0xff] %v4830
        %4891 = vst [vmem:[%s332 + $0xb8] sm:$0xff] %v4833
        %4892 = vst [vmem:[%s332 + $0xc0] sm:$0xff] %v4838
        %4893 = vst [vmem:[%s332 + $0xc8] sm:$0xff] %v4841
        %4894 = vst [vmem:[%s332 + $0xd0] sm:$0xff] %v4846
        %4895 = vst [vmem:[%s332 + $0xd8] sm:$0xff] %v4849
        %4896 = vst [vmem:[%s332 + $0xe0] sm:$0xff] %v4854
        %4897 = vst [vmem:[%s332 + $0xe8] sm:$0xff] %v4857
        %4898 = vst [vmem:[%s332 + $0xf0] sm:$0xff] %v4862
        %4899 = vst [vmem:[%s332 + $0xf8] sm:$0xff] %v4865
        %s4900 = sand.u32 %s192, 1
        %s4901 = scalar_lea.sflag [#allocation4], %s4900
        %s4902 = sand.u32 %s192, 1
        %s4903 = smul.addr %s4902, 256
        %s4904 = scalar_lea.vmem [#allocation7], %s4903
        // Predicated region
        $region57: #{tpu_custom_call.1} parent=47 // pred_check
          %p4905 = pneg %p202
        $region58: #{tpu_custom_call.1} parent=47 // pred_check_branch
          %4907 = sbr.rel (%p4905) target = $region60
        $region59: #{tpu_custom_call.1} parent=47 // pred_region
          %s4909 = ssub.s32 4096, 4096
          %4910 = vsyncadd %s4901, %s4909
          %s4911 = smul.addr %s27, 128
          %s4912 = scalar_lea.hbm %s7, %s4911
          %s4913 = sshll.u32 %s4904, 4
          %s4914 = int_to_ptr.vmem [resolvable:$true] %s4913
          %4919 = dma.vmem_to_hbm [thread:$0]  %s4914, 4096, %s4912, %s4901, 128, 256, 8
        $region60: #{tpu_custom_call.1} parent=47 // pred_fallthru
          _
      $region48: #{tpu_custom_call.1} parent=5 // pred_fallthru
        _
      %p4920 = scmp.le.s32.totalorder 2, %s22
      // Predicated region
      $region61: #{tpu_custom_call.1} parent=5 // pred_check
        %p4921 = pneg %p4920
      $region62: #{tpu_custom_call.1} parent=5 // pred_check_branch
        %4923 = sbr.rel (%p4921) target = $region64
      $region63: #{tpu_custom_call.1} parent=5 // pred_region
        %s4924 = ssub.s32 %s22, 2
        // Predicated region
        $region65: #{tpu_custom_call.1} parent=63 // pred_check
          %p4925 = pneg %p208
        $region66: #{tpu_custom_call.1} parent=63 // pred_check_branch
          %4927 = sbr.rel (%p4925) target = $region68
        $region67: #{tpu_custom_call.1} parent=63 // pred_region
          %s4928 = sand.u32 %s193, 1
          %s4929 = scalar_lea.sflag [#allocation4], %s4928
          %s4930 = sand.u32 %s193, 1
          %s4931 = smul.addr %s4930, 256
          %s4932 = scalar_lea.vmem [#allocation7], %s4931
          %4933 = dma.done %s4929, 4096
        $region68: #{tpu_custom_call.1} parent=63 // pred_fallthru
          _
      $region64: #{tpu_custom_call.1} parent=5 // pred_fallthru
        _
    $region6: #{tpu_custom_call.1} parent=1 // loop_footer
      %s26 = sadd.s32 1, %s22
    $region7: #{tpu_custom_call.1} parent=1 // loop_footer_branch
      %21 = sbr.rel target = $region3
    $region8: #{tpu_custom_call.1} parent=1 // loop_exit
      _
    %4934 = vsyncpa [#allocation3], 1
    %s4935 = scalar_lea.sflag [#allocation3], 1
    %4936 = vsyncpa %s4935, 1
    %4937 = vsyncpa [#allocation6], 1
    %s4938 = scalar_lea.sflag [#allocation6], 1
    %4939 = vsyncpa %s4938, 1
    %4940 = vsyncpa [#allocation4], 1
    %s4941 = scalar_lea.sflag [#allocation4], 1
    %4942 = vsyncpa %s4941, 1

</llo_original>
